<compile_context>
chip_gen: v7x
topology: tpu7x:2x2x1
jax: 0.10.0
libtpu: 0.0.40
codegen_flags: <defaults>
</compile_context>

<pallas_src>
import jax
import jax.numpy as jnp
from jax.experimental import pallas as pl
from jax.experimental.pallas import tpu as pltpu


# ----------------------------- fused kernel ---------------------------------

def _mnist_cnn_kernel(x_ref, w1_ref, b1_ref, w2_ref, b2_ref, w3_ref, b3_ref,
                      o_ref, s2_ref, s3_ref):
    """One batch tile (tb images) of the whole network.

    x_ref : (2, 15, tb, 28) bf16  row-parity-split, row-padded images:
                                  x_ref[p, i, b, w] = img[b, 2*i + p - 1, w]
    w*_ref: (3, K, N)       bf16  banded per-kh matmul weights
    b*_ref: (1, N)          f32   biases tiled over the output-column lanes
    o_ref : (tb, 128)       bf16  pooled logits (10 real classes + 118 zeros)
    s2_ref: (2, 8, tb, 224) bf16  conv1 output, row-padded, parity split
    s3_ref: (2, 5, tb, 112) bf16  conv2 output, row-padded, parity split
    """
    tb = o_ref.shape[0]

    def conv3x3_s2(row0, row1, row2, w_ref, b_ref):
        # row{0,1,2} are the (ho, tb, K) input-row slabs for kh = 0, 1, 2.
        ho, _, k = row0.shape
        acc = jnp.dot(row0.reshape(ho * tb, k), w_ref[0],
                      preferred_element_type=jnp.float32)
        acc = acc + jnp.dot(row1.reshape(ho * tb, k), w_ref[1],
                            preferred_element_type=jnp.float32)
        acc = acc + jnp.dot(row2.reshape(ho * tb, k), w_ref[2],
                            preferred_element_type=jnp.float32)
        return jnp.maximum(acc + b_ref[...], 0.0)     # (ho*tb, N) f32

    # ---- conv1: 28x28x1 -> 14x14x16 -----------------------------------------
    # padded row 2*oh+kh:  kh=0 -> [0, oh],  kh=1 -> [1, oh],  kh=2 -> [0, oh+1]
    y1 = conv3x3_s2(x_ref[0, 0:14], x_ref[1, 0:14], x_ref[0, 1:15],
                    w1_ref, b1_ref)                    # (14*tb, 14*16)
    y1 = y1.astype(jnp.bfloat16).reshape(14, tb, 224)

    # Scatter into the row-padded conv2 input scratch (padded row r = h + 1).
    # Zero only the border row that is actually read; interior rows are fully
    # overwritten below and padded row 15 (s2_ref[1, 7]) is never read.
    s2_ref[0, 0] = jnp.zeros((tb, 224), jnp.bfloat16)
    for h in range(14):
        r = h + 1
        s2_ref[r % 2, r // 2] = y1[h]

    # ---- conv2: 14x14x16 -> 7x7x16 -------------------------------------------
    y2 = conv3x3_s2(s2_ref[0, 0:7], s2_ref[1, 0:7], s2_ref[0, 1:8],
                    w2_ref, b2_ref)                    # (7*tb, 7*16)
    y2 = y2.astype(jnp.bfloat16).reshape(7, tb, 112)

    s3_ref[0, 0] = jnp.zeros((tb, 112), jnp.bfloat16)  # padded row 0
    s3_ref[0, 4] = jnp.zeros((tb, 112), jnp.bfloat16)  # padded row 8
    for h in range(7):
        r = h + 1
        s3_ref[r % 2, r // 2] = y2[h]

    # ---- conv3: 7x7x16 -> 4x4x128 (Cout 10 padded to 128) --------------------
    y3 = conv3x3_s2(s3_ref[0, 0:4], s3_ref[1, 0:4], s3_ref[0, 1:5],
                    w3_ref, b3_ref)                    # (4*tb, 4*128)

    # ---- fused F.avg_pool2d(., 4): mean over 4 rows x 4 col blocks ----------
    y3 = y3.reshape(4, tb, 512)
    s = y3[0] + y3[1] + y3[2] + y3[3]                  # (tb, 512), sum over oh
    pooled = s[:, 0:128] + s[:, 128:256] + s[:, 256:384] + s[:, 384:512]
    o_ref[...] = (pooled * (1.0 / 16.0)).astype(o_ref.dtype)


# ------------------------------- JAX wrapper ---------------------------------

def _pick_tile_b(batch):
    # Prefer big tiles; keep >= 2 grid steps when the batch allows it so both
    # v7x TensorCores are populated.  Always a multiple of 16 (bf16 sublanes).
    for tb in (128, 64, 32, 16):
        if batch >= 2 * tb:
            return tb
    return 16


def _banded_weight(w_torch, w_in, cout_pad=None):
    """Fold kw taps + stride-2 column selection + column zero-pad into one
    (3, w_in*cin, ow*cout) matmul weight (one slab per kh).

    w_torch: (cout, cin, 3, 3) PyTorch conv weight.
    """
    cout, cin = int(w_torch.shape[0]), int(w_torch.shape[1])
    ow = (w_in + 2 - 3) // 2 + 1
    # band[kw, w, o] == 1 iff input col w is tap kw of output col o
    # (padded col 2*o + kw  <->  original col w = 2*o + kw - 1; out-of-range
    #  columns are exactly the zero-padding and simply get no weight).
    cols = jnp.arange(w_in)[None, :, None]
    taps = 2 * jnp.arange(ow)[None, None, :] + jnp.arange(3)[:, None, None] - 1
    band = (cols == taps).astype(jnp.float32)                 # (3, w_in, ow)
    w_tap = jnp.transpose(w_torch, (2, 3, 1, 0))               # (kh, kw, cin, cout)
    if cout_pad is not None and cout_pad > cout:
        w_tap = jnp.pad(w_tap, ((0, 0), (0, 0), (0, 0), (0, cout_pad - cout)))
        cout = cout_pad
    wb = jnp.einsum('xwo,hxcd->hwcod', band, w_tap)            # (3,w_in,cin,ow,cout)
    return wb.reshape(3, w_in * cin, ow * cout).astype(jnp.bfloat16)


@jax.jit
def mnist_cnn_forward(x, params):
    """x: (B, 784) f32 (flattened 1x28x28).  Returns (B, 10) f32."""
    w1, b1, w2, b2, w3, b3 = params
    batch = x.shape[0]
    tb = _pick_tile_b(batch)
    nb = -(-batch // tb)
    b_pad = nb * tb

    # ---- layout glue (XLA): batch pad, row pad, row-parity split ------------
    imgs = x.reshape(batch, 28, 28)
    if b_pad != batch:
        imgs = jnp.concatenate(
            [imgs, jnp.zeros((b_pad - batch, 28, 28), imgs.dtype)], axis=0)
    rows = jnp.pad(imgs, ((0, 0), (1, 1), (0, 0)))             # (b_pad, 30, 28)
    xpar = (rows.reshape(b_pad, 15, 2, 28)
                .transpose(2, 1, 0, 3)                         # (2, 15, b_pad, 28)
                .astype(jnp.bfloat16))

    # ---- banded matmul weights + ow-tiled biases (tiny, VMEM-resident) ------
    wb1 = _banded_weight(w1, 28)                               # (3, 28, 224)
    wb2 = _banded_weight(w2, 14)                               # (3, 224, 112)
    wb3 = _banded_weight(w3, 7, cout_pad=128)                  # (3, 112, 512)
    bt1 = jnp.tile(b1, 14).reshape(1, 224).astype(jnp.float32)
    bt2 = jnp.tile(b2, 7).reshape(1, 112).astype(jnp.float32)
    bt3 = jnp.tile(jnp.pad(b3, (0, 128 - b3.shape[0])), 4)
    bt3 = bt3.reshape(1, 512).astype(jnp.float32)

    flops = 2 * b_pad * (14 * 14 * 9 * 16
                         + 7 * 7 * 9 * 16 * 16
                         + 4 * 4 * 9 * 16 * 10)
    bytes_accessed = (xpar.size * 2 + b_pad * 128 * 2
                      + (wb1.size + wb2.size + wb3.size) * 2)

    out = pl.pallas_call(
        _mnist_cnn_kernel,
        out_shape=jax.ShapeDtypeStruct((b_pad, 128), jnp.bfloat16),
        grid=(nb,),
        in_specs=[
            pl.BlockSpec((2, 15, tb, 28), lambda i: (0, 0, i, 0)),   # images
            pl.BlockSpec((3, 28, 224), lambda i: (0, 0, 0)),         # wb1
            pl.BlockSpec((1, 224), lambda i: (0, 0)),                # bt1
            pl.BlockSpec((3, 224, 112), lambda i: (0, 0, 0)),        # wb2
            pl.BlockSpec((1, 112), lambda i: (0, 0)),                # bt2
            pl.BlockSpec((3, 112, 512), lambda i: (0, 0, 0)),        # wb3
            pl.BlockSpec((1, 512), lambda i: (0, 0)),                # bt3
        ],
        out_specs=pl.BlockSpec((tb, 128), lambda i: (i, 0)),
        scratch_shapes=[
            pltpu.VMEM((2, 8, tb, 224), jnp.bfloat16),   # padded conv1 output
            pltpu.VMEM((2, 5, tb, 112), jnp.bfloat16),   # padded conv2 output
        ],
        compiler_params=pltpu.CompilerParams(
            dimension_semantics=("parallel",),
            vmem_limit_bytes=32 * 1024 * 1024,
        ),
        cost_estimate=pl.CostEstimate(flops=flops, transcendentals=0,
                                      bytes_accessed=bytes_accessed),
    )(xpar, wb1, bt1, wb2, bt2, wb3, bt3)

    return out[:batch, :10].astype(jnp.float32)


# --------------------------- params & reference ------------------------------

def init_conv_params(key, c_in, c_out, k=3):
    """PyTorch nn.Conv2d default init: weight (cout, cin, k, k), bias (cout,)."""
    kw_, kb_ = jax.random.split(key)
    fan_in = c_in * k * k
    bound = 1.0 / (fan_in ** 0.5)
    w = jax.random.uniform(kw_, (c_out, c_in, k, k),
                           minval=-bound, maxval=bound, dtype=jnp.float32)
    b = jax.random.uniform(kb_, (c_out,),
                           minval=-bound, maxval=bound, dtype=jnp.float32)
    return w, b


def _conv_s2_ref(a, w, b):
    """Plain-JAX reference: 3x3 stride-2 pad-1 conv + ReLU, NHWC, torch weight."""
    ho = (a.shape[1] + 2 - 3) // 2 + 1
    ap = jnp.pad(a, ((0, 0), (1, 1), (1, 1), (0, 0)))
    acc = 0.0
    for kh in range(3):
        for kw in range(3):
            win = ap[:, kh:kh + 2 * ho:2, kw:kw + 2 * ho:2, :]
            acc = acc + jnp.einsum('bhwc,dc->bhwd', win, w[:, :, kh, kw])
    return jnp.maximum(acc + b.reshape(1, 1, 1, -1), 0.0)


def mnist_cnn_reference(x, params):
    w1, b1, w2, b2, w3, b3 = params
    a = x.reshape(x.shape[0], 28, 28, 1)
    a = _conv_s2_ref(a, w1, b1)
    a = _conv_s2_ref(a, w2, b2)
    a = _conv_s2_ref(a, w3, b3)                  # (B, 4, 4, 10)
    return jnp.mean(a, axis=(1, 2))              # == avg_pool2d(., 4).view(-1, 10)


# ---------------------------------- main --------------------------------------

if __name__ == "__main__":
    key = jax.random.PRNGKey(0)
    kx, kx2, k1, k2, k3 = jax.random.split(key, 5)

    params = (
        *init_conv_params(k1, 1, 16),    # conv1: 1 -> 16
        *init_conv_params(k2, 16, 16),   # conv2: 16 -> 16
        *init_conv_params(k3, 16, 10),   # conv3: 16 -> 10
    )

    # Small, spec-consistent example (B=2): exercises the tiny-batch tile path.
    B = 2
    x = jax.random.normal(kx, (B, 784), dtype=jnp.float32)
    out = jax.block_until_ready(mnist_cnn_forward(x, params))
    assert out.shape == (B, 10) and out.dtype == jnp.float32
    ref = mnist_cnn_reference(x, params)
    err = float(jnp.max(jnp.abs(out - ref)))
    assert err < 5e-2, f"max abs error vs reference (B=2): {err}"

    # Also exercise the primary perf path once: TILE_B=64, 2-step parallel grid.
    B2 = 128
    x2 = jax.random.normal(kx2, (B2, 784), dtype=jnp.float32)
    out2 = jax.block_until_ready(mnist_cnn_forward(x2, params))
    assert out2.shape == (B2, 10)
    ref2 = mnist_cnn_reference(x2, params)
    err2 = float(jnp.max(jnp.abs(out2 - ref2)))
    # bf16 activations/operands dominate the error budget at larger batches.
    assert err2 < 1e-1, f"max abs error vs reference (B=128): {err2}"

    print("KERNEL_OK")
</pallas_src>

<mosaic_0001>
module attributes {stable_mosaic.version = 11 : i64} {
  func.func @_mnist_cnn_kernel(%arg0: i32, %arg1: memref<2x15x16x28xbf16, #tpu.memory_space<vmem>>, %arg2: memref<3x28x224xbf16, #tpu.memory_space<vmem>>, %arg3: memref<1x224xf32, #tpu.memory_space<vmem>>, %arg4: memref<3x224x112xbf16, #tpu.memory_space<vmem>>, %arg5: memref<1x112xf32, #tpu.memory_space<vmem>>, %arg6: memref<3x112x512xbf16, #tpu.memory_space<vmem>>, %arg7: memref<1x512xf32, #tpu.memory_space<vmem>>, %arg8: memref<16x128xbf16, #tpu.memory_space<vmem>>, %arg9: memref<2x8x16x224xbf16, #tpu.memory_space<vmem>>, %arg10: memref<2x5x16x112xbf16, #tpu.memory_space<vmem>>) attributes {dimension_semantics = [#tpu.dimension_semantics<parallel>], iteration_bounds = array<i64: 1>, scalar_prefetch = 0 : i64, scratch_operands = 2 : i64, tpu.core_type = #tpu.core_type<tc>, window_params = [{transform_indices = @transform_0, window_bounds = array<i64: 2, 15, 16, 28>}, {pipeline_mode = #tpu.pipeline_mode<synchronous>, transform_indices = @transform_1, window_bounds = array<i64: 3, 28, 224>}, {pipeline_mode = #tpu.pipeline_mode<synchronous>, transform_indices = @transform_2, window_bounds = array<i64: 1, 224>}, {pipeline_mode = #tpu.pipeline_mode<synchronous>, transform_indices = @transform_3, window_bounds = array<i64: 3, 224, 112>}, {pipeline_mode = #tpu.pipeline_mode<synchronous>, transform_indices = @transform_4, window_bounds = array<i64: 1, 112>}, {pipeline_mode = #tpu.pipeline_mode<synchronous>, transform_indices = @transform_5, window_bounds = array<i64: 3, 112, 512>}, {pipeline_mode = #tpu.pipeline_mode<synchronous>, transform_indices = @transform_6, window_bounds = array<i64: 1, 512>}, {transform_indices = @transform_7, window_bounds = array<i64: 16, 128>}]} {
    %c0 = arith.constant 0 : index
    %c0_0 = arith.constant 0 : index
    %c0_1 = arith.constant 0 : index
    %c0_2 = arith.constant 0 : index
    %0 = vector.load %arg1[%c0, %c0_0, %c0_1, %c0_2] : memref<2x15x16x28xbf16, #tpu.memory_space<vmem>>, vector<1x14x16x28xbf16>
    %1 = vector.shape_cast %0 : vector<1x14x16x28xbf16> to vector<14x16x28xbf16>
    %c1 = arith.constant 1 : index
    %c0_3 = arith.constant 0 : index
    %c0_4 = arith.constant 0 : index
    %c0_5 = arith.constant 0 : index
    %2 = vector.load %arg1[%c1, %c0_3, %c0_4, %c0_5] : memref<2x15x16x28xbf16, #tpu.memory_space<vmem>>, vector<1x14x16x28xbf16>
    %3 = vector.shape_cast %2 : vector<1x14x16x28xbf16> to vector<14x16x28xbf16>
    %c0_6 = arith.constant 0 : index
    %c1_7 = arith.constant 1 : index
    %c0_8 = arith.constant 0 : index
    %c0_9 = arith.constant 0 : index
    %4 = vector.load %arg1[%c0_6, %c1_7, %c0_8, %c0_9] : memref<2x15x16x28xbf16, #tpu.memory_space<vmem>>, vector<1x14x16x28xbf16>
    %5 = vector.shape_cast %4 : vector<1x14x16x28xbf16> to vector<14x16x28xbf16>
    %6 = vector.shape_cast %1 : vector<14x16x28xbf16> to vector<224x28xbf16>
    %c0_10 = arith.constant 0 : index
    %c0_11 = arith.constant 0 : index
    %c0_12 = arith.constant 0 : index
    %7 = vector.load %arg2[%c0_10, %c0_11, %c0_12] : memref<3x28x224xbf16, #tpu.memory_space<vmem>>, vector<1x28x224xbf16>
    %8 = vector.shape_cast %7 : vector<1x28x224xbf16> to vector<28x224xbf16>
    %cst = arith.constant dense<0.000000e+00> : vector<224x224xf32>
    %9 = tpu.matmul %6, %8, %cst {dimension_numbers = #tpu.dot_dimension_numbers<[1], [0], [0], [1], [0, 0, 1, 1], [], []>} : vector<224x28xbf16>, vector<28x224xbf16>, vector<224x224xf32> -> vector<224x224xf32>
    %10 = vector.shape_cast %3 : vector<14x16x28xbf16> to vector<224x28xbf16>
    %c1_13 = arith.constant 1 : index
    %c0_14 = arith.constant 0 : index
    %c0_15 = arith.constant 0 : index
    %11 = vector.load %arg2[%c1_13, %c0_14, %c0_15] : memref<3x28x224xbf16, #tpu.memory_space<vmem>>, vector<1x28x224xbf16>
    %12 = vector.shape_cast %11 : vector<1x28x224xbf16> to vector<28x224xbf16>
    %cst_16 = arith.constant dense<0.000000e+00> : vector<224x224xf32>
    %13 = tpu.matmul %10, %12, %cst_16 {dimension_numbers = #tpu.dot_dimension_numbers<[1], [0], [0], [1], [0, 0, 1, 1], [], []>} : vector<224x28xbf16>, vector<28x224xbf16>, vector<224x224xf32> -> vector<224x224xf32>
    %14 = arith.addf %9, %13 : vector<224x224xf32>
    %15 = vector.shape_cast %5 : vector<14x16x28xbf16> to vector<224x28xbf16>
    %c2 = arith.constant 2 : index
    %c0_17 = arith.constant 0 : index
    %c0_18 = arith.constant 0 : index
    %16 = vector.load %arg2[%c2, %c0_17, %c0_18] : memref<3x28x224xbf16, #tpu.memory_space<vmem>>, vector<1x28x224xbf16>
    %17 = vector.shape_cast %16 : vector<1x28x224xbf16> to vector<28x224xbf16>
    %cst_19 = arith.constant dense<0.000000e+00> : vector<224x224xf32>
    %18 = tpu.matmul %15, %17, %cst_19 {dimension_numbers = #tpu.dot_dimension_numbers<[1], [0], [0], [1], [0, 0, 1, 1], [], []>} : vector<224x28xbf16>, vector<28x224xbf16>, vector<224x224xf32> -> vector<224x224xf32>
    %19 = arith.addf %14, %18 : vector<224x224xf32>
    %c0_20 = arith.constant 0 : index
    %c0_21 = arith.constant 0 : index
    %20 = vector.load %arg3[%c0_20, %c0_21] : memref<1x224xf32, #tpu.memory_space<vmem>>, vector<1x224xf32>
    %21 = vector.broadcast %20 : vector<1x224xf32> to vector<224x224xf32>
    %22 = arith.addf %19, %21 : vector<224x224xf32>
    %cst_22 = arith.constant 0.000000e+00 : f32
    %23 = vector.broadcast %cst_22 : f32 to vector<224x224xf32>
    %24 = arith.maximumf %22, %23 : vector<224x224xf32>
    %25 = arith.truncf %24 : vector<224x224xf32> to vector<224x224xbf16>
    %26 = vector.shape_cast %25 : vector<224x224xbf16> to vector<14x16x224xbf16>
    %cst_23 = arith.constant 0.000000e+00 : bf16
    %27 = vector.broadcast %cst_23 : bf16 to vector<16x224xbf16>
    %c0_24 = arith.constant 0 : index
    %c0_25 = arith.constant 0 : index
    %c0_26 = arith.constant 0 : index
    %c0_27 = arith.constant 0 : index
    %28 = vector.load %arg9[%c0_24, %c0_25, %c0_26, %c0_27] : memref<2x8x16x224xbf16, #tpu.memory_space<vmem>>, vector<1x1x16x224xbf16>
    %29 = vector.shape_cast %28 : vector<1x1x16x224xbf16> to vector<16x224xbf16>
    %30 = vector.shape_cast %27 : vector<16x224xbf16> to vector<1x1x16x224xbf16>
    tpu.vector_store %arg9[%c0_24, %c0_25, %c0_26, %c0_27], %30 {strides = array<i32>} : memref<2x8x16x224xbf16, #tpu.memory_space<vmem>>, vector<1x1x16x224xbf16>,
    %31 = vector.extract_strided_slice %26 {offsets = [0, 0, 0], sizes = [1, 16, 224], strides = [1, 1, 1]} : vector<14x16x224xbf16> to vector<1x16x224xbf16>
    %32 = vector.shape_cast %31 : vector<1x16x224xbf16> to vector<16x224xbf16>
    %c1_28 = arith.constant 1 : index
    %c0_29 = arith.constant 0 : index
    %c0_30 = arith.constant 0 : index
    %c0_31 = arith.constant 0 : index
    %33 = vector.load %arg9[%c1_28, %c0_29, %c0_30, %c0_31] : memref<2x8x16x224xbf16, #tpu.memory_space<vmem>>, vector<1x1x16x224xbf16>
    %34 = vector.shape_cast %33 : vector<1x1x16x224xbf16> to vector<16x224xbf16>
    %35 = vector.shape_cast %32 : vector<16x224xbf16> to vector<1x1x16x224xbf16>
    tpu.vector_store %arg9[%c1_28, %c0_29, %c0_30, %c0_31], %35 {strides = array<i32>} : memref<2x8x16x224xbf16, #tpu.memory_space<vmem>>, vector<1x1x16x224xbf16>,
    %36 = vector.extract_strided_slice %26 {offsets = [1, 0, 0], sizes = [1, 16, 224], strides = [1, 1, 1]} : vector<14x16x224xbf16> to vector<1x16x224xbf16>
    %37 = vector.shape_cast %36 : vector<1x16x224xbf16> to vector<16x224xbf16>
    %c0_32 = arith.constant 0 : index
    %c1_33 = arith.constant 1 : index
    %c0_34 = arith.constant 0 : index
    %c0_35 = arith.constant 0 : index
    %38 = vector.load %arg9[%c0_32, %c1_33, %c0_34, %c0_35] : memref<2x8x16x224xbf16, #tpu.memory_space<vmem>>, vector<1x1x16x224xbf16>
    %39 = vector.shape_cast %38 : vector<1x1x16x224xbf16> to vector<16x224xbf16>
    %40 = vector.shape_cast %37 : vector<16x224xbf16> to vector<1x1x16x224xbf16>
    tpu.vector_store %arg9[%c0_32, %c1_33, %c0_34, %c0_35], %40 {strides = array<i32>} : memref<2x8x16x224xbf16, #tpu.memory_space<vmem>>, vector<1x1x16x224xbf16>,
    %41 = vector.extract_strided_slice %26 {offsets = [2, 0, 0], sizes = [1, 16, 224], strides = [1, 1, 1]} : vector<14x16x224xbf16> to vector<1x16x224xbf16>
    %42 = vector.shape_cast %41 : vector<1x16x224xbf16> to vector<16x224xbf16>
    %c1_36 = arith.constant 1 : index
    %c1_37 = arith.constant 1 : index
    %c0_38 = arith.constant 0 : index
    %c0_39 = arith.constant 0 : index
    %43 = vector.load %arg9[%c1_36, %c1_37, %c0_38, %c0_39] : memref<2x8x16x224xbf16, #tpu.memory_space<vmem>>, vector<1x1x16x224xbf16>
    %44 = vector.shape_cast %43 : vector<1x1x16x224xbf16> to vector<16x224xbf16>
    %45 = vector.shape_cast %42 : vector<16x224xbf16> to vector<1x1x16x224xbf16>
    tpu.vector_store %arg9[%c1_36, %c1_37, %c0_38, %c0_39], %45 {strides = array<i32>} : memref<2x8x16x224xbf16, #tpu.memory_space<vmem>>, vector<1x1x16x224xbf16>,
    %46 = vector.extract_strided_slice %26 {offsets = [3, 0, 0], sizes = [1, 16, 224], strides = [1, 1, 1]} : vector<14x16x224xbf16> to vector<1x16x224xbf16>
    %47 = vector.shape_cast %46 : vector<1x16x224xbf16> to vector<16x224xbf16>
    %c0_40 = arith.constant 0 : index
    %c2_41 = arith.constant 2 : index
    %c0_42 = arith.constant 0 : index
    %c0_43 = arith.constant 0 : index
    %48 = vector.load %arg9[%c0_40, %c2_41, %c0_42, %c0_43] : memref<2x8x16x224xbf16, #tpu.memory_space<vmem>>, vector<1x1x16x224xbf16>
    %49 = vector.shape_cast %48 : vector<1x1x16x224xbf16> to vector<16x224xbf16>
    %50 = vector.shape_cast %47 : vector<16x224xbf16> to vector<1x1x16x224xbf16>
    tpu.vector_store %arg9[%c0_40, %c2_41, %c0_42, %c0_43], %50 {strides = array<i32>} : memref<2x8x16x224xbf16, #tpu.memory_space<vmem>>, vector<1x1x16x224xbf16>,
    %51 = vector.extract_strided_slice %26 {offsets = [4, 0, 0], sizes = [1, 16, 224], strides = [1, 1, 1]} : vector<14x16x224xbf16> to vector<1x16x224xbf16>
    %52 = vector.shape_cast %51 : vector<1x16x224xbf16> to vector<16x224xbf16>
    %c1_44 = arith.constant 1 : index
    %c2_45 = arith.constant 2 : index
    %c0_46 = arith.constant 0 : index
    %c0_47 = arith.constant 0 : index
    %53 = vector.load %arg9[%c1_44, %c2_45, %c0_46, %c0_47] : memref<2x8x16x224xbf16, #tpu.memory_space<vmem>>, vector<1x1x16x224xbf16>
    %54 = vector.shape_cast %53 : vector<1x1x16x224xbf16> to vector<16x224xbf16>
    %55 = vector.shape_cast %52 : vector<16x224xbf16> to vector<1x1x16x224xbf16>
    tpu.vector_store %arg9[%c1_44, %c2_45, %c0_46, %c0_47], %55 {strides = array<i32>} : memref<2x8x16x224xbf16, #tpu.memory_space<vmem>>, vector<1x1x16x224xbf16>,
    %56 = vector.extract_strided_slice %26 {offsets = [5, 0, 0], sizes = [1, 16, 224], strides = [1, 1, 1]} : vector<14x16x224xbf16> to vector<1x16x224xbf16>
    %57 = vector.shape_cast %56 : vector<1x16x224xbf16> to vector<16x224xbf16>
    %c0_48 = arith.constant 0 : index
    %c3 = arith.constant 3 : index
    %c0_49 = arith.constant 0 : index
    %c0_50 = arith.constant 0 : index
    %58 = vector.load %arg9[%c0_48, %c3, %c0_49, %c0_50] : memref<2x8x16x224xbf16, #tpu.memory_space<vmem>>, vector<1x1x16x224xbf16>
    %59 = vector.shape_cast %58 : vector<1x1x16x224xbf16> to vector<16x224xbf16>
    %60 = vector.shape_cast %57 : vector<16x224xbf16> to vector<1x1x16x224xbf16>
    tpu.vector_store %arg9[%c0_48, %c3, %c0_49, %c0_50], %60 {strides = array<i32>} : memref<2x8x16x224xbf16, #tpu.memory_space<vmem>>, vector<1x1x16x224xbf16>,
    %61 = vector.extract_strided_slice %26 {offsets = [6, 0, 0], sizes = [1, 16, 224], strides = [1, 1, 1]} : vector<14x16x224xbf16> to vector<1x16x224xbf16>
    %62 = vector.shape_cast %61 : vector<1x16x224xbf16> to vector<16x224xbf16>
    %c1_51 = arith.constant 1 : index
    %c3_52 = arith.constant 3 : index
    %c0_53 = arith.constant 0 : index
    %c0_54 = arith.constant 0 : index
    %63 = vector.load %arg9[%c1_51, %c3_52, %c0_53, %c0_54] : memref<2x8x16x224xbf16, #tpu.memory_space<vmem>>, vector<1x1x16x224xbf16>
    %64 = vector.shape_cast %63 : vector<1x1x16x224xbf16> to vector<16x224xbf16>
    %65 = vector.shape_cast %62 : vector<16x224xbf16> to vector<1x1x16x224xbf16>
    tpu.vector_store %arg9[%c1_51, %c3_52, %c0_53, %c0_54], %65 {strides = array<i32>} : memref<2x8x16x224xbf16, #tpu.memory_space<vmem>>, vector<1x1x16x224xbf16>,
    %66 = vector.extract_strided_slice %26 {offsets = [7, 0, 0], sizes = [1, 16, 224], strides = [1, 1, 1]} : vector<14x16x224xbf16> to vector<1x16x224xbf16>
    %67 = vector.shape_cast %66 : vector<1x16x224xbf16> to vector<16x224xbf16>
    %c0_55 = arith.constant 0 : index
    %c4 = arith.constant 4 : index
    %c0_56 = arith.constant 0 : index
    %c0_57 = arith.constant 0 : index
    %68 = vector.load %arg9[%c0_55, %c4, %c0_56, %c0_57] : memref<2x8x16x224xbf16, #tpu.memory_space<vmem>>, vector<1x1x16x224xbf16>
    %69 = vector.shape_cast %68 : vector<1x1x16x224xbf16> to vector<16x224xbf16>
    %70 = vector.shape_cast %67 : vector<16x224xbf16> to vector<1x1x16x224xbf16>
    tpu.vector_store %arg9[%c0_55, %c4, %c0_56, %c0_57], %70 {strides = array<i32>} : memref<2x8x16x224xbf16, #tpu.memory_space<vmem>>, vector<1x1x16x224xbf16>,
    %71 = vector.extract_strided_slice %26 {offsets = [8, 0, 0], sizes = [1, 16, 224], strides = [1, 1, 1]} : vector<14x16x224xbf16> to vector<1x16x224xbf16>
    %72 = vector.shape_cast %71 : vector<1x16x224xbf16> to vector<16x224xbf16>
    %c1_58 = arith.constant 1 : index
    %c4_59 = arith.constant 4 : index
    %c0_60 = arith.constant 0 : index
    %c0_61 = arith.constant 0 : index
    %73 = vector.load %arg9[%c1_58, %c4_59, %c0_60, %c0_61] : memref<2x8x16x224xbf16, #tpu.memory_space<vmem>>, vector<1x1x16x224xbf16>
    %74 = vector.shape_cast %73 : vector<1x1x16x224xbf16> to vector<16x224xbf16>
    %75 = vector.shape_cast %72 : vector<16x224xbf16> to vector<1x1x16x224xbf16>
    tpu.vector_store %arg9[%c1_58, %c4_59, %c0_60, %c0_61], %75 {strides = array<i32>} : memref<2x8x16x224xbf16, #tpu.memory_space<vmem>>, vector<1x1x16x224xbf16>,
    %76 = vector.extract_strided_slice %26 {offsets = [9, 0, 0], sizes = [1, 16, 224], strides = [1, 1, 1]} : vector<14x16x224xbf16> to vector<1x16x224xbf16>
    %77 = vector.shape_cast %76 : vector<1x16x224xbf16> to vector<16x224xbf16>
    %c0_62 = arith.constant 0 : index
    %c5 = arith.constant 5 : index
    %c0_63 = arith.constant 0 : index
    %c0_64 = arith.constant 0 : index
    %78 = vector.load %arg9[%c0_62, %c5, %c0_63, %c0_64] : memref<2x8x16x224xbf16, #tpu.memory_space<vmem>>, vector<1x1x16x224xbf16>
    %79 = vector.shape_cast %78 : vector<1x1x16x224xbf16> to vector<16x224xbf16>
    %80 = vector.shape_cast %77 : vector<16x224xbf16> to vector<1x1x16x224xbf16>
    tpu.vector_store %arg9[%c0_62, %c5, %c0_63, %c0_64], %80 {strides = array<i32>} : memref<2x8x16x224xbf16, #tpu.memory_space<vmem>>, vector<1x1x16x224xbf16>,
    %81 = vector.extract_strided_slice %26 {offsets = [10, 0, 0], sizes = [1, 16, 224], strides = [1, 1, 1]} : vector<14x16x224xbf16> to vector<1x16x224xbf16>
    %82 = vector.shape_cast %81 : vector<1x16x224xbf16> to vector<16x224xbf16>
    %c1_65 = arith.constant 1 : index
    %c5_66 = arith.constant 5 : index
    %c0_67 = arith.constant 0 : index
    %c0_68 = arith.constant 0 : index
    %83 = vector.load %arg9[%c1_65, %c5_66, %c0_67, %c0_68] : memref<2x8x16x224xbf16, #tpu.memory_space<vmem>>, vector<1x1x16x224xbf16>
    %84 = vector.shape_cast %83 : vector<1x1x16x224xbf16> to vector<16x224xbf16>
    %85 = vector.shape_cast %82 : vector<16x224xbf16> to vector<1x1x16x224xbf16>
    tpu.vector_store %arg9[%c1_65, %c5_66, %c0_67, %c0_68], %85 {strides = array<i32>} : memref<2x8x16x224xbf16, #tpu.memory_space<vmem>>, vector<1x1x16x224xbf16>,
    %86 = vector.extract_strided_slice %26 {offsets = [11, 0, 0], sizes = [1, 16, 224], strides = [1, 1, 1]} : vector<14x16x224xbf16> to vector<1x16x224xbf16>
    %87 = vector.shape_cast %86 : vector<1x16x224xbf16> to vector<16x224xbf16>
    %c0_69 = arith.constant 0 : index
    %c6 = arith.constant 6 : index
    %c0_70 = arith.constant 0 : index
    %c0_71 = arith.constant 0 : index
    %88 = vector.load %arg9[%c0_69, %c6, %c0_70, %c0_71] : memref<2x8x16x224xbf16, #tpu.memory_space<vmem>>, vector<1x1x16x224xbf16>
    %89 = vector.shape_cast %88 : vector<1x1x16x224xbf16> to vector<16x224xbf16>
    %90 = vector.shape_cast %87 : vector<16x224xbf16> to vector<1x1x16x224xbf16>
    tpu.vector_store %arg9[%c0_69, %c6, %c0_70, %c0_71], %90 {strides = array<i32>} : memref<2x8x16x224xbf16, #tpu.memory_space<vmem>>, vector<1x1x16x224xbf16>,
    %91 = vector.extract_strided_slice %26 {offsets = [12, 0, 0], sizes = [1, 16, 224], strides = [1, 1, 1]} : vector<14x16x224xbf16> to vector<1x16x224xbf16>
    %92 = vector.shape_cast %91 : vector<1x16x224xbf16> to vector<16x224xbf16>
    %c1_72 = arith.constant 1 : index
    %c6_73 = arith.constant 6 : index
    %c0_74 = arith.constant 0 : index
    %c0_75 = arith.constant 0 : index
    %93 = vector.load %arg9[%c1_72, %c6_73, %c0_74, %c0_75] : memref<2x8x16x224xbf16, #tpu.memory_space<vmem>>, vector<1x1x16x224xbf16>
    %94 = vector.shape_cast %93 : vector<1x1x16x224xbf16> to vector<16x224xbf16>
    %95 = vector.shape_cast %92 : vector<16x224xbf16> to vector<1x1x16x224xbf16>
    tpu.vector_store %arg9[%c1_72, %c6_73, %c0_74, %c0_75], %95 {strides = array<i32>} : memref<2x8x16x224xbf16, #tpu.memory_space<vmem>>, vector<1x1x16x224xbf16>,
    %96 = vector.extract_strided_slice %26 {offsets = [13, 0, 0], sizes = [1, 16, 224], strides = [1, 1, 1]} : vector<14x16x224xbf16> to vector<1x16x224xbf16>
    %97 = vector.shape_cast %96 : vector<1x16x224xbf16> to vector<16x224xbf16>
    %c0_76 = arith.constant 0 : index
    %c7 = arith.constant 7 : index
    %c0_77 = arith.constant 0 : index
    %c0_78 = arith.constant 0 : index
    %98 = vector.load %arg9[%c0_76, %c7, %c0_77, %c0_78] : memref<2x8x16x224xbf16, #tpu.memory_space<vmem>>, vector<1x1x16x224xbf16>
    %99 = vector.shape_cast %98 : vector<1x1x16x224xbf16> to vector<16x224xbf16>
    %100 = vector.shape_cast %97 : vector<16x224xbf16> to vector<1x1x16x224xbf16>
    tpu.vector_store %arg9[%c0_76, %c7, %c0_77, %c0_78], %100 {strides = array<i32>} : memref<2x8x16x224xbf16, #tpu.memory_space<vmem>>, vector<1x1x16x224xbf16>,
    %c0_79 = arith.constant 0 : index
    %c0_80 = arith.constant 0 : index
    %c0_81 = arith.constant 0 : index
    %c0_82 = arith.constant 0 : index
    %101 = vector.load %arg9[%c0_79, %c0_80, %c0_81, %c0_82] : memref<2x8x16x224xbf16, #tpu.memory_space<vmem>>, vector<1x7x16x224xbf16>
    %102 = vector.shape_cast %101 : vector<1x7x16x224xbf16> to vector<7x16x224xbf16>
    %c1_83 = arith.constant 1 : index
    %c0_84 = arith.constant 0 : index
    %c0_85 = arith.constant 0 : index
    %c0_86 = arith.constant 0 : index
    %103 = vector.load %arg9[%c1_83, %c0_84, %c0_85, %c0_86] : memref<2x8x16x224xbf16, #tpu.memory_space<vmem>>, vector<1x7x16x224xbf16>
    %104 = vector.shape_cast %103 : vector<1x7x16x224xbf16> to vector<7x16x224xbf16>
    %c0_87 = arith.constant 0 : index
    %c1_88 = arith.constant 1 : index
    %c0_89 = arith.constant 0 : index
    %c0_90 = arith.constant 0 : index
    %105 = vector.load %arg9[%c0_87, %c1_88, %c0_89, %c0_90] : memref<2x8x16x224xbf16, #tpu.memory_space<vmem>>, vector<1x7x16x224xbf16>
    %106 = vector.shape_cast %105 : vector<1x7x16x224xbf16> to vector<7x16x224xbf16>
    %107 = vector.shape_cast %102 : vector<7x16x224xbf16> to vector<112x224xbf16>
    %c0_91 = arith.constant 0 : index
    %c0_92 = arith.constant 0 : index
    %c0_93 = arith.constant 0 : index
    %108 = vector.load %arg4[%c0_91, %c0_92, %c0_93] : memref<3x224x112xbf16, #tpu.memory_space<vmem>>, vector<1x224x112xbf16>
    %109 = vector.shape_cast %108 : vector<1x224x112xbf16> to vector<224x112xbf16>
    %cst_94 = arith.constant dense<0.000000e+00> : vector<112x112xf32>
    %110 = tpu.matmul %107, %109, %cst_94 {dimension_numbers = #tpu.dot_dimension_numbers<[1], [0], [0], [1], [0, 0, 1, 1], [], []>} : vector<112x224xbf16>, vector<224x112xbf16>, vector<112x112xf32> -> vector<112x112xf32>
    %111 = vector.shape_cast %104 : vector<7x16x224xbf16> to vector<112x224xbf16>
    %c1_95 = arith.constant 1 : index
    %c0_96 = arith.constant 0 : index
    %c0_97 = arith.constant 0 : index
    %112 = vector.load %arg4[%c1_95, %c0_96, %c0_97] : memref<3x224x112xbf16, #tpu.memory_space<vmem>>, vector<1x224x112xbf16>
    %113 = vector.shape_cast %112 : vector<1x224x112xbf16> to vector<224x112xbf16>
    %cst_98 = arith.constant dense<0.000000e+00> : vector<112x112xf32>
    %114 = tpu.matmul %111, %113, %cst_98 {dimension_numbers = #tpu.dot_dimension_numbers<[1], [0], [0], [1], [0, 0, 1, 1], [], []>} : vector<112x224xbf16>, vector<224x112xbf16>, vector<112x112xf32> -> vector<112x112xf32>
    %115 = arith.addf %110, %114 : vector<112x112xf32>
    %116 = vector.shape_cast %106 : vector<7x16x224xbf16> to vector<112x224xbf16>
    %c2_99 = arith.constant 2 : index
    %c0_100 = arith.constant 0 : index
    %c0_101 = arith.constant 0 : index
    %117 = vector.load %arg4[%c2_99, %c0_100, %c0_101] : memref<3x224x112xbf16, #tpu.memory_space<vmem>>, vector<1x224x112xbf16>
    %118 = vector.shape_cast %117 : vector<1x224x112xbf16> to vector<224x112xbf16>
    %cst_102 = arith.constant dense<0.000000e+00> : vector<112x112xf32>
    %119 = tpu.matmul %116, %118, %cst_102 {dimension_numbers = #tpu.dot_dimension_numbers<[1], [0], [0], [1], [0, 0, 1, 1], [], []>} : vector<112x224xbf16>, vector<224x112xbf16>, vector<112x112xf32> -> vector<112x112xf32>
    %120 = arith.addf %115, %119 : vector<112x112xf32>
    %c0_103 = arith.constant 0 : index
    %c0_104 = arith.constant 0 : index
    %121 = vector.load %arg5[%c0_103, %c0_104] : memref<1x112xf32, #tpu.memory_space<vmem>>, vector<1x112xf32>
    %122 = vector.broadcast %121 : vector<1x112xf32> to vector<112x112xf32>
    %123 = arith.addf %120, %122 : vector<112x112xf32>
    %cst_105 = arith.constant 0.000000e+00 : f32
    %124 = vector.broadcast %cst_105 : f32 to vector<112x112xf32>
    %125 = arith.maximumf %123, %124 : vector<112x112xf32>
    %126 = arith.truncf %125 : vector<112x112xf32> to vector<112x112xbf16>
    %127 = vector.shape_cast %126 : vector<112x112xbf16> to vector<7x16x112xbf16>
    %cst_106 = arith.constant 0.000000e+00 : bf16
    %128 = vector.broadcast %cst_106 : bf16 to vector<16x112xbf16>
    %c0_107 = arith.constant 0 : index
    %c0_108 = arith.constant 0 : index
    %c0_109 = arith.constant 0 : index
    %c0_110 = arith.constant 0 : index
    %129 = vector.load %arg10[%c0_107, %c0_108, %c0_109, %c0_110] : memref<2x5x16x112xbf16, #tpu.memory_space<vmem>>, vector<1x1x16x112xbf16>
    %130 = vector.shape_cast %129 : vector<1x1x16x112xbf16> to vector<16x112xbf16>
    %131 = vector.shape_cast %128 : vector<16x112xbf16> to vector<1x1x16x112xbf16>
    tpu.vector_store %arg10[%c0_107, %c0_108, %c0_109, %c0_110], %131 {strides = array<i32>} : memref<2x5x16x112xbf16, #tpu.memory_space<vmem>>, vector<1x1x16x112xbf16>,
    %cst_111 = arith.constant 0.000000e+00 : bf16
    %132 = vector.broadcast %cst_111 : bf16 to vector<16x112xbf16>
    %c0_112 = arith.constant 0 : index
    %c4_113 = arith.constant 4 : index
    %c0_114 = arith.constant 0 : index
    %c0_115 = arith.constant 0 : index
    %133 = vector.load %arg10[%c0_112, %c4_113, %c0_114, %c0_115] : memref<2x5x16x112xbf16, #tpu.memory_space<vmem>>, vector<1x1x16x112xbf16>
    %134 = vector.shape_cast %133 : vector<1x1x16x112xbf16> to vector<16x112xbf16>
    %135 = vector.shape_cast %132 : vector<16x112xbf16> to vector<1x1x16x112xbf16>
    tpu.vector_store %arg10[%c0_112, %c4_113, %c0_114, %c0_115], %135 {strides = array<i32>} : memref<2x5x16x112xbf16, #tpu.memory_space<vmem>>, vector<1x1x16x112xbf16>,
    %136 = vector.extract_strided_slice %127 {offsets = [0, 0, 0], sizes = [1, 16, 112], strides = [1, 1, 1]} : vector<7x16x112xbf16> to vector<1x16x112xbf16>
    %137 = vector.shape_cast %136 : vector<1x16x112xbf16> to vector<16x112xbf16>
    %c1_116 = arith.constant 1 : index
    %c0_117 = arith.constant 0 : index
    %c0_118 = arith.constant 0 : index
    %c0_119 = arith.constant 0 : index
    %138 = vector.load %arg10[%c1_116, %c0_117, %c0_118, %c0_119] : memref<2x5x16x112xbf16, #tpu.memory_space<vmem>>, vector<1x1x16x112xbf16>
    %139 = vector.shape_cast %138 : vector<1x1x16x112xbf16> to vector<16x112xbf16>
    %140 = vector.shape_cast %137 : vector<16x112xbf16> to vector<1x1x16x112xbf16>
    tpu.vector_store %arg10[%c1_116, %c0_117, %c0_118, %c0_119], %140 {strides = array<i32>} : memref<2x5x16x112xbf16, #tpu.memory_space<vmem>>, vector<1x1x16x112xbf16>,
    %141 = vector.extract_strided_slice %127 {offsets = [1, 0, 0], sizes = [1, 16, 112], strides = [1, 1, 1]} : vector<7x16x112xbf16> to vector<1x16x112xbf16>
    %142 = vector.shape_cast %141 : vector<1x16x112xbf16> to vector<16x112xbf16>
    %c0_120 = arith.constant 0 : index
    %c1_121 = arith.constant 1 : index
    %c0_122 = arith.constant 0 : index
    %c0_123 = arith.constant 0 : index
    %143 = vector.load %arg10[%c0_120, %c1_121, %c0_122, %c0_123] : memref<2x5x16x112xbf16, #tpu.memory_space<vmem>>, vector<1x1x16x112xbf16>
    %144 = vector.shape_cast %143 : vector<1x1x16x112xbf16> to vector<16x112xbf16>
    %145 = vector.shape_cast %142 : vector<16x112xbf16> to vector<1x1x16x112xbf16>
    tpu.vector_store %arg10[%c0_120, %c1_121, %c0_122, %c0_123], %145 {strides = array<i32>} : memref<2x5x16x112xbf16, #tpu.memory_space<vmem>>, vector<1x1x16x112xbf16>,
    %146 = vector.extract_strided_slice %127 {offsets = [2, 0, 0], sizes = [1, 16, 112], strides = [1, 1, 1]} : vector<7x16x112xbf16> to vector<1x16x112xbf16>
    %147 = vector.shape_cast %146 : vector<1x16x112xbf16> to vector<16x112xbf16>
    %c1_124 = arith.constant 1 : index
    %c1_125 = arith.constant 1 : index
    %c0_126 = arith.constant 0 : index
    %c0_127 = arith.constant 0 : index
    %148 = vector.load %arg10[%c1_124, %c1_125, %c0_126, %c0_127] : memref<2x5x16x112xbf16, #tpu.memory_space<vmem>>, vector<1x1x16x112xbf16>
    %149 = vector.shape_cast %148 : vector<1x1x16x112xbf16> to vector<16x112xbf16>
    %150 = vector.shape_cast %147 : vector<16x112xbf16> to vector<1x1x16x112xbf16>
    tpu.vector_store %arg10[%c1_124, %c1_125, %c0_126, %c0_127], %150 {strides = array<i32>} : memref<2x5x16x112xbf16, #tpu.memory_space<vmem>>, vector<1x1x16x112xbf16>,
    %151 = vector.extract_strided_slice %127 {offsets = [3, 0, 0], sizes = [1, 16, 112], strides = [1, 1, 1]} : vector<7x16x112xbf16> to vector<1x16x112xbf16>
    %152 = vector.shape_cast %151 : vector<1x16x112xbf16> to vector<16x112xbf16>
    %c0_128 = arith.constant 0 : index
    %c2_129 = arith.constant 2 : index
    %c0_130 = arith.constant 0 : index
    %c0_131 = arith.constant 0 : index
    %153 = vector.load %arg10[%c0_128, %c2_129, %c0_130, %c0_131] : memref<2x5x16x112xbf16, #tpu.memory_space<vmem>>, vector<1x1x16x112xbf16>
    %154 = vector.shape_cast %153 : vector<1x1x16x112xbf16> to vector<16x112xbf16>
    %155 = vector.shape_cast %152 : vector<16x112xbf16> to vector<1x1x16x112xbf16>
    tpu.vector_store %arg10[%c0_128, %c2_129, %c0_130, %c0_131], %155 {strides = array<i32>} : memref<2x5x16x112xbf16, #tpu.memory_space<vmem>>, vector<1x1x16x112xbf16>,
    %156 = vector.extract_strided_slice %127 {offsets = [4, 0, 0], sizes = [1, 16, 112], strides = [1, 1, 1]} : vector<7x16x112xbf16> to vector<1x16x112xbf16>
    %157 = vector.shape_cast %156 : vector<1x16x112xbf16> to vector<16x112xbf16>
    %c1_132 = arith.constant 1 : index
    %c2_133 = arith.constant 2 : index
    %c0_134 = arith.constant 0 : index
    %c0_135 = arith.constant 0 : index
    %158 = vector.load %arg10[%c1_132, %c2_133, %c0_134, %c0_135] : memref<2x5x16x112xbf16, #tpu.memory_space<vmem>>, vector<1x1x16x112xbf16>
    %159 = vector.shape_cast %158 : vector<1x1x16x112xbf16> to vector<16x112xbf16>
    %160 = vector.shape_cast %157 : vector<16x112xbf16> to vector<1x1x16x112xbf16>
    tpu.vector_store %arg10[%c1_132, %c2_133, %c0_134, %c0_135], %160 {strides = array<i32>} : memref<2x5x16x112xbf16, #tpu.memory_space<vmem>>, vector<1x1x16x112xbf16>,
    %161 = vector.extract_strided_slice %127 {offsets = [5, 0, 0], sizes = [1, 16, 112], strides = [1, 1, 1]} : vector<7x16x112xbf16> to vector<1x16x112xbf16>
    %162 = vector.shape_cast %161 : vector<1x16x112xbf16> to vector<16x112xbf16>
    %c0_136 = arith.constant 0 : index
    %c3_137 = arith.constant 3 : index
    %c0_138 = arith.constant 0 : index
    %c0_139 = arith.constant 0 : index
    %163 = vector.load %arg10[%c0_136, %c3_137, %c0_138, %c0_139] : memref<2x5x16x112xbf16, #tpu.memory_space<vmem>>, vector<1x1x16x112xbf16>
    %164 = vector.shape_cast %163 : vector<1x1x16x112xbf16> to vector<16x112xbf16>
    %165 = vector.shape_cast %162 : vector<16x112xbf16> to vector<1x1x16x112xbf16>
    tpu.vector_store %arg10[%c0_136, %c3_137, %c0_138, %c0_139], %165 {strides = array<i32>} : memref<2x5x16x112xbf16, #tpu.memory_space<vmem>>, vector<1x1x16x112xbf16>,
    %166 = vector.extract_strided_slice %127 {offsets = [6, 0, 0], sizes = [1, 16, 112], strides = [1, 1, 1]} : vector<7x16x112xbf16> to vector<1x16x112xbf16>
    %167 = vector.shape_cast %166 : vector<1x16x112xbf16> to vector<16x112xbf16>
    %c1_140 = arith.constant 1 : index
    %c3_141 = arith.constant 3 : index
    %c0_142 = arith.constant 0 : index
    %c0_143 = arith.constant 0 : index
    %168 = vector.load %arg10[%c1_140, %c3_141, %c0_142, %c0_143] : memref<2x5x16x112xbf16, #tpu.memory_space<vmem>>, vector<1x1x16x112xbf16>
    %169 = vector.shape_cast %168 : vector<1x1x16x112xbf16> to vector<16x112xbf16>
    %170 = vector.shape_cast %167 : vector<16x112xbf16> to vector<1x1x16x112xbf16>
    tpu.vector_store %arg10[%c1_140, %c3_141, %c0_142, %c0_143], %170 {strides = array<i32>} : memref<2x5x16x112xbf16, #tpu.memory_space<vmem>>, vector<1x1x16x112xbf16>,
    %c0_144 = arith.constant 0 : index
    %c0_145 = arith.constant 0 : index
    %c0_146 = arith.constant 0 : index
    %c0_147 = arith.constant 0 : index
    %171 = vector.load %arg10[%c0_144, %c0_145, %c0_146, %c0_147] : memref<2x5x16x112xbf16, #tpu.memory_space<vmem>>, vector<1x4x16x112xbf16>
    %172 = vector.shape_cast %171 : vector<1x4x16x112xbf16> to vector<4x16x112xbf16>
    %c1_148 = arith.constant 1 : index
    %c0_149 = arith.constant 0 : index
    %c0_150 = arith.constant 0 : index
    %c0_151 = arith.constant 0 : index
    %173 = vector.load %arg10[%c1_148, %c0_149, %c0_150, %c0_151] : memref<2x5x16x112xbf16, #tpu.memory_space<vmem>>, vector<1x4x16x112xbf16>
    %174 = vector.shape_cast %173 : vector<1x4x16x112xbf16> to vector<4x16x112xbf16>
    %c0_152 = arith.constant 0 : index
    %c1_153 = arith.constant 1 : index
    %c0_154 = arith.constant 0 : index
    %c0_155 = arith.constant 0 : index
    %175 = vector.load %arg10[%c0_152, %c1_153, %c0_154, %c0_155] : memref<2x5x16x112xbf16, #tpu.memory_space<vmem>>, vector<1x4x16x112xbf16>
    %176 = vector.shape_cast %175 : vector<1x4x16x112xbf16> to vector<4x16x112xbf16>
    %177 = vector.shape_cast %172 : vector<4x16x112xbf16> to vector<64x112xbf16>
    %c0_156 = arith.constant 0 : index
    %c0_157 = arith.constant 0 : index
    %c0_158 = arith.constant 0 : index
    %178 = vector.load %arg6[%c0_156, %c0_157, %c0_158] : memref<3x112x512xbf16, #tpu.memory_space<vmem>>, vector<1x112x512xbf16>
    %179 = vector.shape_cast %178 : vector<1x112x512xbf16> to vector<112x512xbf16>
    %cst_159 = arith.constant dense<0.000000e+00> : vector<64x512xf32>
    %180 = tpu.matmul %177, %179, %cst_159 {dimension_numbers = #tpu.dot_dimension_numbers<[1], [0], [0], [1], [0, 0, 1, 1], [], []>} : vector<64x112xbf16>, vector<112x512xbf16>, vector<64x512xf32> -> vector<64x512xf32>
    %181 = vector.shape_cast %174 : vector<4x16x112xbf16> to vector<64x112xbf16>
    %c1_160 = arith.constant 1 : index
    %c0_161 = arith.constant 0 : index
    %c0_162 = arith.constant 0 : index
    %182 = vector.load %arg6[%c1_160, %c0_161, %c0_162] : memref<3x112x512xbf16, #tpu.memory_space<vmem>>, vector<1x112x512xbf16>
    %183 = vector.shape_cast %182 : vector<1x112x512xbf16> to vector<112x512xbf16>
    %cst_163 = arith.constant dense<0.000000e+00> : vector<64x512xf32>
    %184 = tpu.matmul %181, %183, %cst_163 {dimension_numbers = #tpu.dot_dimension_numbers<[1], [0], [0], [1], [0, 0, 1, 1], [], []>} : vector<64x112xbf16>, vector<112x512xbf16>, vector<64x512xf32> -> vector<64x512xf32>
    %185 = arith.addf %180, %184 : vector<64x512xf32>
    %186 = vector.shape_cast %176 : vector<4x16x112xbf16> to vector<64x112xbf16>
    %c2_164 = arith.constant 2 : index
    %c0_165 = arith.constant 0 : index
    %c0_166 = arith.constant 0 : index
    %187 = vector.load %arg6[%c2_164, %c0_165, %c0_166] : memref<3x112x512xbf16, #tpu.memory_space<vmem>>, vector<1x112x512xbf16>
    %188 = vector.shape_cast %187 : vector<1x112x512xbf16> to vector<112x512xbf16>
    %cst_167 = arith.constant dense<0.000000e+00> : vector<64x512xf32>
    %189 = tpu.matmul %186, %188, %cst_167 {dimension_numbers = #tpu.dot_dimension_numbers<[1], [0], [0], [1], [0, 0, 1, 1], [], []>} : vector<64x112xbf16>, vector<112x512xbf16>, vector<64x512xf32> -> vector<64x512xf32>
    %190 = arith.addf %185, %189 : vector<64x512xf32>
    %c0_168 = arith.constant 0 : index
    %c0_169 = arith.constant 0 : index
    %191 = vector.load %arg7[%c0_168, %c0_169] : memref<1x512xf32, #tpu.memory_space<vmem>>, vector<1x512xf32>
    %192 = vector.broadcast %191 : vector<1x512xf32> to vector<64x512xf32>
    %193 = arith.addf %190, %192 : vector<64x512xf32>
    %cst_170 = arith.constant 0.000000e+00 : f32
    %194 = vector.broadcast %cst_170 : f32 to vector<64x512xf32>
    %195 = arith.maximumf %193, %194 : vector<64x512xf32>
    %196 = vector.shape_cast %195 : vector<64x512xf32> to vector<4x16x512xf32>
    %197 = vector.extract_strided_slice %196 {offsets = [0, 0, 0], sizes = [1, 16, 512], strides = [1, 1, 1]} : vector<4x16x512xf32> to vector<1x16x512xf32>
    %198 = vector.shape_cast %197 : vector<1x16x512xf32> to vector<16x512xf32>
    %199 = vector.extract_strided_slice %196 {offsets = [1, 0, 0], sizes = [1, 16, 512], strides = [1, 1, 1]} : vector<4x16x512xf32> to vector<1x16x512xf32>
    %200 = vector.shape_cast %199 : vector<1x16x512xf32> to vector<16x512xf32>
    %201 = arith.addf %198, %200 : vector<16x512xf32>
    %202 = vector.extract_strided_slice %196 {offsets = [2, 0, 0], sizes = [1, 16, 512], strides = [1, 1, 1]} : vector<4x16x512xf32> to vector<1x16x512xf32>
    %203 = vector.shape_cast %202 : vector<1x16x512xf32> to vector<16x512xf32>
    %204 = arith.addf %201, %203 : vector<16x512xf32>
    %205 = vector.extract_strided_slice %196 {offsets = [3, 0, 0], sizes = [1, 16, 512], strides = [1, 1, 1]} : vector<4x16x512xf32> to vector<1x16x512xf32>
    %206 = vector.shape_cast %205 : vector<1x16x512xf32> to vector<16x512xf32>
    %207 = arith.addf %204, %206 : vector<16x512xf32>
    %208 = vector.extract_strided_slice %207 {offsets = [0, 0], sizes = [16, 128], strides = [1, 1]} : vector<16x512xf32> to vector<16x128xf32>
    %209 = vector.extract_strided_slice %207 {offsets = [0, 128], sizes = [16, 128], strides = [1, 1]} : vector<16x512xf32> to vector<16x128xf32>
    %210 = arith.addf %208, %209 : vector<16x128xf32>
    %211 = vector.extract_strided_slice %207 {offsets = [0, 256], sizes = [16, 128], strides = [1, 1]} : vector<16x512xf32> to vector<16x128xf32>
    %212 = arith.addf %210, %211 : vector<16x128xf32>
    %213 = vector.extract_strided_slice %207 {offsets = [0, 384], sizes = [16, 128], strides = [1, 1]} : vector<16x512xf32> to vector<16x128xf32>
    %214 = arith.addf %212, %213 : vector<16x128xf32>
    %cst_171 = arith.constant 6.250000e-02 : f32
    %215 = vector.broadcast %cst_171 : f32 to vector<16x128xf32>
    %216 = arith.mulf %214, %215 : vector<16x128xf32>
    %217 = arith.truncf %216 : vector<16x128xf32> to vector<16x128xbf16>
    %c0_172 = arith.constant 0 : index
    %c0_173 = arith.constant 0 : index
    %218 = vector.load %arg8[%c0_172, %c0_173] : memref<16x128xbf16, #tpu.memory_space<vmem>>, vector<16x128xbf16>
    tpu.vector_store %arg8[%c0_172, %c0_173], %217 {strides = array<i32>} : memref<16x128xbf16, #tpu.memory_space<vmem>>, vector<16x128xbf16>,
    return
  }
  func.func @transform_0(%arg0: i32) -> (i32, i32, i32, i32) {
    %c0_i32 = arith.constant 0 : i32
    %c0_i32_0 = arith.constant 0 : i32
    %c0_i32_1 = arith.constant 0 : i32
    %c0_i32_2 = arith.constant 0 : i32
    return %c0_i32, %c0_i32_0, %arg0, %c0_i32_1 : i32, i32, i32, i32
  }
  func.func @transform_1(%arg0: i32) -> (i32, i32, i32) {
    %c0_i32 = arith.constant 0 : i32
    %c0_i32_0 = arith.constant 0 : i32
    %c0_i32_1 = arith.constant 0 : i32
    %c0_i32_2 = arith.constant 0 : i32
    return %c0_i32, %c0_i32_0, %c0_i32_1 : i32, i32, i32
  }
  func.func @transform_2(%arg0: i32) -> (i32, i32) {
    %c0_i32 = arith.constant 0 : i32
    %c0_i32_0 = arith.constant 0 : i32
    %c0_i32_1 = arith.constant 0 : i32
    return %c0_i32, %c0_i32_0 : i32, i32
  }
  func.func @transform_3(%arg0: i32) -> (i32, i32, i32) {
    %c0_i32 = arith.constant 0 : i32
    %c0_i32_0 = arith.constant 0 : i32
    %c0_i32_1 = arith.constant 0 : i32
    %c0_i32_2 = arith.constant 0 : i32
    return %c0_i32, %c0_i32_0, %c0_i32_1 : i32, i32, i32
  }
  func.func @transform_4(%arg0: i32) -> (i32, i32) {
    %c0_i32 = arith.constant 0 : i32
    %c0_i32_0 = arith.constant 0 : i32
    %c0_i32_1 = arith.constant 0 : i32
    return %c0_i32, %c0_i32_0 : i32, i32
  }
  func.func @transform_5(%arg0: i32) -> (i32, i32, i32) {
    %c0_i32 = arith.constant 0 : i32
    %c0_i32_0 = arith.constant 0 : i32
    %c0_i32_1 = arith.constant 0 : i32
    %c0_i32_2 = arith.constant 0 : i32
    return %c0_i32, %c0_i32_0, %c0_i32_1 : i32, i32, i32
  }
  func.func @transform_6(%arg0: i32) -> (i32, i32) {
    %c0_i32 = arith.constant 0 : i32
    %c0_i32_0 = arith.constant 0 : i32
    %c0_i32_1 = arith.constant 0 : i32
    return %c0_i32, %c0_i32_0 : i32, i32
  }
  func.func @transform_7(%arg0: i32) -> (i32, i32) {
    %c0_i32 = arith.constant 0 : i32
    %c0_i32_0 = arith.constant 0 : i32
    return %arg0, %c0_i32 : i32, i32
  }
}

</mosaic_0001>

<llo_original>
// kernel: tile.18
$region0: #{tile.18}
  #allocation0 [shape = 's32[1]{0}', space=sflag, size = 0x4, scoped, tag = 'scoped memory for tile.18']
  %s0 = inlined_call_operand.vmem [shape: f32[16], index: 0, kind: input, shape index: {}]
  %s1 = inlined_call_operand.vmem [shape: f32[14,16], index: 1, kind: output, shape index: {}]
  // Predicated region
  $region2: #{tile.18} parent=0 // pred_check
    _
  $region3: #{tile.18} parent=0 // pred_check_branch
    %3 = sbr.rel (0) target = $region5
  $region4: #{tile.18} parent=0 // pred_region
    _
  $region5: #{tile.18} parent=0 // pred_fallthru
    _
  %v4 = vld [vmem:[%s0] ss:$0 sm:$0xff]
  %5 = vst [vmem:[%s1] sm:$0xff] %v4
  %s6 = scalar_lea.vmem %s1, 8
  %7 = vst [vmem:[%s6] sm:$0xff] %v4

// kernel: tile.19
$region0: #{tile.19}
  %s0 = inlined_call_operand.vmem [shape: f32[14,16], index: 0, kind: input, shape index: {}]
  %s1 = inlined_call_operand.vmem [shape: f32[1,224], index: 1, kind: output, shape index: {}]
  $region1: #{tile.19} parent=0
    #allocation0 [shape = 'u8[8192]{0}', space=vmem, size = 0x2000, scoped, tag = 'scoped mem for output reshape']
    %s2 = smov 3
    %v3 = vld [vmem:[%s0] ss:$8 sm:%s2]
    %vm4 = vcmask 130048
    %5 = vst.msk [vmem:[#allocation0] ss:$8 sm:$0x3] %vm4, %v3
    %s6 = scalar_lea.vmem %s0, 7
    %v7 = vld [vmem:[%s6] sm:$0x1]
    %8 = vrot.lane.b32.xlu0 %v7, 112
    %v9 = vpop.permute.xlu0 %8
    %vm10 = vcmask 1048448
    %11 = vst.msk [vmem:[#allocation0] sm:$0x1] %vm10, %v9
    %s12 = scalar_lea.vmem %s0, 6
    %v13 = vld [vmem:[%s12] sm:$0x1]
    %14 = vrot.lane.b32.xlu0 %v13, 96
    %v15 = vpop.permute.xlu0 %14
    %vm16 = vcmask 917248
    %17 = vst.msk [vmem:[#allocation0] sm:$0x1] %vm16, %v15
    %s18 = scalar_lea.vmem %s0, 5
    %s19 = smov 3
    %v20 = vld [vmem:[%s18] ss:$8 sm:%s19]
    %21 = vrot.lane.b32.xlu0 %v20, 80
    %v22 = vpop.permute.xlu0 %21
    %vm23 = vcmask 786048
    %24 = vst.msk [vmem:[#allocation0] ss:$8 sm:$0x3] %vm23, %v22
    %s25 = scalar_lea.vmem %s0, 4
    %s26 = smov 3
    %v27 = vld [vmem:[%s25] ss:$8 sm:%s26]
    %28 = vrot.lane.b32.xlu0 %v27, 64
    %v29 = vpop.permute.xlu0 %28
    %vm30 = vcmask 654848
    %31 = vst.msk [vmem:[#allocation0] ss:$8 sm:$0x3] %vm30, %v29
    %s32 = scalar_lea.vmem %s0, 3
    %s33 = smov 3
    %v34 = vld [vmem:[%s32] ss:$8 sm:%s33]
    %35 = vrot.lane.b32.xlu0 %v34, 48
    %v36 = vpop.permute.xlu0 %35
    %vm37 = vcmask 523648
    %38 = vst.msk [vmem:[#allocation0] ss:$8 sm:$0x3] %vm37, %v36
    %s39 = scalar_lea.vmem %s0, 2
    %s40 = smov 3
    %v41 = vld [vmem:[%s39] ss:$8 sm:%s40]
    %42 = vrot.lane.b32.xlu0 %v41, 32
    %v43 = vpop.permute.xlu0 %42
    %vm44 = vcmask 392448
    %45 = vst.msk [vmem:[#allocation0] ss:$8 sm:$0x3] %vm44, %v43
    %s46 = scalar_lea.vmem %s0, 1
    %s47 = smov 3
    %v48 = vld [vmem:[%s46] ss:$8 sm:%s47]
    %49 = vrot.lane.b32.xlu0 %v48, 16
    %v50 = vpop.permute.xlu0 %49
    %vm51 = vcmask 261248
    %52 = vst.msk [vmem:[#allocation0] ss:$8 sm:$0x3] %vm51, %v50
    %s54 = sshllo.u32 0, 1
    %v56 = vld [vmem:[#allocation0] sm:%s54]
    %s57 = sshllo.u32 0, 1
    %58 = vst [vmem:[%s1] sm:%s57] %v56
    %s59 = scalar_lea.vmem [#allocation0], 8
    %v60 = vld [vmem:[%s59] sm:%s54]
    %s61 = sshllo.u32 0, 1
    %s62 = scalar_lea.vmem %s1, 1
    %63 = vst [vmem:[%s62] sm:%s61] %v60

// kernel: tile.23
$region0: #{tile.23}
  #allocation0 [shape = 's32[1]{0}', space=sflag, size = 0x4, scoped, tag = 'scoped memory for tile.23']
  %s0 = inlined_call_operand.vmem [shape: f32[16], index: 0, kind: input, shape index: {}]
  %s1 = inlined_call_operand.vmem [shape: f32[7,16], index: 1, kind: output, shape index: {}]
  // Predicated region
  $region2: #{tile.23} parent=0 // pred_check
    _
  $region3: #{tile.23} parent=0 // pred_check_branch
    %3 = sbr.rel (0) target = $region5
  $region4: #{tile.23} parent=0 // pred_region
    _
  $region5: #{tile.23} parent=0 // pred_fallthru
    _
  %v4 = vld [vmem:[%s0] ss:$0 sm:$0xff]
  %5 = vst [vmem:[%s1] sm:$0xff] %v4

// kernel: tile.24
$region0: #{tile.24}
  %s0 = inlined_call_operand.vmem [shape: f32[7,16], index: 0, kind: input, shape index: {}]
  %s1 = inlined_call_operand.vmem [shape: f32[1,112], index: 1, kind: output, shape index: {}]
  $region1: #{tile.24} parent=0
    #allocation0 [shape = 'u8[4096]{0}', space=vmem, size = 0x1000, scoped, tag = 'scoped mem for output reshape']
    %v2 = vld [vmem:[%s0] sm:$0x1]
    %vm3 = vcmask 130048
    %4 = vst.msk [vmem:[#allocation0] sm:$0x1] %vm3, %v2
    %s5 = scalar_lea.vmem %s0, 6
    %v6 = vld [vmem:[%s5] sm:$0x1]
    %7 = vrot.lane.b32.xlu0 %v6, 96
    %v8 = vpop.permute.xlu0 %7
    %vm9 = vcmask 917248
    %10 = vst.msk [vmem:[#allocation0] sm:$0x1] %vm9, %v8
    %s11 = scalar_lea.vmem %s0, 5
    %v12 = vld [vmem:[%s11] sm:$0x1]
    %13 = vrot.lane.b32.xlu0 %v12, 80
    %v14 = vpop.permute.xlu0 %13
    %vm15 = vcmask 786048
    %16 = vst.msk [vmem:[#allocation0] sm:$0x1] %vm15, %v14
    %s17 = scalar_lea.vmem %s0, 4
    %v18 = vld [vmem:[%s17] sm:$0x1]
    %19 = vrot.lane.b32.xlu0 %v18, 64
    %v20 = vpop.permute.xlu0 %19
    %vm21 = vcmask 654848
    %22 = vst.msk [vmem:[#allocation0] sm:$0x1] %vm21, %v20
    %s23 = scalar_lea.vmem %s0, 3
    %v24 = vld [vmem:[%s23] sm:$0x1]
    %25 = vrot.lane.b32.xlu0 %v24, 48
    %v26 = vpop.permute.xlu0 %25
    %vm27 = vcmask 523648
    %28 = vst.msk [vmem:[#allocation0] sm:$0x1] %vm27, %v26
    %s29 = scalar_lea.vmem %s0, 2
    %v30 = vld [vmem:[%s29] sm:$0x1]
    %31 = vrot.lane.b32.xlu0 %v30, 32
    %v32 = vpop.permute.xlu0 %31
    %vm33 = vcmask 392448
    %34 = vst.msk [vmem:[#allocation0] sm:$0x1] %vm33, %v32
    %s35 = scalar_lea.vmem %s0, 1
    %v36 = vld [vmem:[%s35] sm:$0x1]
    %37 = vrot.lane.b32.xlu0 %v36, 16
    %v38 = vpop.permute.xlu0 %37
    %vm39 = vcmask 261248
    %40 = vst.msk [vmem:[#allocation0] sm:$0x1] %vm39, %v38
    %s42 = sshllo.u32 0, 1
    %v44 = vld [vmem:[#allocation0] sm:%s42]
    %s45 = sshllo.u32 0, 1
    %46 = vst [vmem:[%s1] sm:%s45] %v44

// kernel: tile.28
$region0: #{tile.28}
  #allocation0 [shape = 's32[1]{0}', space=sflag, size = 0x4, scoped, tag = 'scoped memory for tile.28']
  %s0 = inlined_call_operand.vmem [shape: f32[128], index: 0, kind: input, shape index: {}]
  %s1 = inlined_call_operand.vmem [shape: f32[4,128], index: 1, kind: output, shape index: {}]
  // Predicated region
  $region2: #{tile.28} parent=0 // pred_check
    _
  $region3: #{tile.28} parent=0 // pred_check_branch
    %3 = sbr.rel (0) target = $region5
  $region4: #{tile.28} parent=0 // pred_region
    _
  $region5: #{tile.28} parent=0 // pred_fallthru
    _
  %v4 = vld [vmem:[%s0] ss:$0 sm:$0xff]
  %5 = vst [vmem:[%s1] sm:$0xf] %v4

// kernel: mnist_cnn_forward.1
$region0: #{mnist_cnn_forward.1}
  #allocation0 [shape = 'u32[]', space=smem, size = 0x4, offset = 0x4, fixed_abs, tag = 'smem constant byte address 0x4 - core index']
  #allocation1 [shape = 'u32[144,128]{1,0:T(1,128)}', space=vmem, size = 0x12000, scoped, tag = 'internal scratch']
  #allocation2 [shape = 'bf16[2,8,16,224]{3,2,1,0:T(16,128)(2,1)}', space=vmem, size = 0x20000, scoped, tag = 'scratch operand']
  #allocation3 [shape = 'bf16[2,5,16,112]{3,2,1,0:T(16,128)(2,1)}', space=vmem, size = 0xa000, scoped, tag = 'scratch operand']
  %s0 = inlined_call_operand.vmem [shape: bf16[2,15,16,28], index: 0, kind: input, shape index: {}]
  %s1 = inlined_call_operand.vmem [shape: bf16[3,28,224], index: 1, kind: input, shape index: {}]
  %s2 = inlined_call_operand.vmem [shape: f32[1,224], index: 2, kind: input, shape index: {}]
  %s3 = inlined_call_operand.vmem [shape: bf16[3,224,112], index: 3, kind: input, shape index: {}]
  %s4 = inlined_call_operand.vmem [shape: f32[1,112], index: 4, kind: input, shape index: {}]
  %s5 = inlined_call_operand.vmem [shape: bf16[3,112,512], index: 5, kind: input, shape index: {}]
  %s6 = inlined_call_operand.vmem [shape: f32[1,512], index: 6, kind: input, shape index: {}]
  %s7 = inlined_call_operand.vmem [shape: bf16[16,128], index: 7, kind: output, shape index: {}]
  %s8 = sld [smem:[#allocation0]]
  $region38: #{mnist_cnn_forward.1} parent=0
    _
  %s10 = ssub.s32 1, %s8
  %s11 = scalar_select 0, %s10, %s8
  // Predicated region
  $region2: #{mnist_cnn_forward.1} parent=0 // pred_check
    _
  $region3: #{mnist_cnn_forward.1} parent=0 // pred_check_branch
    %13 = sbr.rel (0) target = $region5
  $region4: #{mnist_cnn_forward.1} parent=0 // pred_region
    _
  $region5: #{mnist_cnn_forward.1} parent=0 // pred_fallthru
    _
  // Predicated region
  $region6: #{mnist_cnn_forward.1} parent=0 // pred_check
    _
  $region7: #{mnist_cnn_forward.1} parent=0 // pred_check_branch
    %15 = sbr.rel (0) target = $region9
  $region8: #{mnist_cnn_forward.1} parent=0 // pred_region
    _
  $region9: #{mnist_cnn_forward.1} parent=0 // pred_fallthru
    _
  // Predicated region
  $region10: #{mnist_cnn_forward.1} parent=0 // pred_check
    _
  $region11: #{mnist_cnn_forward.1} parent=0 // pred_check_branch
    %17 = sbr.rel (0) target = $region13
  $region12: #{mnist_cnn_forward.1} parent=0 // pred_region
    _
  $region13: #{mnist_cnn_forward.1} parent=0 // pred_fallthru
    _
  // Predicated region
  $region14: #{mnist_cnn_forward.1} parent=0 // pred_check
    _
  $region15: #{mnist_cnn_forward.1} parent=0 // pred_check_branch
    %19 = sbr.rel (0) target = $region17
  $region16: #{mnist_cnn_forward.1} parent=0 // pred_region
    _
  $region17: #{mnist_cnn_forward.1} parent=0 // pred_fallthru
    _
  // Predicated region
  $region18: #{mnist_cnn_forward.1} parent=0 // pred_check
    _
  $region19: #{mnist_cnn_forward.1} parent=0 // pred_check_branch
    %21 = sbr.rel (0) target = $region21
  $region20: #{mnist_cnn_forward.1} parent=0 // pred_region
    _
  $region21: #{mnist_cnn_forward.1} parent=0 // pred_fallthru
    _
  // Predicated region
  $region22: #{mnist_cnn_forward.1} parent=0 // pred_check
    _
  $region23: #{mnist_cnn_forward.1} parent=0 // pred_check_branch
    %23 = sbr.rel (0) target = $region25
  $region24: #{mnist_cnn_forward.1} parent=0 // pred_region
    _
  $region25: #{mnist_cnn_forward.1} parent=0 // pred_fallthru
    _
  // Predicated region
  $region26: #{mnist_cnn_forward.1} parent=0 // pred_check
    _
  $region27: #{mnist_cnn_forward.1} parent=0 // pred_check_branch
    %25 = sbr.rel (0) target = $region29
  $region28: #{mnist_cnn_forward.1} parent=0 // pred_region
    _
  $region29: #{mnist_cnn_forward.1} parent=0 // pred_fallthru
    _
  %v27 = vld [vmem:[%s0] sm:$0xf]
  %v28 = vld [vmem:[%s0 + $0x4] sm:$0xf]
  %v29 = vld [vmem:[%s0 + $0x8] sm:$0xf]
  %v30 = vld [vmem:[%s0 + $0xc] sm:$0xf]
  %v31 = vld [vmem:[%s0 + $0x10] sm:$0xf]
  %v32 = vld [vmem:[%s0 + $0x14] sm:$0xf]
  %v33 = vld [vmem:[%s0 + $0x18] sm:$0xf]
  %v34 = vld [vmem:[%s0 + $0x1c] sm:$0xf]
  %v35 = vld [vmem:[%s0 + $0x20] sm:$0xf]
  %v36 = vld [vmem:[%s0 + $0x24] sm:$0xf]
  %v37 = vld [vmem:[%s0 + $0x28] sm:$0xf]
  %v38 = vld [vmem:[%s0 + $0x2c] sm:$0xf]
  %v39 = vld [vmem:[%s0 + $0x30] sm:$0xf]
  %v40 = vld [vmem:[%s0 + $0x34] sm:$0xf]
  %v41 = vld [vmem:[%s0 + $0x38] sm:$0xf]
  %v42 = vld [vmem:[%s0 + $0x3c] sm:$0xf]
  %v43 = vld [vmem:[%s0 + $0x40] sm:$0xf]
  %v44 = vld [vmem:[%s0 + $0x44] sm:$0xf]
  %v45 = vld [vmem:[%s0 + $0x48] sm:$0xf]
  %v46 = vld [vmem:[%s0 + $0x4c] sm:$0xf]
  %v47 = vld [vmem:[%s0 + $0x50] sm:$0xf]
  %v48 = vld [vmem:[%s0 + $0x54] sm:$0xf]
  %v49 = vld [vmem:[%s0 + $0x58] sm:$0xf]
  %v50 = vld [vmem:[%s0 + $0x5c] sm:$0xf]
  %v51 = vld [vmem:[%s0 + $0x60] sm:$0xf]
  %v52 = vld [vmem:[%s0 + $0x64] sm:$0xf]
  %v53 = vld [vmem:[%s0 + $0x68] sm:$0xf]
  %v54 = vld [vmem:[%s0 + $0x6c] sm:$0xf]
  %s55 = scalar_lea.vmem %s0, 120
  %v56 = vld [vmem:[%s55] sm:$0xf]
  %v57 = vld [vmem:[%s55 + $0x4] sm:$0xf]
  %v58 = vld [vmem:[%s55 + $0x8] sm:$0xf]
  %v59 = vld [vmem:[%s55 + $0xc] sm:$0xf]
  %v60 = vld [vmem:[%s55 + $0x10] sm:$0xf]
  %v61 = vld [vmem:[%s55 + $0x14] sm:$0xf]
  %v62 = vld [vmem:[%s55 + $0x18] sm:$0xf]
  %v63 = vld [vmem:[%s55 + $0x1c] sm:$0xf]
  %v64 = vld [vmem:[%s55 + $0x20] sm:$0xf]
  %v65 = vld [vmem:[%s55 + $0x24] sm:$0xf]
  %v66 = vld [vmem:[%s55 + $0x28] sm:$0xf]
  %v67 = vld [vmem:[%s55 + $0x2c] sm:$0xf]
  %v68 = vld [vmem:[%s55 + $0x30] sm:$0xf]
  %v69 = vld [vmem:[%s55 + $0x34] sm:$0xf]
  %v70 = vld [vmem:[%s55 + $0x38] sm:$0xf]
  %v71 = vld [vmem:[%s55 + $0x3c] sm:$0xf]
  %v72 = vld [vmem:[%s55 + $0x40] sm:$0xf]
  %v73 = vld [vmem:[%s55 + $0x44] sm:$0xf]
  %v74 = vld [vmem:[%s55 + $0x48] sm:$0xf]
  %v75 = vld [vmem:[%s55 + $0x4c] sm:$0xf]
  %v76 = vld [vmem:[%s55 + $0x50] sm:$0xf]
  %v77 = vld [vmem:[%s55 + $0x54] sm:$0xf]
  %v78 = vld [vmem:[%s55 + $0x58] sm:$0xf]
  %v79 = vld [vmem:[%s55 + $0x5c] sm:$0xf]
  %v80 = vld [vmem:[%s55 + $0x60] sm:$0xf]
  %v81 = vld [vmem:[%s55 + $0x64] sm:$0xf]
  %v82 = vld [vmem:[%s55 + $0x68] sm:$0xf]
  %v83 = vld [vmem:[%s55 + $0x6c] sm:$0xf]
  %s84 = scalar_lea.vmem %s0, 8
  %v85 = vld [vmem:[%s84] sm:$0xf]
  %v86 = vld [vmem:[%s84 + $0x4] sm:$0xf]
  %v87 = vld [vmem:[%s84 + $0x8] sm:$0xf]
  %v88 = vld [vmem:[%s84 + $0xc] sm:$0xf]
  %v89 = vld [vmem:[%s84 + $0x10] sm:$0xf]
  %v90 = vld [vmem:[%s84 + $0x14] sm:$0xf]
  %v91 = vld [vmem:[%s84 + $0x18] sm:$0xf]
  %v92 = vld [vmem:[%s84 + $0x1c] sm:$0xf]
  %v93 = vld [vmem:[%s84 + $0x20] sm:$0xf]
  %v94 = vld [vmem:[%s84 + $0x24] sm:$0xf]
  %v95 = vld [vmem:[%s84 + $0x28] sm:$0xf]
  %v96 = vld [vmem:[%s84 + $0x2c] sm:$0xf]
  %v97 = vld [vmem:[%s84 + $0x30] sm:$0xf]
  %v98 = vld [vmem:[%s84 + $0x34] sm:$0xf]
  %v99 = vld [vmem:[%s84 + $0x38] sm:$0xf]
  %v100 = vld [vmem:[%s84 + $0x3c] sm:$0xf]
  %v101 = vld [vmem:[%s84 + $0x40] sm:$0xf]
  %v102 = vld [vmem:[%s84 + $0x44] sm:$0xf]
  %v103 = vld [vmem:[%s84 + $0x48] sm:$0xf]
  %v104 = vld [vmem:[%s84 + $0x4c] sm:$0xf]
  %v105 = vld [vmem:[%s84 + $0x50] sm:$0xf]
  %v106 = vld [vmem:[%s84 + $0x54] sm:$0xf]
  %v107 = vld [vmem:[%s84 + $0x58] sm:$0xf]
  %v108 = vld [vmem:[%s84 + $0x5c] sm:$0xf]
  %v109 = vld [vmem:[%s84 + $0x60] sm:$0xf]
  %v110 = vld [vmem:[%s84 + $0x64] sm:$0xf]
  %v111 = vld [vmem:[%s84 + $0x68] sm:$0xf]
  %v112 = vld [vmem:[%s84 + $0x6c] sm:$0xf]
  %v113 = vld [vmem:[%s1] sm:$0xff]
  %v114 = vld [vmem:[%s1 + $0x8] sm:$0xff]
  %v115 = vld [vmem:[%s1 + $0x10] sm:$0xff]
  %v116 = vld [vmem:[%s1 + $0x18] sm:$0x33]
  %s117 = scalar_lea.vmem %s1, 32
  %v118 = vld [vmem:[%s117] sm:$0xff]
  %v119 = vld [vmem:[%s117 + $0x8] sm:$0xff]
  %v120 = vld [vmem:[%s117 + $0x10] sm:$0xff]
  %v121 = vld [vmem:[%s117 + $0x18] sm:$0x33]
  %v150 = vunpack.c.l.b16 %v56
  %v151 = vunpack.c.l.b16 %v57
  %v152 = vunpack.c.l.b16 %v58
  %v153 = vunpack.c.l.b16 %v59
  %v154 = vunpack.c.l.b16 %v60
  %v155 = vunpack.c.l.b16 %v61
  %v156 = vunpack.c.l.b16 %v62
  %v157 = vunpack.c.l.b16 %v63
  %v158 = vunpack.c.l.b16 %v64
  %v159 = vunpack.c.l.b16 %v65
  %v160 = vunpack.c.l.b16 %v66
  %v161 = vunpack.c.l.b16 %v67
  %v162 = vunpack.c.l.b16 %v68
  %v163 = vunpack.c.l.b16 %v69
  %v164 = vunpack.c.l.b16 %v70
  %v165 = vunpack.c.l.b16 %v71
  %v166 = vunpack.c.l.b16 %v72
  %v167 = vunpack.c.l.b16 %v73
  %v168 = vunpack.c.l.b16 %v74
  %v169 = vunpack.c.l.b16 %v75
  %v170 = vunpack.c.l.b16 %v76
  %v171 = vunpack.c.l.b16 %v77
  %v172 = vunpack.c.l.b16 %v78
  %v173 = vunpack.c.l.b16 %v79
  %v174 = vunpack.c.l.b16 %v80
  %v175 = vunpack.c.l.b16 %v81
  %v176 = vunpack.c.l.b16 %v82
  %v177 = vunpack.c.l.b16 %v83
  %v178 = vpack.c.b16 %v151, %v150
  %v179 = vpack.c.b16 %v153, %v152
  %v180 = vpack.c.b16 %v155, %v154
  %v181 = vpack.c.b16 %v157, %v156
  %v182 = vpack.c.b16 %v159, %v158
  %v183 = vpack.c.b16 %v161, %v160
  %v184 = vpack.c.b16 %v163, %v162
  %v185 = vpack.c.b16 %v165, %v164
  %v186 = vpack.c.b16 %v167, %v166
  %v187 = vpack.c.b16 %v169, %v168
  %v188 = vpack.c.b16 %v171, %v170
  %v189 = vpack.c.b16 %v173, %v172
  %v190 = vpack.c.b16 %v175, %v174
  %v191 = vpack.c.b16 %v177, %v176
  %v196 = vunpack.c.l.b16 %v118
  %v197 = vunpack.c.h.b16 %v118
  %v198 = vunpack.c.l.b16 %v119
  %v199 = vunpack.c.h.b16 %v119
  %v200 = vunpack.c.l.b16 %v120
  %v201 = vunpack.c.h.b16 %v120
  %v202 = vunpack.c.l.b16 %v121
  %v203 = vunpack.c.h.b16 %v121
  %v204 = vpack.c.b16 %v198, %v196
  %v205 = vpack.c.b16 %v199, %v197
  %v206 = vpack.c.b16 %v202, %v200
  %v207 = vpack.c.b16 %v203, %v201
  %vm210 = vcmask 228352
  %v212 = vsel %vm210, %v178, 0
  %v215 = vsel %vm210, %v179, 0
  %v218 = vsel %vm210, %v180, 0
  %v221 = vsel %vm210, %v181, 0
  %v224 = vsel %vm210, %v182, 0
  %v227 = vsel %vm210, %v183, 0
  %v230 = vsel %vm210, %v184, 0
  %v233 = vsel %vm210, %v185, 0
  %v236 = vsel %vm210, %v186, 0
  %v239 = vsel %vm210, %v187, 0
  %v242 = vsel %vm210, %v188, 0
  %v245 = vsel %vm210, %v189, 0
  %v248 = vsel %vm210, %v190, 0
  %v251 = vsel %vm210, %v191, 0
  %vm253 = vcmask 1045504
  %v255 = vsel %vm253, %v206, 0
  %v258 = vsel %vm253, %v207, 0
  %260 = vmatprep.subr.bf16.mxu0 %v205
  %261 = vmatpush1.bf16.msra.mxu0 %v204
  %262 = vmatprep.subr.bf16.mxu0 %v258
  %263 = vmatpush1.bf16.msra.mxu0 %v255
  %264 = vmatprep.subr.bf16.mxu0 0
  %265 = vmatpush1.bf16.msra.mxu0 0
  %266 = vmatprep.subr.bf16.mxu0 0
  %267 = vmatpush1.bf16.msra.mxu0 0
  %268 = vmatprep.subr.bf16.mxu0 0
  %269 = vmatpush1.bf16.msra.mxu0 0
  %270 = vmatprep.subr.bf16.mxu0 0
  %271 = vmatpush1.bf16.msra.mxu0 0
  %272 = vmatprep.subr.bf16.mxu0 0
  %273 = vmatpush1.bf16.msra.mxu0 0
  %274 = vmatprep.subr.bf16.mxu0 0
  %275 = vmatpush1.bf16.msra.mxu0 0
  %276 = vmatprep.subr.bf16.mxu0 0
  %277 = vmatpush1.bf16.msra.mxu0 0
  %278 = vmatprep.subr.bf16.mxu0 0
  %279 = vmatpush1.bf16.msra.mxu0 0
  %280 = vmatprep.subr.bf16.mxu0 0
  %281 = vmatpush1.bf16.msra.mxu0 0
  %282 = vmatprep.subr.bf16.mxu0 0
  %283 = vmatpush1.bf16.msra.mxu0 0
  %284 = vmatprep.subr.bf16.mxu0 0
  %285 = vmatpush1.bf16.msra.mxu0 0
  %286 = vmatprep.subr.bf16.mxu0 0
  %287 = vmatpush1.bf16.msra.mxu0 0
  %288 = vmatprep.subr.bf16.mxu0 0
  %289 = vmatpush1.bf16.msra.mxu0 0
  %290 = vmatprep.subr.bf16.mxu0 0
  %291 = vmatpush1.bf16.msra.mxu0 0
  %292 = vmatprep.mubr.bf16.mxu0 0
  %293 = vmatmul.mubr.bf16.gmra.mrb[0].mxu0 %v212
  %v294 = vpop.f32.mrb[0].mxu0
  %v295 = vadd.f32 0.0, %v294
  %v296 = vpop.f32.mrb[0].mxu0
  %v297 = vadd.f32 0.0, %v296
  %v298 = vpop.f32.mrb[0].mxu0
  %v299 = vadd.f32 0.0, %v298
  %v300 = vpop.f32.mrb[0].mxu0
  %v301 = vadd.f32 0.0, %v300
  %302 = vmatprep.mubr.bf16.mxu0 0
  %303 = vmatmul.mubr.bf16.gmra.mrb[0].mxu0 %v215
  %v304 = vpop.f32.mrb[0].mxu0
  %v305 = vadd.f32 0.0, %v304
  %v306 = vpop.f32.mrb[0].mxu0
  %v307 = vadd.f32 0.0, %v306
  %v308 = vpop.f32.mrb[0].mxu0
  %v309 = vadd.f32 0.0, %v308
  %v310 = vpop.f32.mrb[0].mxu0
  %v311 = vadd.f32 0.0, %v310
  %312 = vmatprep.mubr.bf16.mxu0 0
  %313 = vmatmul.mubr.bf16.gmra.mrb[0].mxu0 %v218
  %v314 = vpop.f32.mrb[0].mxu0
  %v315 = vadd.f32 0.0, %v314
  %v316 = vpop.f32.mrb[0].mxu0
  %v317 = vadd.f32 0.0, %v316
  %v318 = vpop.f32.mrb[0].mxu0
  %v319 = vadd.f32 0.0, %v318
  %v320 = vpop.f32.mrb[0].mxu0
  %v321 = vadd.f32 0.0, %v320
  %322 = vmatprep.mubr.bf16.mxu0 0
  %323 = vmatmul.mubr.bf16.gmra.mrb[0].mxu0 %v221
  %v324 = vpop.f32.mrb[0].mxu0
  %v325 = vadd.f32 0.0, %v324
  %v326 = vpop.f32.mrb[0].mxu0
  %v327 = vadd.f32 0.0, %v326
  %v328 = vpop.f32.mrb[0].mxu0
  %v329 = vadd.f32 0.0, %v328
  %v330 = vpop.f32.mrb[0].mxu0
  %v331 = vadd.f32 0.0, %v330
  %332 = vmatprep.mubr.bf16.mxu0 0
  %333 = vmatmul.mubr.bf16.gmra.mrb[0].mxu0 %v224
  %v334 = vpop.f32.mrb[0].mxu0
  %v335 = vadd.f32 0.0, %v334
  %v336 = vpop.f32.mrb[0].mxu0
  %v337 = vadd.f32 0.0, %v336
  %v338 = vpop.f32.mrb[0].mxu0
  %v339 = vadd.f32 0.0, %v338
  %v340 = vpop.f32.mrb[0].mxu0
  %v341 = vadd.f32 0.0, %v340
  %342 = vmatprep.mubr.bf16.mxu0 0
  %343 = vmatmul.mubr.bf16.gmra.mrb[0].mxu0 %v227
  %v344 = vpop.f32.mrb[0].mxu0
  %v345 = vadd.f32 0.0, %v344
  %v346 = vpop.f32.mrb[0].mxu0
  %v347 = vadd.f32 0.0, %v346
  %v348 = vpop.f32.mrb[0].mxu0
  %v349 = vadd.f32 0.0, %v348
  %v350 = vpop.f32.mrb[0].mxu0
  %v351 = vadd.f32 0.0, %v350
  %352 = vmatprep.mubr.bf16.mxu0 0
  %353 = vmatmul.mubr.bf16.gmra.mrb[0].mxu0 %v230
  %v354 = vpop.f32.mrb[0].mxu0
  %v355 = vadd.f32 0.0, %v354
  %v356 = vpop.f32.mrb[0].mxu0
  %v357 = vadd.f32 0.0, %v356
  %v358 = vpop.f32.mrb[0].mxu0
  %v359 = vadd.f32 0.0, %v358
  %v360 = vpop.f32.mrb[0].mxu0
  %v361 = vadd.f32 0.0, %v360
  %362 = vmatprep.mubr.bf16.mxu0 0
  %363 = vmatmul.mubr.bf16.gmra.mrb[0].mxu0 %v233
  %v364 = vpop.f32.mrb[0].mxu0
  %v365 = vadd.f32 0.0, %v364
  %v366 = vpop.f32.mrb[0].mxu0
  %v367 = vadd.f32 0.0, %v366
  %v368 = vpop.f32.mrb[0].mxu0
  %v369 = vadd.f32 0.0, %v368
  %v370 = vpop.f32.mrb[0].mxu0
  %v371 = vadd.f32 0.0, %v370
  %372 = vmatprep.mubr.bf16.mxu0 0
  %373 = vmatmul.mubr.bf16.gmra.mrb[0].mxu0 %v236
  %v374 = vpop.f32.mrb[0].mxu0
  %v375 = vadd.f32 0.0, %v374
  %v376 = vpop.f32.mrb[0].mxu0
  %v377 = vadd.f32 0.0, %v376
  %v378 = vpop.f32.mrb[0].mxu0
  %v379 = vadd.f32 0.0, %v378
  %v380 = vpop.f32.mrb[0].mxu0
  %v381 = vadd.f32 0.0, %v380
  %382 = vmatprep.mubr.bf16.mxu0 0
  %383 = vmatmul.mubr.bf16.gmra.mrb[0].mxu0 %v239
  %v384 = vpop.f32.mrb[0].mxu0
  %v385 = vadd.f32 0.0, %v384
  %v386 = vpop.f32.mrb[0].mxu0
  %v387 = vadd.f32 0.0, %v386
  %v388 = vpop.f32.mrb[0].mxu0
  %v389 = vadd.f32 0.0, %v388
  %v390 = vpop.f32.mrb[0].mxu0
  %v391 = vadd.f32 0.0, %v390
  %392 = vmatprep.mubr.bf16.mxu0 0
  %393 = vmatmul.mubr.bf16.gmra.mrb[0].mxu0 %v242
  %v394 = vpop.f32.mrb[0].mxu0
  %v395 = vadd.f32 0.0, %v394
  %v396 = vpop.f32.mrb[0].mxu0
  %v397 = vadd.f32 0.0, %v396
  %v398 = vpop.f32.mrb[0].mxu0
  %v399 = vadd.f32 0.0, %v398
  %v400 = vpop.f32.mrb[0].mxu0
  %v401 = vadd.f32 0.0, %v400
  %402 = vmatprep.mubr.bf16.mxu0 0
  %403 = vmatmul.mubr.bf16.gmra.mrb[0].mxu0 %v245
  %v404 = vpop.f32.mrb[0].mxu0
  %v405 = vadd.f32 0.0, %v404
  %v406 = vpop.f32.mrb[0].mxu0
  %v407 = vadd.f32 0.0, %v406
  %v408 = vpop.f32.mrb[0].mxu0
  %v409 = vadd.f32 0.0, %v408
  %v410 = vpop.f32.mrb[0].mxu0
  %v411 = vadd.f32 0.0, %v410
  %412 = vmatprep.mubr.bf16.mxu0 0
  %413 = vmatmul.mubr.bf16.gmra.mrb[0].mxu0 %v248
  %v414 = vpop.f32.mrb[0].mxu0
  %v415 = vadd.f32 0.0, %v414
  %v416 = vpop.f32.mrb[0].mxu0
  %v417 = vadd.f32 0.0, %v416
  %v418 = vpop.f32.mrb[0].mxu0
  %v419 = vadd.f32 0.0, %v418
  %v420 = vpop.f32.mrb[0].mxu0
  %v421 = vadd.f32 0.0, %v420
  %422 = vmatprep.mubr.bf16.mxu0 0
  %423 = vmatmul.mubr.bf16.gmra.mrb[0].mxu0 %v251
  %v424 = vpop.f32.mrb[0].mxu0
  %v425 = vadd.f32 0.0, %v424
  %v426 = vpop.f32.mrb[0].mxu0
  %v427 = vadd.f32 0.0, %v426
  %v428 = vpop.f32.mrb[0].mxu0
  %v429 = vadd.f32 0.0, %v428
  %v430 = vpop.f32.mrb[0].mxu0
  %v431 = vadd.f32 0.0, %v430
  %432 = vdwg.mxu0
  %v461 = vunpack.c.l.b16 %v27
  %v462 = vunpack.c.l.b16 %v28
  %v463 = vunpack.c.l.b16 %v29
  %v464 = vunpack.c.l.b16 %v30
  %v465 = vunpack.c.l.b16 %v31
  %v466 = vunpack.c.l.b16 %v32
  %v467 = vunpack.c.l.b16 %v33
  %v468 = vunpack.c.l.b16 %v34
  %v469 = vunpack.c.l.b16 %v35
  %v470 = vunpack.c.l.b16 %v36
  %v471 = vunpack.c.l.b16 %v37
  %v472 = vunpack.c.l.b16 %v38
  %v473 = vunpack.c.l.b16 %v39
  %v474 = vunpack.c.l.b16 %v40
  %v475 = vunpack.c.l.b16 %v41
  %v476 = vunpack.c.l.b16 %v42
  %v477 = vunpack.c.l.b16 %v43
  %v478 = vunpack.c.l.b16 %v44
  %v479 = vunpack.c.l.b16 %v45
  %v480 = vunpack.c.l.b16 %v46
  %v481 = vunpack.c.l.b16 %v47
  %v482 = vunpack.c.l.b16 %v48
  %v483 = vunpack.c.l.b16 %v49
  %v484 = vunpack.c.l.b16 %v50
  %v485 = vunpack.c.l.b16 %v51
  %v486 = vunpack.c.l.b16 %v52
  %v487 = vunpack.c.l.b16 %v53
  %v488 = vunpack.c.l.b16 %v54
  %v489 = vpack.c.b16 %v462, %v461
  %v490 = vpack.c.b16 %v464, %v463
  %v491 = vpack.c.b16 %v466, %v465
  %v492 = vpack.c.b16 %v468, %v467
  %v493 = vpack.c.b16 %v470, %v469
  %v494 = vpack.c.b16 %v472, %v471
  %v495 = vpack.c.b16 %v474, %v473
  %v496 = vpack.c.b16 %v476, %v475
  %v497 = vpack.c.b16 %v478, %v477
  %v498 = vpack.c.b16 %v480, %v479
  %v499 = vpack.c.b16 %v482, %v481
  %v500 = vpack.c.b16 %v484, %v483
  %v501 = vpack.c.b16 %v486, %v485
  %v502 = vpack.c.b16 %v488, %v487
  %v507 = vunpack.c.l.b16 %v113
  %v508 = vunpack.c.h.b16 %v113
  %v509 = vunpack.c.l.b16 %v114
  %v510 = vunpack.c.h.b16 %v114
  %v511 = vunpack.c.l.b16 %v115
  %v512 = vunpack.c.h.b16 %v115
  %v513 = vunpack.c.l.b16 %v116
  %v514 = vunpack.c.h.b16 %v116
  %v515 = vpack.c.b16 %v509, %v507
  %v516 = vpack.c.b16 %v510, %v508
  %v517 = vpack.c.b16 %v513, %v511
  %v518 = vpack.c.b16 %v514, %v512
  %v522 = vsel %vm210, %v489, 0
  %v525 = vsel %vm210, %v490, 0
  %v528 = vsel %vm210, %v491, 0
  %v531 = vsel %vm210, %v492, 0
  %v534 = vsel %vm210, %v493, 0
  %v537 = vsel %vm210, %v494, 0
  %v540 = vsel %vm210, %v495, 0
  %v543 = vsel %vm210, %v496, 0
  %v546 = vsel %vm210, %v497, 0
  %v549 = vsel %vm210, %v498, 0
  %v552 = vsel %vm210, %v499, 0
  %v555 = vsel %vm210, %v500, 0
  %v558 = vsel %vm210, %v501, 0
  %v561 = vsel %vm210, %v502, 0
  %v564 = vsel %vm253, %v517, 0
  %v567 = vsel %vm253, %v518, 0
  %569 = vmatprep.subr.bf16.mxu0 %v516
  %570 = vmatpush1.bf16.msra.mxu0 %v515
  %571 = vmatprep.subr.bf16.mxu0 %v567
  %572 = vmatpush1.bf16.msra.mxu0 %v564
  %573 = vmatprep.subr.bf16.mxu0 0
  %574 = vmatpush1.bf16.msra.mxu0 0
  %575 = vmatprep.subr.bf16.mxu0 0
  %576 = vmatpush1.bf16.msra.mxu0 0
  %577 = vmatprep.subr.bf16.mxu0 0
  %578 = vmatpush1.bf16.msra.mxu0 0
  %579 = vmatprep.subr.bf16.mxu0 0
  %580 = vmatpush1.bf16.msra.mxu0 0
  %581 = vmatprep.subr.bf16.mxu0 0
  %582 = vmatpush1.bf16.msra.mxu0 0
  %583 = vmatprep.subr.bf16.mxu0 0
  %584 = vmatpush1.bf16.msra.mxu0 0
  %585 = vmatprep.subr.bf16.mxu0 0
  %586 = vmatpush1.bf16.msra.mxu0 0
  %587 = vmatprep.subr.bf16.mxu0 0
  %588 = vmatpush1.bf16.msra.mxu0 0
  %589 = vmatprep.subr.bf16.mxu0 0
  %590 = vmatpush1.bf16.msra.mxu0 0
  %591 = vmatprep.subr.bf16.mxu0 0
  %592 = vmatpush1.bf16.msra.mxu0 0
  %593 = vmatprep.subr.bf16.mxu0 0
  %594 = vmatpush1.bf16.msra.mxu0 0
  %595 = vmatprep.subr.bf16.mxu0 0
  %596 = vmatpush1.bf16.msra.mxu0 0
  %597 = vmatprep.subr.bf16.mxu0 0
  %598 = vmatpush1.bf16.msra.mxu0 0
  %599 = vmatprep.subr.bf16.mxu0 0
  %600 = vmatpush1.bf16.msra.mxu0 0
  %601 = vmatprep.mubr.bf16.mxu0 0
  %602 = vmatmul.mubr.bf16.gmra.mrb[0].mxu0 %v522
  %v603 = vpop.f32.mrb[0].mxu0
  %v604 = vadd.f32 %v295, %v603
  %v605 = vpop.f32.mrb[0].mxu0
  %v606 = vadd.f32 %v297, %v605
  %v607 = vpop.f32.mrb[0].mxu0
  %v608 = vadd.f32 %v299, %v607
  %v609 = vpop.f32.mrb[0].mxu0
  %v610 = vadd.f32 %v301, %v609
  %611 = vmatprep.mubr.bf16.mxu0 0
  %612 = vmatmul.mubr.bf16.gmra.mrb[0].mxu0 %v525
  %v613 = vpop.f32.mrb[0].mxu0
  %v614 = vadd.f32 %v305, %v613
  %v615 = vpop.f32.mrb[0].mxu0
  %v616 = vadd.f32 %v307, %v615
  %v617 = vpop.f32.mrb[0].mxu0
  %v618 = vadd.f32 %v309, %v617
  %v619 = vpop.f32.mrb[0].mxu0
  %v620 = vadd.f32 %v311, %v619
  %621 = vmatprep.mubr.bf16.mxu0 0
  %622 = vmatmul.mubr.bf16.gmra.mrb[0].mxu0 %v528
  %v623 = vpop.f32.mrb[0].mxu0
  %v624 = vadd.f32 %v315, %v623
  %v625 = vpop.f32.mrb[0].mxu0
  %v626 = vadd.f32 %v317, %v625
  %v627 = vpop.f32.mrb[0].mxu0
  %v628 = vadd.f32 %v319, %v627
  %v629 = vpop.f32.mrb[0].mxu0
  %v630 = vadd.f32 %v321, %v629
  %631 = vmatprep.mubr.bf16.mxu0 0
  %632 = vmatmul.mubr.bf16.gmra.mrb[0].mxu0 %v531
  %v633 = vpop.f32.mrb[0].mxu0
  %v634 = vadd.f32 %v325, %v633
  %v635 = vpop.f32.mrb[0].mxu0
  %v636 = vadd.f32 %v327, %v635
  %v637 = vpop.f32.mrb[0].mxu0
  %v638 = vadd.f32 %v329, %v637
  %v639 = vpop.f32.mrb[0].mxu0
  %v640 = vadd.f32 %v331, %v639
  %641 = vmatprep.mubr.bf16.mxu0 0
  %642 = vmatmul.mubr.bf16.gmra.mrb[0].mxu0 %v534
  %v643 = vpop.f32.mrb[0].mxu0
  %v644 = vadd.f32 %v335, %v643
  %v645 = vpop.f32.mrb[0].mxu0
  %v646 = vadd.f32 %v337, %v645
  %v647 = vpop.f32.mrb[0].mxu0
  %v648 = vadd.f32 %v339, %v647
  %v649 = vpop.f32.mrb[0].mxu0
  %v650 = vadd.f32 %v341, %v649
  %651 = vmatprep.mubr.bf16.mxu0 0
  %652 = vmatmul.mubr.bf16.gmra.mrb[0].mxu0 %v537
  %v653 = vpop.f32.mrb[0].mxu0
  %v654 = vadd.f32 %v345, %v653
  %v655 = vpop.f32.mrb[0].mxu0
  %v656 = vadd.f32 %v347, %v655
  %v657 = vpop.f32.mrb[0].mxu0
  %v658 = vadd.f32 %v349, %v657
  %v659 = vpop.f32.mrb[0].mxu0
  %v660 = vadd.f32 %v351, %v659
  %661 = vmatprep.mubr.bf16.mxu0 0
  %662 = vmatmul.mubr.bf16.gmra.mrb[0].mxu0 %v540
  %v663 = vpop.f32.mrb[0].mxu0
  %v664 = vadd.f32 %v355, %v663
  %v665 = vpop.f32.mrb[0].mxu0
  %v666 = vadd.f32 %v357, %v665
  %v667 = vpop.f32.mrb[0].mxu0
  %v668 = vadd.f32 %v359, %v667
  %v669 = vpop.f32.mrb[0].mxu0
  %v670 = vadd.f32 %v361, %v669
  %671 = vmatprep.mubr.bf16.mxu0 0
  %672 = vmatmul.mubr.bf16.gmra.mrb[0].mxu0 %v543
  %v673 = vpop.f32.mrb[0].mxu0
  %v674 = vadd.f32 %v365, %v673
  %v675 = vpop.f32.mrb[0].mxu0
  %v676 = vadd.f32 %v367, %v675
  %v677 = vpop.f32.mrb[0].mxu0
  %v678 = vadd.f32 %v369, %v677
  %v679 = vpop.f32.mrb[0].mxu0
  %v680 = vadd.f32 %v371, %v679
  %681 = vmatprep.mubr.bf16.mxu0 0
  %682 = vmatmul.mubr.bf16.gmra.mrb[0].mxu0 %v546
  %v683 = vpop.f32.mrb[0].mxu0
  %v684 = vadd.f32 %v375, %v683
  %v685 = vpop.f32.mrb[0].mxu0
  %v686 = vadd.f32 %v377, %v685
  %v687 = vpop.f32.mrb[0].mxu0
  %v688 = vadd.f32 %v379, %v687
  %v689 = vpop.f32.mrb[0].mxu0
  %v690 = vadd.f32 %v381, %v689
  %691 = vmatprep.mubr.bf16.mxu0 0
  %692 = vmatmul.mubr.bf16.gmra.mrb[0].mxu0 %v549
  %v693 = vpop.f32.mrb[0].mxu0
  %v694 = vadd.f32 %v385, %v693
  %v695 = vpop.f32.mrb[0].mxu0
  %v696 = vadd.f32 %v387, %v695
  %v697 = vpop.f32.mrb[0].mxu0
  %v698 = vadd.f32 %v389, %v697
  %v699 = vpop.f32.mrb[0].mxu0
  %v700 = vadd.f32 %v391, %v699
  %701 = vmatprep.mubr.bf16.mxu0 0
  %702 = vmatmul.mubr.bf16.gmra.mrb[0].mxu0 %v552
  %v703 = vpop.f32.mrb[0].mxu0
  %v704 = vadd.f32 %v395, %v703
  %v705 = vpop.f32.mrb[0].mxu0
  %v706 = vadd.f32 %v397, %v705
  %v707 = vpop.f32.mrb[0].mxu0
  %v708 = vadd.f32 %v399, %v707
  %v709 = vpop.f32.mrb[0].mxu0
  %v710 = vadd.f32 %v401, %v709
  %711 = vmatprep.mubr.bf16.mxu0 0
  %712 = vmatmul.mubr.bf16.gmra.mrb[0].mxu0 %v555
  %v713 = vpop.f32.mrb[0].mxu0
  %v714 = vadd.f32 %v405, %v713
  %v715 = vpop.f32.mrb[0].mxu0
  %v716 = vadd.f32 %v407, %v715
  %v717 = vpop.f32.mrb[0].mxu0
  %v718 = vadd.f32 %v409, %v717
  %v719 = vpop.f32.mrb[0].mxu0
  %v720 = vadd.f32 %v411, %v719
  %721 = vmatprep.mubr.bf16.mxu0 0
  %722 = vmatmul.mubr.bf16.gmra.mrb[0].mxu0 %v558
  %v723 = vpop.f32.mrb[0].mxu0
  %v724 = vadd.f32 %v415, %v723
  %v725 = vpop.f32.mrb[0].mxu0
  %v726 = vadd.f32 %v417, %v725
  %v727 = vpop.f32.mrb[0].mxu0
  %v728 = vadd.f32 %v419, %v727
  %v729 = vpop.f32.mrb[0].mxu0
  %v730 = vadd.f32 %v421, %v729
  %731 = vmatprep.mubr.bf16.mxu0 0
  %732 = vmatmul.mubr.bf16.gmra.mrb[0].mxu0 %v561
  %v733 = vpop.f32.mrb[0].mxu0
  %v734 = vadd.f32 %v425, %v733
  %v735 = vpop.f32.mrb[0].mxu0
  %v736 = vadd.f32 %v427, %v735
  %v737 = vpop.f32.mrb[0].mxu0
  %v738 = vadd.f32 %v429, %v737
  %v739 = vpop.f32.mrb[0].mxu0
  %v740 = vadd.f32 %v431, %v739
  %741 = vdwg.mxu0
  %s742 = scalar_lea.vmem %s1, 64
  %v743 = vld [vmem:[%s742] sm:$0xff]
  %v744 = vld [vmem:[%s742 + $0x8] sm:$0xff]
  %v745 = vld [vmem:[%s742 + $0x10] sm:$0xff]
  %v746 = vld [vmem:[%s742 + $0x18] sm:$0x33]
  %v775 = vunpack.c.l.b16 %v85
  %v776 = vunpack.c.l.b16 %v86
  %v777 = vunpack.c.l.b16 %v87
  %v778 = vunpack.c.l.b16 %v88
  %v779 = vunpack.c.l.b16 %v89
  %v780 = vunpack.c.l.b16 %v90
  %v781 = vunpack.c.l.b16 %v91
  %v782 = vunpack.c.l.b16 %v92
  %v783 = vunpack.c.l.b16 %v93
  %v784 = vunpack.c.l.b16 %v94
  %v785 = vunpack.c.l.b16 %v95
  %v786 = vunpack.c.l.b16 %v96
  %v787 = vunpack.c.l.b16 %v97
  %v788 = vunpack.c.l.b16 %v98
  %v789 = vunpack.c.l.b16 %v99
  %v790 = vunpack.c.l.b16 %v100
  %v791 = vunpack.c.l.b16 %v101
  %v792 = vunpack.c.l.b16 %v102
  %v793 = vunpack.c.l.b16 %v103
  %v794 = vunpack.c.l.b16 %v104
  %v795 = vunpack.c.l.b16 %v105
  %v796 = vunpack.c.l.b16 %v106
  %v797 = vunpack.c.l.b16 %v107
  %v798 = vunpack.c.l.b16 %v108
  %v799 = vunpack.c.l.b16 %v109
  %v800 = vunpack.c.l.b16 %v110
  %v801 = vunpack.c.l.b16 %v111
  %v802 = vunpack.c.l.b16 %v112
  %v803 = vpack.c.b16 %v776, %v775
  %v804 = vpack.c.b16 %v778, %v777
  %v805 = vpack.c.b16 %v780, %v779
  %v806 = vpack.c.b16 %v782, %v781
  %v807 = vpack.c.b16 %v784, %v783
  %v808 = vpack.c.b16 %v786, %v785
  %v809 = vpack.c.b16 %v788, %v787
  %v810 = vpack.c.b16 %v790, %v789
  %v811 = vpack.c.b16 %v792, %v791
  %v812 = vpack.c.b16 %v794, %v793
  %v813 = vpack.c.b16 %v796, %v795
  %v814 = vpack.c.b16 %v798, %v797
  %v815 = vpack.c.b16 %v800, %v799
  %v816 = vpack.c.b16 %v802, %v801
  %v821 = vunpack.c.l.b16 %v743
  %v822 = vunpack.c.h.b16 %v743
  %v823 = vunpack.c.l.b16 %v744
  %v824 = vunpack.c.h.b16 %v744
  %v825 = vunpack.c.l.b16 %v745
  %v826 = vunpack.c.h.b16 %v745
  %v827 = vunpack.c.l.b16 %v746
  %v828 = vunpack.c.h.b16 %v746
  %v829 = vpack.c.b16 %v823, %v821
  %v830 = vpack.c.b16 %v824, %v822
  %v831 = vpack.c.b16 %v827, %v825
  %v832 = vpack.c.b16 %v828, %v826
  %v836 = vsel %vm210, %v803, 0
  %v839 = vsel %vm210, %v804, 0
  %v842 = vsel %vm210, %v805, 0
  %v845 = vsel %vm210, %v806, 0
  %v848 = vsel %vm210, %v807, 0
  %v851 = vsel %vm210, %v808, 0
  %v854 = vsel %vm210, %v809, 0
  %v857 = vsel %vm210, %v810, 0
  %v860 = vsel %vm210, %v811, 0
  %v863 = vsel %vm210, %v812, 0
  %v866 = vsel %vm210, %v813, 0
  %v869 = vsel %vm210, %v814, 0
  %v872 = vsel %vm210, %v815, 0
  %v875 = vsel %vm210, %v816, 0
  %v878 = vsel %vm253, %v831, 0
  %v881 = vsel %vm253, %v832, 0
  %883 = vmatprep.subr.bf16.mxu0 %v830
  %884 = vmatpush1.bf16.msra.mxu0 %v829
  %885 = vmatprep.subr.bf16.mxu0 %v881
  %886 = vmatpush1.bf16.msra.mxu0 %v878
  %887 = vmatprep.subr.bf16.mxu0 0
  %888 = vmatpush1.bf16.msra.mxu0 0
  %889 = vmatprep.subr.bf16.mxu0 0
  %890 = vmatpush1.bf16.msra.mxu0 0
  %891 = vmatprep.subr.bf16.mxu0 0
  %892 = vmatpush1.bf16.msra.mxu0 0
  %893 = vmatprep.subr.bf16.mxu0 0
  %894 = vmatpush1.bf16.msra.mxu0 0
  %895 = vmatprep.subr.bf16.mxu0 0
  %896 = vmatpush1.bf16.msra.mxu0 0
  %897 = vmatprep.subr.bf16.mxu0 0
  %898 = vmatpush1.bf16.msra.mxu0 0
  %899 = vmatprep.subr.bf16.mxu0 0
  %900 = vmatpush1.bf16.msra.mxu0 0
  %901 = vmatprep.subr.bf16.mxu0 0
  %902 = vmatpush1.bf16.msra.mxu0 0
  %903 = vmatprep.subr.bf16.mxu0 0
  %904 = vmatpush1.bf16.msra.mxu0 0
  %905 = vmatprep.subr.bf16.mxu0 0
  %906 = vmatpush1.bf16.msra.mxu0 0
  %907 = vmatprep.subr.bf16.mxu0 0
  %908 = vmatpush1.bf16.msra.mxu0 0
  %909 = vmatprep.subr.bf16.mxu0 0
  %910 = vmatpush1.bf16.msra.mxu0 0
  %911 = vmatprep.subr.bf16.mxu0 0
  %912 = vmatpush1.bf16.msra.mxu0 0
  %913 = vmatprep.subr.bf16.mxu0 0
  %914 = vmatpush1.bf16.msra.mxu0 0
  %915 = vmatprep.mubr.bf16.mxu0 0
  %916 = vmatmul.mubr.bf16.gmra.mrb[0].mxu0 %v836
  %v917 = vpop.f32.mrb[0].mxu0
  %v918 = vadd.f32 0.0, %v917
  %v919 = vpop.f32.mrb[0].mxu0
  %v920 = vadd.f32 0.0, %v919
  %v921 = vpop.f32.mrb[0].mxu0
  %v922 = vadd.f32 0.0, %v921
  %v923 = vpop.f32.mrb[0].mxu0
  %v924 = vadd.f32 0.0, %v923
  %925 = vmatprep.mubr.bf16.mxu0 0
  %926 = vmatmul.mubr.bf16.gmra.mrb[0].mxu0 %v839
  %v927 = vpop.f32.mrb[0].mxu0
  %v928 = vadd.f32 0.0, %v927
  %v929 = vpop.f32.mrb[0].mxu0
  %v930 = vadd.f32 0.0, %v929
  %v931 = vpop.f32.mrb[0].mxu0
  %v932 = vadd.f32 0.0, %v931
  %v933 = vpop.f32.mrb[0].mxu0
  %v934 = vadd.f32 0.0, %v933
  %935 = vmatprep.mubr.bf16.mxu0 0
  %936 = vmatmul.mubr.bf16.gmra.mrb[0].mxu0 %v842
  %v937 = vpop.f32.mrb[0].mxu0
  %v938 = vadd.f32 0.0, %v937
  %v939 = vpop.f32.mrb[0].mxu0
  %v940 = vadd.f32 0.0, %v939
  %v941 = vpop.f32.mrb[0].mxu0
  %v942 = vadd.f32 0.0, %v941
  %v943 = vpop.f32.mrb[0].mxu0
  %v944 = vadd.f32 0.0, %v943
  %945 = vmatprep.mubr.bf16.mxu0 0
  %946 = vmatmul.mubr.bf16.gmra.mrb[0].mxu0 %v845
  %v947 = vpop.f32.mrb[0].mxu0
  %v948 = vadd.f32 0.0, %v947
  %v949 = vpop.f32.mrb[0].mxu0
  %v950 = vadd.f32 0.0, %v949
  %v951 = vpop.f32.mrb[0].mxu0
  %v952 = vadd.f32 0.0, %v951
  %v953 = vpop.f32.mrb[0].mxu0
  %v954 = vadd.f32 0.0, %v953
  %955 = vmatprep.mubr.bf16.mxu0 0
  %956 = vmatmul.mubr.bf16.gmra.mrb[0].mxu0 %v848
  %v957 = vpop.f32.mrb[0].mxu0
  %v958 = vadd.f32 0.0, %v957
  %v959 = vpop.f32.mrb[0].mxu0
  %v960 = vadd.f32 0.0, %v959
  %v961 = vpop.f32.mrb[0].mxu0
  %v962 = vadd.f32 0.0, %v961
  %v963 = vpop.f32.mrb[0].mxu0
  %v964 = vadd.f32 0.0, %v963
  %965 = vmatprep.mubr.bf16.mxu0 0
  %966 = vmatmul.mubr.bf16.gmra.mrb[0].mxu0 %v851
  %v967 = vpop.f32.mrb[0].mxu0
  %v968 = vadd.f32 0.0, %v967
  %v969 = vpop.f32.mrb[0].mxu0
  %v970 = vadd.f32 0.0, %v969
  %v971 = vpop.f32.mrb[0].mxu0
  %v972 = vadd.f32 0.0, %v971
  %v973 = vpop.f32.mrb[0].mxu0
  %v974 = vadd.f32 0.0, %v973
  %975 = vmatprep.mubr.bf16.mxu0 0
  %976 = vmatmul.mubr.bf16.gmra.mrb[0].mxu0 %v854
  %v977 = vpop.f32.mrb[0].mxu0
  %v978 = vadd.f32 0.0, %v977
  %v979 = vpop.f32.mrb[0].mxu0
  %v980 = vadd.f32 0.0, %v979
  %v981 = vpop.f32.mrb[0].mxu0
  %v982 = vadd.f32 0.0, %v981
  %v983 = vpop.f32.mrb[0].mxu0
  %v984 = vadd.f32 0.0, %v983
  %985 = vmatprep.mubr.bf16.mxu0 0
  %986 = vmatmul.mubr.bf16.gmra.mrb[0].mxu0 %v857
  %v987 = vpop.f32.mrb[0].mxu0
  %v988 = vadd.f32 0.0, %v987
  %v989 = vpop.f32.mrb[0].mxu0
  %v990 = vadd.f32 0.0, %v989
  %v991 = vpop.f32.mrb[0].mxu0
  %v992 = vadd.f32 0.0, %v991
  %v993 = vpop.f32.mrb[0].mxu0
  %v994 = vadd.f32 0.0, %v993
  %995 = vmatprep.mubr.bf16.mxu0 0
  %996 = vmatmul.mubr.bf16.gmra.mrb[0].mxu0 %v860
  %v997 = vpop.f32.mrb[0].mxu0
  %v998 = vadd.f32 0.0, %v997
  %v999 = vpop.f32.mrb[0].mxu0
  %v1000 = vadd.f32 0.0, %v999
  %v1001 = vpop.f32.mrb[0].mxu0
  %v1002 = vadd.f32 0.0, %v1001
  %v1003 = vpop.f32.mrb[0].mxu0
  %v1004 = vadd.f32 0.0, %v1003
  %1005 = vmatprep.mubr.bf16.mxu0 0
  %1006 = vmatmul.mubr.bf16.gmra.mrb[0].mxu0 %v863
  %v1007 = vpop.f32.mrb[0].mxu0
  %v1008 = vadd.f32 0.0, %v1007
  %v1009 = vpop.f32.mrb[0].mxu0
  %v1010 = vadd.f32 0.0, %v1009
  %v1011 = vpop.f32.mrb[0].mxu0
  %v1012 = vadd.f32 0.0, %v1011
  %v1013 = vpop.f32.mrb[0].mxu0
  %v1014 = vadd.f32 0.0, %v1013
  %1015 = vmatprep.mubr.bf16.mxu0 0
  %1016 = vmatmul.mubr.bf16.gmra.mrb[0].mxu0 %v866
  %v1017 = vpop.f32.mrb[0].mxu0
  %v1018 = vadd.f32 0.0, %v1017
  %v1019 = vpop.f32.mrb[0].mxu0
  %v1020 = vadd.f32 0.0, %v1019
  %v1021 = vpop.f32.mrb[0].mxu0
  %v1022 = vadd.f32 0.0, %v1021
  %v1023 = vpop.f32.mrb[0].mxu0
  %v1024 = vadd.f32 0.0, %v1023
  %1025 = vmatprep.mubr.bf16.mxu0 0
  %1026 = vmatmul.mubr.bf16.gmra.mrb[0].mxu0 %v869
  %v1027 = vpop.f32.mrb[0].mxu0
  %v1028 = vadd.f32 0.0, %v1027
  %v1029 = vpop.f32.mrb[0].mxu0
  %v1030 = vadd.f32 0.0, %v1029
  %v1031 = vpop.f32.mrb[0].mxu0
  %v1032 = vadd.f32 0.0, %v1031
  %v1033 = vpop.f32.mrb[0].mxu0
  %v1034 = vadd.f32 0.0, %v1033
  %1035 = vmatprep.mubr.bf16.mxu0 0
  %1036 = vmatmul.mubr.bf16.gmra.mrb[0].mxu0 %v872
  %v1037 = vpop.f32.mrb[0].mxu0
  %v1038 = vadd.f32 0.0, %v1037
  %v1039 = vpop.f32.mrb[0].mxu0
  %v1040 = vadd.f32 0.0, %v1039
  %v1041 = vpop.f32.mrb[0].mxu0
  %v1042 = vadd.f32 0.0, %v1041
  %v1043 = vpop.f32.mrb[0].mxu0
  %v1044 = vadd.f32 0.0, %v1043
  %1045 = vmatprep.mubr.bf16.mxu0 0
  %1046 = vmatmul.mubr.bf16.gmra.mrb[0].mxu0 %v875
  %v1047 = vpop.f32.mrb[0].mxu0
  %v1048 = vadd.f32 0.0, %v1047
  %v1049 = vpop.f32.mrb[0].mxu0
  %v1050 = vadd.f32 0.0, %v1049
  %v1051 = vpop.f32.mrb[0].mxu0
  %v1052 = vadd.f32 0.0, %v1051
  %v1053 = vpop.f32.mrb[0].mxu0
  %v1054 = vadd.f32 0.0, %v1053
  %1055 = vdwg.mxu0
  %v1056 = vadd.f32 %v604, %v918
  %v1057 = vadd.f32 %v606, %v920
  %v1058 = vadd.f32 %v608, %v922
  %v1059 = vadd.f32 %v610, %v924
  %v1060 = vadd.f32 %v614, %v928
  %v1061 = vadd.f32 %v616, %v930
  %v1062 = vadd.f32 %v618, %v932
  %v1063 = vadd.f32 %v620, %v934
  %v1064 = vadd.f32 %v624, %v938
  %v1065 = vadd.f32 %v626, %v940
  %v1066 = vadd.f32 %v628, %v942
  %v1067 = vadd.f32 %v630, %v944
  %v1068 = vadd.f32 %v634, %v948
  %v1069 = vadd.f32 %v636, %v950
  %v1070 = vadd.f32 %v638, %v952
  %v1071 = vadd.f32 %v640, %v954
  %v1072 = vadd.f32 %v644, %v958
  %v1073 = vadd.f32 %v646, %v960
  %v1074 = vadd.f32 %v648, %v962
  %v1075 = vadd.f32 %v650, %v964
  %v1076 = vadd.f32 %v654, %v968
  %v1077 = vadd.f32 %v656, %v970
  %v1078 = vadd.f32 %v658, %v972
  %v1079 = vadd.f32 %v660, %v974
  %v1080 = vadd.f32 %v664, %v978
  %v1081 = vadd.f32 %v666, %v980
  %v1082 = vadd.f32 %v668, %v982
  %v1083 = vadd.f32 %v670, %v984
  %v1084 = vadd.f32 %v674, %v988
  %v1085 = vadd.f32 %v676, %v990
  %v1086 = vadd.f32 %v678, %v992
  %v1087 = vadd.f32 %v680, %v994
  %v1088 = vadd.f32 %v684, %v998
  %v1089 = vadd.f32 %v686, %v1000
  %v1090 = vadd.f32 %v688, %v1002
  %v1091 = vadd.f32 %v690, %v1004
  %v1092 = vadd.f32 %v694, %v1008
  %v1093 = vadd.f32 %v696, %v1010
  %v1094 = vadd.f32 %v698, %v1012
  %v1095 = vadd.f32 %v700, %v1014
  %v1096 = vadd.f32 %v704, %v1018
  %v1097 = vadd.f32 %v706, %v1020
  %v1098 = vadd.f32 %v708, %v1022
  %v1099 = vadd.f32 %v710, %v1024
  %v1100 = vadd.f32 %v714, %v1028
  %v1101 = vadd.f32 %v716, %v1030
  %v1102 = vadd.f32 %v718, %v1032
  %v1103 = vadd.f32 %v720, %v1034
  %v1104 = vadd.f32 %v724, %v1038
  %v1105 = vadd.f32 %v726, %v1040
  %v1106 = vadd.f32 %v728, %v1042
  %v1107 = vadd.f32 %v730, %v1044
  %v1108 = vadd.f32 %v734, %v1048
  %v1109 = vadd.f32 %v736, %v1050
  %v1110 = vadd.f32 %v738, %v1052
  %v1111 = vadd.f32 %v740, %v1054
  %v1112 = vld [vmem:[%s2] sm:$0x3]
  %v1114 = vlaneseq
  %v1115 = vshrl.u32 %v1114, 7
  %v1116 = vsub.s32 0, %v1115
  %v1117 = vrot.slane %v1112, %v1116
  %v1118 = vlaneseq
  %v1119 = vshrl.u32 %v1118, 7
  %v1120 = vsub.s32 1, %v1119
  %v1121 = vrot.slane %v1112, %v1120
  %v1124 = vadd.f32 %v1056, %v1117
  %v1125 = vadd.f32 %v1057, %v1121
  %v1126 = vadd.f32 %v1058, %v1117
  %v1127 = vadd.f32 %v1059, %v1121
  %v1128 = vadd.f32 %v1060, %v1117
  %v1129 = vadd.f32 %v1061, %v1121
  %v1130 = vadd.f32 %v1062, %v1117
  %v1131 = vadd.f32 %v1063, %v1121
  %v1132 = vadd.f32 %v1064, %v1117
  %v1133 = vadd.f32 %v1065, %v1121
  %v1134 = vadd.f32 %v1066, %v1117
  %v1135 = vadd.f32 %v1067, %v1121
  %v1136 = vadd.f32 %v1068, %v1117
  %v1137 = vadd.f32 %v1069, %v1121
  %v1138 = vadd.f32 %v1070, %v1117
  %v1139 = vadd.f32 %v1071, %v1121
  %v1140 = vadd.f32 %v1072, %v1117
  %v1141 = vadd.f32 %v1073, %v1121
  %v1142 = vadd.f32 %v1074, %v1117
  %v1143 = vadd.f32 %v1075, %v1121
  %v1144 = vadd.f32 %v1076, %v1117
  %v1145 = vadd.f32 %v1077, %v1121
  %v1146 = vadd.f32 %v1078, %v1117
  %v1147 = vadd.f32 %v1079, %v1121
  %v1148 = vadd.f32 %v1080, %v1117
  %v1149 = vadd.f32 %v1081, %v1121
  %v1150 = vadd.f32 %v1082, %v1117
  %v1151 = vadd.f32 %v1083, %v1121
  %v1152 = vadd.f32 %v1084, %v1117
  %v1153 = vadd.f32 %v1085, %v1121
  %v1154 = vadd.f32 %v1086, %v1117
  %v1155 = vadd.f32 %v1087, %v1121
  %v1156 = vadd.f32 %v1088, %v1117
  %v1157 = vadd.f32 %v1089, %v1121
  %v1158 = vadd.f32 %v1090, %v1117
  %v1159 = vadd.f32 %v1091, %v1121
  %v1160 = vadd.f32 %v1092, %v1117
  %v1161 = vadd.f32 %v1093, %v1121
  %v1162 = vadd.f32 %v1094, %v1117
  %v1163 = vadd.f32 %v1095, %v1121
  %v1164 = vadd.f32 %v1096, %v1117
  %v1165 = vadd.f32 %v1097, %v1121
  %v1166 = vadd.f32 %v1098, %v1117
  %v1167 = vadd.f32 %v1099, %v1121
  %v1168 = vadd.f32 %v1100, %v1117
  %v1169 = vadd.f32 %v1101, %v1121
  %v1170 = vadd.f32 %v1102, %v1117
  %v1171 = vadd.f32 %v1103, %v1121
  %v1172 = vadd.f32 %v1104, %v1117
  %v1173 = vadd.f32 %v1105, %v1121
  %v1174 = vadd.f32 %v1106, %v1117
  %v1175 = vadd.f32 %v1107, %v1121
  %v1176 = vadd.f32 %v1108, %v1117
  %v1177 = vadd.f32 %v1109, %v1121
  %v1178 = vadd.f32 %v1110, %v1117
  %v1179 = vadd.f32 %v1111, %v1121
  %v1180 = vmax.f32 %v1124, 0.0
  %v1181 = vmax.f32 %v1125, 0.0
  %v1182 = vmax.f32 %v1126, 0.0
  %v1183 = vmax.f32 %v1127, 0.0
  %v1184 = vmax.f32 %v1128, 0.0
  %v1185 = vmax.f32 %v1129, 0.0
  %v1186 = vmax.f32 %v1130, 0.0
  %v1187 = vmax.f32 %v1131, 0.0
  %v1188 = vmax.f32 %v1132, 0.0
  %v1189 = vmax.f32 %v1133, 0.0
  %v1190 = vmax.f32 %v1134, 0.0
  %v1191 = vmax.f32 %v1135, 0.0
  %v1192 = vmax.f32 %v1136, 0.0
  %v1193 = vmax.f32 %v1137, 0.0
  %v1194 = vmax.f32 %v1138, 0.0
  %v1195 = vmax.f32 %v1139, 0.0
  %v1196 = vmax.f32 %v1140, 0.0
  %v1197 = vmax.f32 %v1141, 0.0
  %v1198 = vmax.f32 %v1142, 0.0
  %v1199 = vmax.f32 %v1143, 0.0
  %v1200 = vmax.f32 %v1144, 0.0
  %v1201 = vmax.f32 %v1145, 0.0
  %v1202 = vmax.f32 %v1146, 0.0
  %v1203 = vmax.f32 %v1147, 0.0
  %v1204 = vmax.f32 %v1148, 0.0
  %v1205 = vmax.f32 %v1149, 0.0
  %v1206 = vmax.f32 %v1150, 0.0
  %v1207 = vmax.f32 %v1151, 0.0
  %v1208 = vmax.f32 %v1152, 0.0
  %v1209 = vmax.f32 %v1153, 0.0
  %v1210 = vmax.f32 %v1154, 0.0
  %v1211 = vmax.f32 %v1155, 0.0
  %v1212 = vmax.f32 %v1156, 0.0
  %v1213 = vmax.f32 %v1157, 0.0
  %v1214 = vmax.f32 %v1158, 0.0
  %v1215 = vmax.f32 %v1159, 0.0
  %v1216 = vmax.f32 %v1160, 0.0
  %v1217 = vmax.f32 %v1161, 0.0
  %v1218 = vmax.f32 %v1162, 0.0
  %v1219 = vmax.f32 %v1163, 0.0
  %v1220 = vmax.f32 %v1164, 0.0
  %v1221 = vmax.f32 %v1165, 0.0
  %v1222 = vmax.f32 %v1166, 0.0
  %v1223 = vmax.f32 %v1167, 0.0
  %v1224 = vmax.f32 %v1168, 0.0
  %v1225 = vmax.f32 %v1169, 0.0
  %v1226 = vmax.f32 %v1170, 0.0
  %v1227 = vmax.f32 %v1171, 0.0
  %v1228 = vmax.f32 %v1172, 0.0
  %v1229 = vmax.f32 %v1173, 0.0
  %v1230 = vmax.f32 %v1174, 0.0
  %v1231 = vmax.f32 %v1175, 0.0
  %v1232 = vmax.f32 %v1176, 0.0
  %v1233 = vmax.f32 %v1177, 0.0
  %v1234 = vmax.f32 %v1178, 0.0
  %v1235 = vmax.f32 %v1179, 0.0
  %v1236 = vpack.c.bf16 %v1182, %v1180
  %v1237 = vpack.c.bf16 %v1183, %v1181
  %v1238 = vpack.c.bf16 %v1186, %v1184
  %v1239 = vpack.c.bf16 %v1187, %v1185
  %v1240 = vpack.c.bf16 %v1190, %v1188
  %v1241 = vpack.c.bf16 %v1191, %v1189
  %v1242 = vpack.c.bf16 %v1194, %v1192
  %v1243 = vpack.c.bf16 %v1195, %v1193
  %v1244 = vpack.c.bf16 %v1198, %v1196
  %v1245 = vpack.c.bf16 %v1199, %v1197
  %v1246 = vpack.c.bf16 %v1202, %v1200
  %v1247 = vpack.c.bf16 %v1203, %v1201
  %v1248 = vpack.c.bf16 %v1206, %v1204
  %v1249 = vpack.c.bf16 %v1207, %v1205
  %v1250 = vpack.c.bf16 %v1210, %v1208
  %v1251 = vpack.c.bf16 %v1211, %v1209
  %v1252 = vpack.c.bf16 %v1214, %v1212
  %v1253 = vpack.c.bf16 %v1215, %v1213
  %v1254 = vpack.c.bf16 %v1218, %v1216
  %v1255 = vpack.c.bf16 %v1219, %v1217
  %v1256 = vpack.c.bf16 %v1222, %v1220
  %v1257 = vpack.c.bf16 %v1223, %v1221
  %v1258 = vpack.c.bf16 %v1226, %v1224
  %v1259 = vpack.c.bf16 %v1227, %v1225
  %v1260 = vpack.c.bf16 %v1230, %v1228
  %v1261 = vpack.c.bf16 %v1231, %v1229
  %v1262 = vpack.c.bf16 %v1234, %v1232
  %v1263 = vpack.c.bf16 %v1235, %v1233
  %1264 = vst [vmem:[#allocation2] sm:$0xff] 0
  %vm1265 = vcmask 785408
  %1266 = vst.msk [vmem:[#allocation2 + $0x8] sm:$0xff] %vm1265, 0
  %s1267 = scalar_lea.vmem [#allocation2], 128
  %1268 = vst [vmem:[%s1267] sm:$0xff] %v1236
  %1269 = vst.msk [vmem:[%s1267 + $0x8] sm:$0xff] %vm1265, %v1237
  %s1270 = scalar_lea.vmem [#allocation2], 16
  %1271 = vst [vmem:[%s1270] sm:$0xff] %v1238
  %1272 = vst.msk [vmem:[%s1270 + $0x8] sm:$0xff] %vm1265, %v1239
  %s1273 = scalar_lea.vmem [#allocation2], 144
  %1274 = vst [vmem:[%s1273] sm:$0xff] %v1240
  %1275 = vst.msk [vmem:[%s1273 + $0x8] sm:$0xff] %vm1265, %v1241
  %s1276 = scalar_lea.vmem [#allocation2], 32
  %1277 = vst [vmem:[%s1276] sm:$0xff] %v1242
  %1278 = vst.msk [vmem:[%s1276 + $0x8] sm:$0xff] %vm1265, %v1243
  %s1279 = scalar_lea.vmem [#allocation2], 160
  %1280 = vst [vmem:[%s1279] sm:$0xff] %v1244
  %1281 = vst.msk [vmem:[%s1279 + $0x8] sm:$0xff] %vm1265, %v1245
  %s1282 = scalar_lea.vmem [#allocation2], 48
  %1283 = vst [vmem:[%s1282] sm:$0xff] %v1246
  %1284 = vst.msk [vmem:[%s1282 + $0x8] sm:$0xff] %vm1265, %v1247
  %s1285 = scalar_lea.vmem [#allocation2], 176
  %1286 = vst [vmem:[%s1285] sm:$0xff] %v1248
  %1287 = vst.msk [vmem:[%s1285 + $0x8] sm:$0xff] %vm1265, %v1249
  %s1288 = scalar_lea.vmem [#allocation2], 64
  %1289 = vst [vmem:[%s1288] sm:$0xff] %v1250
  %1290 = vst.msk [vmem:[%s1288 + $0x8] sm:$0xff] %vm1265, %v1251
  %s1291 = scalar_lea.vmem [#allocation2], 192
  %1292 = vst [vmem:[%s1291] sm:$0xff] %v1252
  %1293 = vst.msk [vmem:[%s1291 + $0x8] sm:$0xff] %vm1265, %v1253
  %s1294 = scalar_lea.vmem [#allocation2], 80
  %1295 = vst [vmem:[%s1294] sm:$0xff] %v1254
  %1296 = vst.msk [vmem:[%s1294 + $0x8] sm:$0xff] %vm1265, %v1255
  %s1297 = scalar_lea.vmem [#allocation2], 208
  %1298 = vst [vmem:[%s1297] sm:$0xff] %v1256
  %1299 = vst.msk [vmem:[%s1297 + $0x8] sm:$0xff] %vm1265, %v1257
  %s1300 = scalar_lea.vmem [#allocation2], 96
  %1301 = vst [vmem:[%s1300] sm:$0xff] %v1258
  %1302 = vst.msk [vmem:[%s1300 + $0x8] sm:$0xff] %vm1265, %v1259
  %s1303 = scalar_lea.vmem [#allocation2], 224
  %1304 = vst [vmem:[%s1303] sm:$0xff] %v1260
  %1305 = vst.msk [vmem:[%s1303 + $0x8] sm:$0xff] %vm1265, %v1261
  %s1306 = scalar_lea.vmem [#allocation2], 112
  %1307 = vst [vmem:[%s1306] sm:$0xff] %v1262
  %1308 = vst.msk [vmem:[%s1306 + $0x8] sm:$0xff] %vm1265, %v1263
  %v1309 = vld [vmem:[#allocation2] sm:$0xff]
  %v1310 = vld [vmem:[#allocation2 + $0x8] sm:$0xff]
  %v1311 = vld [vmem:[#allocation2 + $0x10] sm:$0xff]
  %v1312 = vld [vmem:[#allocation2 + $0x18] sm:$0xff]
  %v1313 = vld [vmem:[#allocation2 + $0x20] sm:$0xff]
  %v1314 = vld [vmem:[#allocation2 + $0x28] sm:$0xff]
  %v1315 = vld [vmem:[#allocation2 + $0x30] sm:$0xff]
  %v1316 = vld [vmem:[#allocation2 + $0x38] sm:$0xff]
  %v1317 = vld [vmem:[#allocation2 + $0x40] sm:$0xff]
  %v1318 = vld [vmem:[#allocation2 + $0x48] sm:$0xff]
  %v1319 = vld [vmem:[#allocation2 + $0x50] sm:$0xff]
  %v1320 = vld [vmem:[#allocation2 + $0x58] sm:$0xff]
  %v1321 = vld [vmem:[#allocation2 + $0x60] sm:$0xff]
  %v1322 = vld [vmem:[#allocation2 + $0x68] sm:$0xff]
  %v1323 = vld [vmem:[%s1267] sm:$0xff]
  %v1324 = vld [vmem:[%s1267 + $0x8] sm:$0xff]
  %v1325 = vld [vmem:[%s1267 + $0x10] sm:$0xff]
  %v1326 = vld [vmem:[%s1267 + $0x18] sm:$0xff]
  %v1327 = vld [vmem:[%s1267 + $0x20] sm:$0xff]
  %v1328 = vld [vmem:[%s1267 + $0x28] sm:$0xff]
  %v1329 = vld [vmem:[%s1267 + $0x30] sm:$0xff]
  %v1330 = vld [vmem:[%s1267 + $0x38] sm:$0xff]
  %v1331 = vld [vmem:[%s1267 + $0x40] sm:$0xff]
  %v1332 = vld [vmem:[%s1267 + $0x48] sm:$0xff]
  %v1333 = vld [vmem:[%s1267 + $0x50] sm:$0xff]
  %v1334 = vld [vmem:[%s1267 + $0x58] sm:$0xff]
  %v1335 = vld [vmem:[%s1267 + $0x60] sm:$0xff]
  %v1336 = vld [vmem:[%s1267 + $0x68] sm:$0xff]
  %v1337 = vld [vmem:[%s1270] sm:$0xff]
  %v1338 = vld [vmem:[%s1270 + $0x8] sm:$0xff]
  %v1339 = vld [vmem:[%s1270 + $0x10] sm:$0xff]
  %v1340 = vld [vmem:[%s1270 + $0x18] sm:$0xff]
  %v1341 = vld [vmem:[%s1270 + $0x20] sm:$0xff]
  %v1342 = vld [vmem:[%s1270 + $0x28] sm:$0xff]
  %v1343 = vld [vmem:[%s1270 + $0x30] sm:$0xff]
  %v1344 = vld [vmem:[%s1270 + $0x38] sm:$0xff]
  %v1345 = vld [vmem:[%s1270 + $0x40] sm:$0xff]
  %v1346 = vld [vmem:[%s1270 + $0x48] sm:$0xff]
  %v1347 = vld [vmem:[%s1270 + $0x50] sm:$0xff]
  %v1348 = vld [vmem:[%s1270 + $0x58] sm:$0xff]
  %v1349 = vld [vmem:[%s1270 + $0x60] sm:$0xff]
  %v1350 = vld [vmem:[%s1270 + $0x68] sm:$0xff]
  %v1351 = vld [vmem:[%s3] sm:$0xf]
  %v1352 = vld [vmem:[%s3 + $0x4] sm:$0xf]
  %v1353 = vld [vmem:[%s3 + $0x8] sm:$0xf]
  %v1354 = vld [vmem:[%s3 + $0xc] sm:$0xf]
  %v1355 = vld [vmem:[%s3 + $0x10] sm:$0xf]
  %v1356 = vld [vmem:[%s3 + $0x14] sm:$0xf]
  %v1357 = vld [vmem:[%s3 + $0x18] sm:$0xf]
  %v1358 = vld [vmem:[%s3 + $0x1c] sm:$0xf]
  %v1359 = vld [vmem:[%s3 + $0x20] sm:$0xf]
  %v1360 = vld [vmem:[%s3 + $0x24] sm:$0xf]
  %v1361 = vld [vmem:[%s3 + $0x28] sm:$0xf]
  %v1362 = vld [vmem:[%s3 + $0x2c] sm:$0xf]
  %v1363 = vld [vmem:[%s3 + $0x30] sm:$0xf]
  %v1364 = vld [vmem:[%s3 + $0x34] sm:$0xf]
  %v1365 = vld [vmem:[%s3 + $0x38] sm:$0xf]
  %v1366 = vld [vmem:[%s3 + $0x3c] sm:$0xf]
  %v1367 = vld [vmem:[%s3 + $0x40] sm:$0xf]
  %v1368 = vld [vmem:[%s3 + $0x44] sm:$0xf]
  %v1369 = vld [vmem:[%s3 + $0x48] sm:$0xf]
  %v1370 = vld [vmem:[%s3 + $0x4c] sm:$0xf]
  %v1371 = vld [vmem:[%s3 + $0x50] sm:$0xf]
  %v1372 = vld [vmem:[%s3 + $0x54] sm:$0xf]
  %v1373 = vld [vmem:[%s3 + $0x58] sm:$0xf]
  %v1374 = vld [vmem:[%s3 + $0x5c] sm:$0xf]
  %v1375 = vld [vmem:[%s3 + $0x60] sm:$0xf]
  %v1376 = vld [vmem:[%s3 + $0x64] sm:$0xf]
  %v1377 = vld [vmem:[%s3 + $0x68] sm:$0xf]
  %v1378 = vld [vmem:[%s3 + $0x6c] sm:$0xf]
  %s1379 = scalar_lea.vmem %s3, 112
  %v1380 = vld [vmem:[%s1379] sm:$0xf]
  %v1381 = vld [vmem:[%s1379 + $0x4] sm:$0xf]
  %v1382 = vld [vmem:[%s1379 + $0x8] sm:$0xf]
  %v1383 = vld [vmem:[%s1379 + $0xc] sm:$0xf]
  %v1384 = vld [vmem:[%s1379 + $0x10] sm:$0xf]
  %v1385 = vld [vmem:[%s1379 + $0x14] sm:$0xf]
  %v1386 = vld [vmem:[%s1379 + $0x18] sm:$0xf]
  %v1387 = vld [vmem:[%s1379 + $0x1c] sm:$0xf]
  %v1388 = vld [vmem:[%s1379 + $0x20] sm:$0xf]
  %v1389 = vld [vmem:[%s1379 + $0x24] sm:$0xf]
  %v1390 = vld [vmem:[%s1379 + $0x28] sm:$0xf]
  %v1391 = vld [vmem:[%s1379 + $0x2c] sm:$0xf]
  %v1392 = vld [vmem:[%s1379 + $0x30] sm:$0xf]
  %v1393 = vld [vmem:[%s1379 + $0x34] sm:$0xf]
  %v1394 = vld [vmem:[%s1379 + $0x38] sm:$0xf]
  %v1395 = vld [vmem:[%s1379 + $0x3c] sm:$0xf]
  %v1396 = vld [vmem:[%s1379 + $0x40] sm:$0xf]
  %v1397 = vld [vmem:[%s1379 + $0x44] sm:$0xf]
  %v1398 = vld [vmem:[%s1379 + $0x48] sm:$0xf]
  %v1399 = vld [vmem:[%s1379 + $0x4c] sm:$0xf]
  %v1400 = vld [vmem:[%s1379 + $0x50] sm:$0xf]
  %v1401 = vld [vmem:[%s1379 + $0x54] sm:$0xf]
  %v1402 = vld [vmem:[%s1379 + $0x58] sm:$0xf]
  %v1403 = vld [vmem:[%s1379 + $0x5c] sm:$0xf]
  %v1404 = vld [vmem:[%s1379 + $0x60] sm:$0xf]
  %v1405 = vld [vmem:[%s1379 + $0x64] sm:$0xf]
  %v1406 = vld [vmem:[%s1379 + $0x68] sm:$0xf]
  %v1407 = vld [vmem:[%s1379 + $0x6c] sm:$0xf]
  %v1436 = vunpack.c.l.b16 %v1380
  %v1437 = vunpack.c.l.b16 %v1381
  %v1438 = vunpack.c.l.b16 %v1382
  %v1439 = vunpack.c.l.b16 %v1383
  %v1440 = vunpack.c.l.b16 %v1384
  %v1441 = vunpack.c.l.b16 %v1385
  %v1442 = vunpack.c.l.b16 %v1386
  %v1443 = vunpack.c.l.b16 %v1387
  %v1444 = vunpack.c.l.b16 %v1388
  %v1445 = vunpack.c.l.b16 %v1389
  %v1446 = vunpack.c.l.b16 %v1390
  %v1447 = vunpack.c.l.b16 %v1391
  %v1448 = vunpack.c.l.b16 %v1392
  %v1449 = vunpack.c.l.b16 %v1393
  %v1450 = vunpack.c.l.b16 %v1394
  %v1451 = vunpack.c.l.b16 %v1395
  %v1452 = vunpack.c.l.b16 %v1396
  %v1453 = vunpack.c.l.b16 %v1397
  %v1454 = vunpack.c.l.b16 %v1398
  %v1455 = vunpack.c.l.b16 %v1399
  %v1456 = vunpack.c.l.b16 %v1400
  %v1457 = vunpack.c.l.b16 %v1401
  %v1458 = vunpack.c.l.b16 %v1402
  %v1459 = vunpack.c.l.b16 %v1403
  %v1460 = vunpack.c.l.b16 %v1404
  %v1461 = vunpack.c.l.b16 %v1405
  %v1462 = vunpack.c.l.b16 %v1406
  %v1463 = vunpack.c.l.b16 %v1407
  %v1464 = vpack.c.b16 %v1437, %v1436
  %v1465 = vpack.c.b16 %v1439, %v1438
  %v1466 = vpack.c.b16 %v1441, %v1440
  %v1467 = vpack.c.b16 %v1443, %v1442
  %v1468 = vpack.c.b16 %v1445, %v1444
  %v1469 = vpack.c.b16 %v1447, %v1446
  %v1470 = vpack.c.b16 %v1449, %v1448
  %v1471 = vpack.c.b16 %v1451, %v1450
  %v1472 = vpack.c.b16 %v1453, %v1452
  %v1473 = vpack.c.b16 %v1455, %v1454
  %v1474 = vpack.c.b16 %v1457, %v1456
  %v1475 = vpack.c.b16 %v1459, %v1458
  %v1476 = vpack.c.b16 %v1461, %v1460
  %v1477 = vpack.c.b16 %v1463, %v1462
  %v1493 = vsel %vm1265, %v1324, 0
  %v1496 = vsel %vm1265, %v1326, 0
  %v1499 = vsel %vm1265, %v1328, 0
  %v1502 = vsel %vm1265, %v1330, 0
  %v1505 = vsel %vm1265, %v1332, 0
  %v1508 = vsel %vm1265, %v1334, 0
  %v1511 = vsel %vm1265, %v1336, 0
  %1513 = vmatprep.subr.bf16.mxu0 0
  %1514 = vmatpush1.bf16.msra.mxu0 %v1464
  %1515 = vmatprep.subr.bf16.mxu0 0
  %1516 = vmatpush1.bf16.msra.mxu0 %v1465
  %1517 = vmatprep.subr.bf16.mxu0 0
  %1518 = vmatpush1.bf16.msra.mxu0 %v1466
  %1519 = vmatprep.subr.bf16.mxu0 0
  %1520 = vmatpush1.bf16.msra.mxu0 %v1467
  %1521 = vmatprep.subr.bf16.mxu0 0
  %1522 = vmatpush1.bf16.msra.mxu0 %v1468
  %1523 = vmatprep.subr.bf16.mxu0 0
  %1524 = vmatpush1.bf16.msra.mxu0 %v1469
  %1525 = vmatprep.subr.bf16.mxu0 0
  %1526 = vmatpush1.bf16.msra.mxu0 %v1470
  %1527 = vmatprep.subr.bf16.mxu0 0
  %1528 = vmatpush1.bf16.msra.mxu0 %v1471
  %1529 = vmatprep.subr.bf16.mxu0 0
  %1530 = vmatpush1.bf16.msra.mxu0 %v1472
  %1531 = vmatprep.subr.bf16.mxu0 0
  %1532 = vmatpush1.bf16.msra.mxu0 %v1473
  %1533 = vmatprep.subr.bf16.mxu0 0
  %1534 = vmatpush1.bf16.msra.mxu0 %v1474
  %1535 = vmatprep.subr.bf16.mxu0 0
  %1536 = vmatpush1.bf16.msra.mxu0 %v1475
  %1537 = vmatprep.subr.bf16.mxu0 0
  %1538 = vmatpush1.bf16.msra.mxu0 %v1476
  %1539 = vmatprep.subr.bf16.mxu0 0
  %1540 = vmatpush1.bf16.msra.mxu0 %v1477
  %1541 = vmatprep.subr.bf16.mxu0 0
  %1542 = vmatpush1.bf16.msra.mxu0 0
  %1543 = vmatprep.subr.bf16.mxu0 0
  %1544 = vmatpush1.bf16.msra.mxu0 0
  %1545 = vmatprep.mubr.bf16.mxu0 %v1493
  %1546 = vmatmul.mubr.bf16.gmra.mrb[0].mxu0 %v1323
  %v1547 = vpop.f32.mrb[0].mxu0
  %v1548 = vadd.f32 0.0, %v1547
  %v1549 = vpop.f32.mrb[0].mxu0
  %v1550 = vpop.f32.mrb[0].mxu0
  %v1551 = vadd.f32 0.0, %v1550
  %v1552 = vpop.f32.mrb[0].mxu0
  %1553 = vmatprep.mubr.bf16.mxu0 %v1496
  %1554 = vmatmul.mubr.bf16.gmra.mrb[0].mxu0 %v1325
  %v1555 = vpop.f32.mrb[0].mxu0
  %v1556 = vadd.f32 0.0, %v1555
  %v1557 = vpop.f32.mrb[0].mxu0
  %v1558 = vpop.f32.mrb[0].mxu0
  %v1559 = vadd.f32 0.0, %v1558
  %v1560 = vpop.f32.mrb[0].mxu0
  %1561 = vmatprep.mubr.bf16.mxu0 %v1499
  %1562 = vmatmul.mubr.bf16.gmra.mrb[0].mxu0 %v1327
  %v1563 = vpop.f32.mrb[0].mxu0
  %v1564 = vadd.f32 0.0, %v1563
  %v1565 = vpop.f32.mrb[0].mxu0
  %v1566 = vpop.f32.mrb[0].mxu0
  %v1567 = vadd.f32 0.0, %v1566
  %v1568 = vpop.f32.mrb[0].mxu0
  %1569 = vmatprep.mubr.bf16.mxu0 %v1502
  %1570 = vmatmul.mubr.bf16.gmra.mrb[0].mxu0 %v1329
  %v1571 = vpop.f32.mrb[0].mxu0
  %v1572 = vadd.f32 0.0, %v1571
  %v1573 = vpop.f32.mrb[0].mxu0
  %v1574 = vpop.f32.mrb[0].mxu0
  %v1575 = vadd.f32 0.0, %v1574
  %v1576 = vpop.f32.mrb[0].mxu0
  %1577 = vmatprep.mubr.bf16.mxu0 %v1505
  %1578 = vmatmul.mubr.bf16.gmra.mrb[0].mxu0 %v1331
  %v1579 = vpop.f32.mrb[0].mxu0
  %v1580 = vadd.f32 0.0, %v1579
  %v1581 = vpop.f32.mrb[0].mxu0
  %v1582 = vpop.f32.mrb[0].mxu0
  %v1583 = vadd.f32 0.0, %v1582
  %v1584 = vpop.f32.mrb[0].mxu0
  %1585 = vmatprep.mubr.bf16.mxu0 %v1508
  %1586 = vmatmul.mubr.bf16.gmra.mrb[0].mxu0 %v1333
  %v1587 = vpop.f32.mrb[0].mxu0
  %v1588 = vadd.f32 0.0, %v1587
  %v1589 = vpop.f32.mrb[0].mxu0
  %v1590 = vpop.f32.mrb[0].mxu0
  %v1591 = vadd.f32 0.0, %v1590
  %v1592 = vpop.f32.mrb[0].mxu0
  %1593 = vmatprep.mubr.bf16.mxu0 %v1511
  %1594 = vmatmul.mubr.bf16.gmra.mrb[0].mxu0 %v1335
  %v1595 = vpop.f32.mrb[0].mxu0
  %v1596 = vadd.f32 0.0, %v1595
  %v1597 = vpop.f32.mrb[0].mxu0
  %v1598 = vpop.f32.mrb[0].mxu0
  %v1599 = vadd.f32 0.0, %v1598
  %v1600 = vpop.f32.mrb[0].mxu0
  %1601 = vdwg.mxu0
  %v1630 = vunpack.c.l.b16 %v1351
  %v1631 = vunpack.c.l.b16 %v1352
  %v1632 = vunpack.c.l.b16 %v1353
  %v1633 = vunpack.c.l.b16 %v1354
  %v1634 = vunpack.c.l.b16 %v1355
  %v1635 = vunpack.c.l.b16 %v1356
  %v1636 = vunpack.c.l.b16 %v1357
  %v1637 = vunpack.c.l.b16 %v1358
  %v1638 = vunpack.c.l.b16 %v1359
  %v1639 = vunpack.c.l.b16 %v1360
  %v1640 = vunpack.c.l.b16 %v1361
  %v1641 = vunpack.c.l.b16 %v1362
  %v1642 = vunpack.c.l.b16 %v1363
  %v1643 = vunpack.c.l.b16 %v1364
  %v1644 = vunpack.c.l.b16 %v1365
  %v1645 = vunpack.c.l.b16 %v1366
  %v1646 = vunpack.c.l.b16 %v1367
  %v1647 = vunpack.c.l.b16 %v1368
  %v1648 = vunpack.c.l.b16 %v1369
  %v1649 = vunpack.c.l.b16 %v1370
  %v1650 = vunpack.c.l.b16 %v1371
  %v1651 = vunpack.c.l.b16 %v1372
  %v1652 = vunpack.c.l.b16 %v1373
  %v1653 = vunpack.c.l.b16 %v1374
  %v1654 = vunpack.c.l.b16 %v1375
  %v1655 = vunpack.c.l.b16 %v1376
  %v1656 = vunpack.c.l.b16 %v1377
  %v1657 = vunpack.c.l.b16 %v1378
  %v1658 = vpack.c.b16 %v1631, %v1630
  %v1659 = vpack.c.b16 %v1633, %v1632
  %v1660 = vpack.c.b16 %v1635, %v1634
  %v1661 = vpack.c.b16 %v1637, %v1636
  %v1662 = vpack.c.b16 %v1639, %v1638
  %v1663 = vpack.c.b16 %v1641, %v1640
  %v1664 = vpack.c.b16 %v1643, %v1642
  %v1665 = vpack.c.b16 %v1645, %v1644
  %v1666 = vpack.c.b16 %v1647, %v1646
  %v1667 = vpack.c.b16 %v1649, %v1648
  %v1668 = vpack.c.b16 %v1651, %v1650
  %v1669 = vpack.c.b16 %v1653, %v1652
  %v1670 = vpack.c.b16 %v1655, %v1654
  %v1671 = vpack.c.b16 %v1657, %v1656
  %v1687 = vsel %vm1265, %v1310, 0
  %v1690 = vsel %vm1265, %v1312, 0
  %v1693 = vsel %vm1265, %v1314, 0
  %v1696 = vsel %vm1265, %v1316, 0
  %v1699 = vsel %vm1265, %v1318, 0
  %v1702 = vsel %vm1265, %v1320, 0
  %v1705 = vsel %vm1265, %v1322, 0
  %1707 = vmatprep.subr.bf16.mxu0 0
  %1708 = vmatpush1.bf16.msra.mxu0 %v1658
  %1709 = vmatprep.subr.bf16.mxu0 0
  %1710 = vmatpush1.bf16.msra.mxu0 %v1659
  %1711 = vmatprep.subr.bf16.mxu0 0
  %1712 = vmatpush1.bf16.msra.mxu0 %v1660
  %1713 = vmatprep.subr.bf16.mxu0 0
  %1714 = vmatpush1.bf16.msra.mxu0 %v1661
  %1715 = vmatprep.subr.bf16.mxu0 0
  %1716 = vmatpush1.bf16.msra.mxu0 %v1662
  %1717 = vmatprep.subr.bf16.mxu0 0
  %1718 = vmatpush1.bf16.msra.mxu0 %v1663
  %1719 = vmatprep.subr.bf16.mxu0 0
  %1720 = vmatpush1.bf16.msra.mxu0 %v1664
  %1721 = vmatprep.subr.bf16.mxu0 0
  %1722 = vmatpush1.bf16.msra.mxu0 %v1665
  %1723 = vmatprep.subr.bf16.mxu0 0
  %1724 = vmatpush1.bf16.msra.mxu0 %v1666
  %1725 = vmatprep.subr.bf16.mxu0 0
  %1726 = vmatpush1.bf16.msra.mxu0 %v1667
  %1727 = vmatprep.subr.bf16.mxu0 0
  %1728 = vmatpush1.bf16.msra.mxu0 %v1668
  %1729 = vmatprep.subr.bf16.mxu0 0
  %1730 = vmatpush1.bf16.msra.mxu0 %v1669
  %1731 = vmatprep.subr.bf16.mxu0 0
  %1732 = vmatpush1.bf16.msra.mxu0 %v1670
  %1733 = vmatprep.subr.bf16.mxu0 0
  %1734 = vmatpush1.bf16.msra.mxu0 %v1671
  %1735 = vmatprep.subr.bf16.mxu0 0
  %1736 = vmatpush1.bf16.msra.mxu0 0
  %1737 = vmatprep.subr.bf16.mxu0 0
  %1738 = vmatpush1.bf16.msra.mxu0 0
  %1739 = vmatprep.mubr.bf16.mxu0 %v1687
  %1740 = vmatmul.mubr.bf16.gmra.mrb[0].mxu0 %v1309
  %v1741 = vpop.f32.mrb[0].mxu0
  %v1742 = vadd.f32 %v1548, %v1741
  %v1743 = vpop.f32.mrb[0].mxu0
  %v1744 = vpop.f32.mrb[0].mxu0
  %v1745 = vadd.f32 %v1551, %v1744
  %v1746 = vpop.f32.mrb[0].mxu0
  %1747 = vmatprep.mubr.bf16.mxu0 %v1690
  %1748 = vmatmul.mubr.bf16.gmra.mrb[0].mxu0 %v1311
  %v1749 = vpop.f32.mrb[0].mxu0
  %v1750 = vadd.f32 %v1556, %v1749
  %v1751 = vpop.f32.mrb[0].mxu0
  %v1752 = vpop.f32.mrb[0].mxu0
  %v1753 = vadd.f32 %v1559, %v1752
  %v1754 = vpop.f32.mrb[0].mxu0
  %1755 = vmatprep.mubr.bf16.mxu0 %v1693
  %1756 = vmatmul.mubr.bf16.gmra.mrb[0].mxu0 %v1313
  %v1757 = vpop.f32.mrb[0].mxu0
  %v1758 = vadd.f32 %v1564, %v1757
  %v1759 = vpop.f32.mrb[0].mxu0
  %v1760 = vpop.f32.mrb[0].mxu0
  %v1761 = vadd.f32 %v1567, %v1760
  %v1762 = vpop.f32.mrb[0].mxu0
  %1763 = vmatprep.mubr.bf16.mxu0 %v1696
  %1764 = vmatmul.mubr.bf16.gmra.mrb[0].mxu0 %v1315
  %v1765 = vpop.f32.mrb[0].mxu0
  %v1766 = vadd.f32 %v1572, %v1765
  %v1767 = vpop.f32.mrb[0].mxu0
  %v1768 = vpop.f32.mrb[0].mxu0
  %v1769 = vadd.f32 %v1575, %v1768
  %v1770 = vpop.f32.mrb[0].mxu0
  %1771 = vmatprep.mubr.bf16.mxu0 %v1699
  %1772 = vmatmul.mubr.bf16.gmra.mrb[0].mxu0 %v1317
  %v1773 = vpop.f32.mrb[0].mxu0
  %v1774 = vadd.f32 %v1580, %v1773
  %v1775 = vpop.f32.mrb[0].mxu0
  %v1776 = vpop.f32.mrb[0].mxu0
  %v1777 = vadd.f32 %v1583, %v1776
  %v1778 = vpop.f32.mrb[0].mxu0
  %1779 = vmatprep.mubr.bf16.mxu0 %v1702
  %1780 = vmatmul.mubr.bf16.gmra.mrb[0].mxu0 %v1319
  %v1781 = vpop.f32.mrb[0].mxu0
  %v1782 = vadd.f32 %v1588, %v1781
  %v1783 = vpop.f32.mrb[0].mxu0
  %v1784 = vpop.f32.mrb[0].mxu0
  %v1785 = vadd.f32 %v1591, %v1784
  %v1786 = vpop.f32.mrb[0].mxu0
  %1787 = vmatprep.mubr.bf16.mxu0 %v1705
  %1788 = vmatmul.mubr.bf16.gmra.mrb[0].mxu0 %v1321
  %v1789 = vpop.f32.mrb[0].mxu0
  %v1790 = vadd.f32 %v1596, %v1789
  %v1791 = vpop.f32.mrb[0].mxu0
  %v1792 = vpop.f32.mrb[0].mxu0
  %v1793 = vadd.f32 %v1599, %v1792
  %v1794 = vpop.f32.mrb[0].mxu0
  %1795 = vdwg.mxu0
  %s1796 = scalar_lea.vmem %s3, 224
  %v1797 = vld [vmem:[%s1796] sm:$0xf]
  %v1798 = vld [vmem:[%s1796 + $0x4] sm:$0xf]
  %v1799 = vld [vmem:[%s1796 + $0x8] sm:$0xf]
  %v1800 = vld [vmem:[%s1796 + $0xc] sm:$0xf]
  %v1801 = vld [vmem:[%s1796 + $0x10] sm:$0xf]
  %v1802 = vld [vmem:[%s1796 + $0x14] sm:$0xf]
  %v1803 = vld [vmem:[%s1796 + $0x18] sm:$0xf]
  %v1804 = vld [vmem:[%s1796 + $0x1c] sm:$0xf]
  %v1805 = vld [vmem:[%s1796 + $0x20] sm:$0xf]
  %v1806 = vld [vmem:[%s1796 + $0x24] sm:$0xf]
  %v1807 = vld [vmem:[%s1796 + $0x28] sm:$0xf]
  %v1808 = vld [vmem:[%s1796 + $0x2c] sm:$0xf]
  %v1809 = vld [vmem:[%s1796 + $0x30] sm:$0xf]
  %v1810 = vld [vmem:[%s1796 + $0x34] sm:$0xf]
  %v1811 = vld [vmem:[%s1796 + $0x38] sm:$0xf]
  %v1812 = vld [vmem:[%s1796 + $0x3c] sm:$0xf]
  %v1813 = vld [vmem:[%s1796 + $0x40] sm:$0xf]
  %v1814 = vld [vmem:[%s1796 + $0x44] sm:$0xf]
  %v1815 = vld [vmem:[%s1796 + $0x48] sm:$0xf]
  %v1816 = vld [vmem:[%s1796 + $0x4c] sm:$0xf]
  %v1817 = vld [vmem:[%s1796 + $0x50] sm:$0xf]
  %v1818 = vld [vmem:[%s1796 + $0x54] sm:$0xf]
  %v1819 = vld [vmem:[%s1796 + $0x58] sm:$0xf]
  %v1820 = vld [vmem:[%s1796 + $0x5c] sm:$0xf]
  %v1821 = vld [vmem:[%s1796 + $0x60] sm:$0xf]
  %v1822 = vld [vmem:[%s1796 + $0x64] sm:$0xf]
  %v1823 = vld [vmem:[%s1796 + $0x68] sm:$0xf]
  %v1824 = vld [vmem:[%s1796 + $0x6c] sm:$0xf]
  %v1853 = vunpack.c.l.b16 %v1797
  %v1854 = vunpack.c.l.b16 %v1798
  %v1855 = vunpack.c.l.b16 %v1799
  %v1856 = vunpack.c.l.b16 %v1800
  %v1857 = vunpack.c.l.b16 %v1801
  %v1858 = vunpack.c.l.b16 %v1802
  %v1859 = vunpack.c.l.b16 %v1803
  %v1860 = vunpack.c.l.b16 %v1804
  %v1861 = vunpack.c.l.b16 %v1805
  %v1862 = vunpack.c.l.b16 %v1806
  %v1863 = vunpack.c.l.b16 %v1807
  %v1864 = vunpack.c.l.b16 %v1808
  %v1865 = vunpack.c.l.b16 %v1809
  %v1866 = vunpack.c.l.b16 %v1810
  %v1867 = vunpack.c.l.b16 %v1811
  %v1868 = vunpack.c.l.b16 %v1812
  %v1869 = vunpack.c.l.b16 %v1813
  %v1870 = vunpack.c.l.b16 %v1814
  %v1871 = vunpack.c.l.b16 %v1815
  %v1872 = vunpack.c.l.b16 %v1816
  %v1873 = vunpack.c.l.b16 %v1817
  %v1874 = vunpack.c.l.b16 %v1818
  %v1875 = vunpack.c.l.b16 %v1819
  %v1876 = vunpack.c.l.b16 %v1820
  %v1877 = vunpack.c.l.b16 %v1821
  %v1878 = vunpack.c.l.b16 %v1822
  %v1879 = vunpack.c.l.b16 %v1823
  %v1880 = vunpack.c.l.b16 %v1824
  %v1881 = vpack.c.b16 %v1854, %v1853
  %v1882 = vpack.c.b16 %v1856, %v1855
  %v1883 = vpack.c.b16 %v1858, %v1857
  %v1884 = vpack.c.b16 %v1860, %v1859
  %v1885 = vpack.c.b16 %v1862, %v1861
  %v1886 = vpack.c.b16 %v1864, %v1863
  %v1887 = vpack.c.b16 %v1866, %v1865
  %v1888 = vpack.c.b16 %v1868, %v1867
  %v1889 = vpack.c.b16 %v1870, %v1869
  %v1890 = vpack.c.b16 %v1872, %v1871
  %v1891 = vpack.c.b16 %v1874, %v1873
  %v1892 = vpack.c.b16 %v1876, %v1875
  %v1893 = vpack.c.b16 %v1878, %v1877
  %v1894 = vpack.c.b16 %v1880, %v1879
  %v1910 = vsel %vm1265, %v1338, 0
  %v1913 = vsel %vm1265, %v1340, 0
  %v1916 = vsel %vm1265, %v1342, 0
  %v1919 = vsel %vm1265, %v1344, 0
  %v1922 = vsel %vm1265, %v1346, 0
  %v1925 = vsel %vm1265, %v1348, 0
  %v1928 = vsel %vm1265, %v1350, 0
  %1930 = vmatprep.subr.bf16.mxu0 0
  %1931 = vmatpush1.bf16.msra.mxu0 %v1881
  %1932 = vmatprep.subr.bf16.mxu0 0
  %1933 = vmatpush1.bf16.msra.mxu0 %v1882
  %1934 = vmatprep.subr.bf16.mxu0 0
  %1935 = vmatpush1.bf16.msra.mxu0 %v1883
  %1936 = vmatprep.subr.bf16.mxu0 0
  %1937 = vmatpush1.bf16.msra.mxu0 %v1884
  %1938 = vmatprep.subr.bf16.mxu0 0
  %1939 = vmatpush1.bf16.msra.mxu0 %v1885
  %1940 = vmatprep.subr.bf16.mxu0 0
  %1941 = vmatpush1.bf16.msra.mxu0 %v1886
  %1942 = vmatprep.subr.bf16.mxu0 0
  %1943 = vmatpush1.bf16.msra.mxu0 %v1887
  %1944 = vmatprep.subr.bf16.mxu0 0
  %1945 = vmatpush1.bf16.msra.mxu0 %v1888
  %1946 = vmatprep.subr.bf16.mxu0 0
  %1947 = vmatpush1.bf16.msra.mxu0 %v1889
  %1948 = vmatprep.subr.bf16.mxu0 0
  %1949 = vmatpush1.bf16.msra.mxu0 %v1890
  %1950 = vmatprep.subr.bf16.mxu0 0
  %1951 = vmatpush1.bf16.msra.mxu0 %v1891
  %1952 = vmatprep.subr.bf16.mxu0 0
  %1953 = vmatpush1.bf16.msra.mxu0 %v1892
  %1954 = vmatprep.subr.bf16.mxu0 0
  %1955 = vmatpush1.bf16.msra.mxu0 %v1893
  %1956 = vmatprep.subr.bf16.mxu0 0
  %1957 = vmatpush1.bf16.msra.mxu0 %v1894
  %1958 = vmatprep.subr.bf16.mxu0 0
  %1959 = vmatpush1.bf16.msra.mxu0 0
  %1960 = vmatprep.subr.bf16.mxu0 0
  %1961 = vmatpush1.bf16.msra.mxu0 0
  %1962 = vmatprep.mubr.bf16.mxu0 %v1910
  %1963 = vmatmul.mubr.bf16.gmra.mrb[0].mxu0 %v1337
  %v1964 = vpop.f32.mrb[0].mxu0
  %v1965 = vadd.f32 0.0, %v1964
  %v1966 = vpop.f32.mrb[0].mxu0
  %v1967 = vpop.f32.mrb[0].mxu0
  %v1968 = vadd.f32 0.0, %v1967
  %v1969 = vpop.f32.mrb[0].mxu0
  %1970 = vmatprep.mubr.bf16.mxu0 %v1913
  %1971 = vmatmul.mubr.bf16.gmra.mrb[0].mxu0 %v1339
  %v1972 = vpop.f32.mrb[0].mxu0
  %v1973 = vadd.f32 0.0, %v1972
  %v1974 = vpop.f32.mrb[0].mxu0
  %v1975 = vpop.f32.mrb[0].mxu0
  %v1976 = vadd.f32 0.0, %v1975
  %v1977 = vpop.f32.mrb[0].mxu0
  %1978 = vmatprep.mubr.bf16.mxu0 %v1916
  %1979 = vmatmul.mubr.bf16.gmra.mrb[0].mxu0 %v1341
  %v1980 = vpop.f32.mrb[0].mxu0
  %v1981 = vadd.f32 0.0, %v1980
  %v1982 = vpop.f32.mrb[0].mxu0
  %v1983 = vpop.f32.mrb[0].mxu0
  %v1984 = vadd.f32 0.0, %v1983
  %v1985 = vpop.f32.mrb[0].mxu0
  %1986 = vmatprep.mubr.bf16.mxu0 %v1919
  %1987 = vmatmul.mubr.bf16.gmra.mrb[0].mxu0 %v1343
  %v1988 = vpop.f32.mrb[0].mxu0
  %v1989 = vadd.f32 0.0, %v1988
  %v1990 = vpop.f32.mrb[0].mxu0
  %v1991 = vpop.f32.mrb[0].mxu0
  %v1992 = vadd.f32 0.0, %v1991
  %v1993 = vpop.f32.mrb[0].mxu0
  %1994 = vmatprep.mubr.bf16.mxu0 %v1922
  %1995 = vmatmul.mubr.bf16.gmra.mrb[0].mxu0 %v1345
  %v1996 = vpop.f32.mrb[0].mxu0
  %v1997 = vadd.f32 0.0, %v1996
  %v1998 = vpop.f32.mrb[0].mxu0
  %v1999 = vpop.f32.mrb[0].mxu0
  %v2000 = vadd.f32 0.0, %v1999
  %v2001 = vpop.f32.mrb[0].mxu0
  %2002 = vmatprep.mubr.bf16.mxu0 %v1925
  %2003 = vmatmul.mubr.bf16.gmra.mrb[0].mxu0 %v1347
  %v2004 = vpop.f32.mrb[0].mxu0
  %v2005 = vadd.f32 0.0, %v2004
  %v2006 = vpop.f32.mrb[0].mxu0
  %v2007 = vpop.f32.mrb[0].mxu0
  %v2008 = vadd.f32 0.0, %v2007
  %v2009 = vpop.f32.mrb[0].mxu0
  %2010 = vmatprep.mubr.bf16.mxu0 %v1928
  %2011 = vmatmul.mubr.bf16.gmra.mrb[0].mxu0 %v1349
  %v2012 = vpop.f32.mrb[0].mxu0
  %v2013 = vadd.f32 0.0, %v2012
  %v2014 = vpop.f32.mrb[0].mxu0
  %v2015 = vpop.f32.mrb[0].mxu0
  %v2016 = vadd.f32 0.0, %v2015
  %v2017 = vpop.f32.mrb[0].mxu0
  %2018 = vdwg.mxu0
  %v2019 = vadd.f32 %v1742, %v1965
  %v2020 = vadd.f32 %v1745, %v1968
  %v2021 = vadd.f32 %v1750, %v1973
  %v2022 = vadd.f32 %v1753, %v1976
  %v2023 = vadd.f32 %v1758, %v1981
  %v2024 = vadd.f32 %v1761, %v1984
  %v2025 = vadd.f32 %v1766, %v1989
  %v2026 = vadd.f32 %v1769, %v1992
  %v2027 = vadd.f32 %v1774, %v1997
  %v2028 = vadd.f32 %v1777, %v2000
  %v2029 = vadd.f32 %v1782, %v2005
  %v2030 = vadd.f32 %v1785, %v2008
  %v2031 = vadd.f32 %v1790, %v2013
  %v2032 = vadd.f32 %v1793, %v2016
  %v2033 = vld [vmem:[%s4] sm:$0x1]
  %v2035 = vlaneseq
  %v2036 = vshrl.u32 %v2035, 7
  %v2037 = vsub.s32 0, %v2036
  %v2038 = vrot.slane %v2033, %v2037
  %v2040 = vadd.f32 %v2019, %v2038
  %v2041 = vadd.f32 %v2020, %v2038
  %v2042 = vadd.f32 %v2021, %v2038
  %v2043 = vadd.f32 %v2022, %v2038
  %v2044 = vadd.f32 %v2023, %v2038
  %v2045 = vadd.f32 %v2024, %v2038
  %v2046 = vadd.f32 %v2025, %v2038
  %v2047 = vadd.f32 %v2026, %v2038
  %v2048 = vadd.f32 %v2027, %v2038
  %v2049 = vadd.f32 %v2028, %v2038
  %v2050 = vadd.f32 %v2029, %v2038
  %v2051 = vadd.f32 %v2030, %v2038
  %v2052 = vadd.f32 %v2031, %v2038
  %v2053 = vadd.f32 %v2032, %v2038
  %v2054 = vmax.f32 %v2040, 0.0
  %v2055 = vmax.f32 %v2041, 0.0
  %v2056 = vmax.f32 %v2042, 0.0
  %v2057 = vmax.f32 %v2043, 0.0
  %v2058 = vmax.f32 %v2044, 0.0
  %v2059 = vmax.f32 %v2045, 0.0
  %v2060 = vmax.f32 %v2046, 0.0
  %v2061 = vmax.f32 %v2047, 0.0
  %v2062 = vmax.f32 %v2048, 0.0
  %v2063 = vmax.f32 %v2049, 0.0
  %v2064 = vmax.f32 %v2050, 0.0
  %v2065 = vmax.f32 %v2051, 0.0
  %v2066 = vmax.f32 %v2052, 0.0
  %v2067 = vmax.f32 %v2053, 0.0
  %v2068 = vpack.c.bf16 %v2055, %v2054
  %v2069 = vpack.c.bf16 %v2057, %v2056
  %v2070 = vpack.c.bf16 %v2059, %v2058
  %v2071 = vpack.c.bf16 %v2061, %v2060
  %v2072 = vpack.c.bf16 %v2063, %v2062
  %v2073 = vpack.c.bf16 %v2065, %v2064
  %v2074 = vpack.c.bf16 %v2067, %v2066
  %vm2075 = vcmask 916480
  %2076 = vst.msk [vmem:[#allocation3] sm:$0xff] %vm2075, 0
  %s2077 = scalar_lea.vmem [#allocation3], 32
  %2078 = vst.msk [vmem:[%s2077] sm:$0xff] %vm2075, 0
  %s2079 = scalar_lea.vmem [#allocation3], 40
  %2080 = vst.msk [vmem:[%s2079] sm:$0xff] %vm2075, %v2068
  %s2081 = scalar_lea.vmem [#allocation3], 8
  %2082 = vst.msk [vmem:[%s2081] sm:$0xff] %vm2075, %v2069
  %s2083 = scalar_lea.vmem [#allocation3], 48
  %2084 = vst.msk [vmem:[%s2083] sm:$0xff] %vm2075, %v2070
  %s2085 = scalar_lea.vmem [#allocation3], 16
  %2086 = vst.msk [vmem:[%s2085] sm:$0xff] %vm2075, %v2071
  %s2087 = scalar_lea.vmem [#allocation3], 56
  %2088 = vst.msk [vmem:[%s2087] sm:$0xff] %vm2075, %v2072
  %s2089 = scalar_lea.vmem [#allocation3], 24
  %2090 = vst.msk [vmem:[%s2089] sm:$0xff] %vm2075, %v2073
  %s2091 = scalar_lea.vmem [#allocation3], 64
  %2092 = vst.msk [vmem:[%s2091] sm:$0xff] %vm2075, %v2074
  %v2093 = vld [vmem:[#allocation3] sm:$0xff]
  %v2094 = vld [vmem:[#allocation3 + $0x8] sm:$0xff]
  %v2095 = vld [vmem:[#allocation3 + $0x10] sm:$0xff]
  %v2096 = vld [vmem:[#allocation3 + $0x18] sm:$0xff]
  %v2097 = vld [vmem:[%s2079] sm:$0xff]
  %v2098 = vld [vmem:[%s2079 + $0x8] sm:$0xff]
  %v2099 = vld [vmem:[%s2079 + $0x10] sm:$0xff]
  %v2100 = vld [vmem:[%s2079 + $0x18] sm:$0xff]
  %v2101 = vld [vmem:[%s2081] sm:$0xff]
  %v2102 = vld [vmem:[%s2081 + $0x8] sm:$0xff]
  %v2103 = vld [vmem:[%s2081 + $0x10] sm:$0xff]
  %v2104 = vld [vmem:[%s2081 + $0x18] sm:$0xff]
  %v2105 = vld [vmem:[%s5] sm:$0xff]
  %v2106 = vld [vmem:[%s5 + $0x8] sm:$0xff]
  %v2107 = vld [vmem:[%s5 + $0x10] sm:$0xff]
  %v2108 = vld [vmem:[%s5 + $0x18] sm:$0xff]
  %v2109 = vld [vmem:[%s5 + $0x20] sm:$0xff]
  %v2110 = vld [vmem:[%s5 + $0x28] sm:$0xff]
  %v2111 = vld [vmem:[%s5 + $0x30] sm:$0xff]
  %v2112 = vld [vmem:[%s5 + $0x38] sm:$0xff]
  %v2113 = vld [vmem:[%s5 + $0x40] sm:$0xff]
  %v2114 = vld [vmem:[%s5 + $0x48] sm:$0xff]
  %v2115 = vld [vmem:[%s5 + $0x50] sm:$0xff]
  %v2116 = vld [vmem:[%s5 + $0x58] sm:$0xff]
  %v2117 = vld [vmem:[%s5 + $0x60] sm:$0xff]
  %v2118 = vld [vmem:[%s5 + $0x68] sm:$0xff]
  %v2119 = vld [vmem:[%s5 + $0x70] sm:$0xff]
  %v2120 = vld [vmem:[%s5 + $0x78] sm:$0xff]
  %v2121 = vld [vmem:[%s5 + $0x80] sm:$0xff]
  %v2122 = vld [vmem:[%s5 + $0x88] sm:$0xff]
  %v2123 = vld [vmem:[%s5 + $0x90] sm:$0xff]
  %v2124 = vld [vmem:[%s5 + $0x98] sm:$0xff]
  %v2125 = vld [vmem:[%s5 + $0xa0] sm:$0xff]
  %v2126 = vld [vmem:[%s5 + $0xa8] sm:$0xff]
  %v2127 = vld [vmem:[%s5 + $0xb0] sm:$0xff]
  %v2128 = vld [vmem:[%s5 + $0xb8] sm:$0xff]
  %v2129 = vld [vmem:[%s5 + $0xc0] sm:$0xff]
  %v2130 = vld [vmem:[%s5 + $0xc8] sm:$0xff]
  %v2131 = vld [vmem:[%s5 + $0xd0] sm:$0xff]
  %v2132 = vld [vmem:[%s5 + $0xd8] sm:$0xff]
  %s2133 = scalar_lea.vmem %s5, 224
  %v2134 = vld [vmem:[%s2133] sm:$0xff]
  %v2135 = vld [vmem:[%s2133 + $0x8] sm:$0xff]
  %v2136 = vld [vmem:[%s2133 + $0x10] sm:$0xff]
  %v2137 = vld [vmem:[%s2133 + $0x18] sm:$0xff]
  %v2138 = vld [vmem:[%s2133 + $0x20] sm:$0xff]
  %v2139 = vld [vmem:[%s2133 + $0x28] sm:$0xff]
  %v2140 = vld [vmem:[%s2133 + $0x30] sm:$0xff]
  %v2141 = vld [vmem:[%s2133 + $0x38] sm:$0xff]
  %v2142 = vld [vmem:[%s2133 + $0x40] sm:$0xff]
  %v2143 = vld [vmem:[%s2133 + $0x48] sm:$0xff]
  %v2144 = vld [vmem:[%s2133 + $0x50] sm:$0xff]
  %v2145 = vld [vmem:[%s2133 + $0x58] sm:$0xff]
  %v2146 = vld [vmem:[%s2133 + $0x60] sm:$0xff]
  %v2147 = vld [vmem:[%s2133 + $0x68] sm:$0xff]
  %v2148 = vld [vmem:[%s2133 + $0x70] sm:$0xff]
  %v2149 = vld [vmem:[%s2133 + $0x78] sm:$0xff]
  %v2150 = vld [vmem:[%s2133 + $0x80] sm:$0xff]
  %v2151 = vld [vmem:[%s2133 + $0x88] sm:$0xff]
  %v2152 = vld [vmem:[%s2133 + $0x90] sm:$0xff]
  %v2153 = vld [vmem:[%s2133 + $0x98] sm:$0xff]
  %v2154 = vld [vmem:[%s2133 + $0xa0] sm:$0xff]
  %v2155 = vld [vmem:[%s2133 + $0xa8] sm:$0xff]
  %v2156 = vld [vmem:[%s2133 + $0xb0] sm:$0xff]
  %v2157 = vld [vmem:[%s2133 + $0xb8] sm:$0xff]
  %v2158 = vld [vmem:[%s2133 + $0xc0] sm:$0xff]
  %v2159 = vld [vmem:[%s2133 + $0xc8] sm:$0xff]
  %v2160 = vld [vmem:[%s2133 + $0xd0] sm:$0xff]
  %v2161 = vld [vmem:[%s2133 + $0xd8] sm:$0xff]
  %v2190 = vunpack.c.l.b16 %v2134
  %v2191 = vunpack.c.h.b16 %v2134
  %v2192 = vunpack.c.l.b16 %v2135
  %v2193 = vunpack.c.h.b16 %v2135
  %v2194 = vunpack.c.l.b16 %v2136
  %v2195 = vunpack.c.h.b16 %v2136
  %v2196 = vunpack.c.l.b16 %v2137
  %v2197 = vunpack.c.h.b16 %v2137
  %v2198 = vunpack.c.l.b16 %v2138
  %v2199 = vunpack.c.h.b16 %v2138
  %v2200 = vunpack.c.l.b16 %v2139
  %v2201 = vunpack.c.h.b16 %v2139
  %v2202 = vunpack.c.l.b16 %v2140
  %v2203 = vunpack.c.h.b16 %v2140
  %v2204 = vunpack.c.l.b16 %v2141
  %v2205 = vunpack.c.h.b16 %v2141
  %v2206 = vunpack.c.l.b16 %v2142
  %v2207 = vunpack.c.h.b16 %v2142
  %v2208 = vunpack.c.l.b16 %v2143
  %v2209 = vunpack.c.h.b16 %v2143
  %v2210 = vunpack.c.l.b16 %v2144
  %v2211 = vunpack.c.h.b16 %v2144
  %v2212 = vunpack.c.l.b16 %v2145
  %v2213 = vunpack.c.h.b16 %v2145
  %v2214 = vunpack.c.l.b16 %v2146
  %v2215 = vunpack.c.h.b16 %v2146
  %v2216 = vunpack.c.l.b16 %v2147
  %v2217 = vunpack.c.h.b16 %v2147
  %v2218 = vunpack.c.l.b16 %v2148
  %v2219 = vunpack.c.h.b16 %v2148
  %v2220 = vunpack.c.l.b16 %v2149
  %v2221 = vunpack.c.h.b16 %v2149
  %v2222 = vunpack.c.l.b16 %v2150
  %v2223 = vunpack.c.h.b16 %v2150
  %v2224 = vunpack.c.l.b16 %v2151
  %v2225 = vunpack.c.h.b16 %v2151
  %v2226 = vunpack.c.l.b16 %v2152
  %v2227 = vunpack.c.h.b16 %v2152
  %v2228 = vunpack.c.l.b16 %v2153
  %v2229 = vunpack.c.h.b16 %v2153
  %v2230 = vunpack.c.l.b16 %v2154
  %v2231 = vunpack.c.h.b16 %v2154
  %v2232 = vunpack.c.l.b16 %v2155
  %v2233 = vunpack.c.h.b16 %v2155
  %v2234 = vunpack.c.l.b16 %v2156
  %v2235 = vunpack.c.h.b16 %v2156
  %v2236 = vunpack.c.l.b16 %v2157
  %v2237 = vunpack.c.h.b16 %v2157
  %v2238 = vunpack.c.l.b16 %v2158
  %v2239 = vunpack.c.h.b16 %v2158
  %v2240 = vunpack.c.l.b16 %v2159
  %v2241 = vunpack.c.h.b16 %v2159
  %v2242 = vunpack.c.l.b16 %v2160
  %v2243 = vunpack.c.h.b16 %v2160
  %v2244 = vunpack.c.l.b16 %v2161
  %v2245 = vunpack.c.h.b16 %v2161
  %v2246 = vpack.c.b16 %v2194, %v2190
  %v2247 = vpack.c.b16 %v2195, %v2191
  %v2248 = vpack.c.b16 %v2196, %v2192
  %v2249 = vpack.c.b16 %v2197, %v2193
  %v2250 = vpack.c.b16 %v2202, %v2198
  %v2251 = vpack.c.b16 %v2203, %v2199
  %v2252 = vpack.c.b16 %v2204, %v2200
  %v2253 = vpack.c.b16 %v2205, %v2201
  %v2254 = vpack.c.b16 %v2210, %v2206
  %v2255 = vpack.c.b16 %v2211, %v2207
  %v2256 = vpack.c.b16 %v2212, %v2208
  %v2257 = vpack.c.b16 %v2213, %v2209
  %v2258 = vpack.c.b16 %v2218, %v2214
  %v2259 = vpack.c.b16 %v2219, %v2215
  %v2260 = vpack.c.b16 %v2220, %v2216
  %v2261 = vpack.c.b16 %v2221, %v2217
  %v2262 = vpack.c.b16 %v2226, %v2222
  %v2263 = vpack.c.b16 %v2227, %v2223
  %v2264 = vpack.c.b16 %v2228, %v2224
  %v2265 = vpack.c.b16 %v2229, %v2225
  %v2266 = vpack.c.b16 %v2234, %v2230
  %v2267 = vpack.c.b16 %v2235, %v2231
  %v2268 = vpack.c.b16 %v2236, %v2232
  %v2269 = vpack.c.b16 %v2237, %v2233
  %v2270 = vpack.c.b16 %v2242, %v2238
  %v2271 = vpack.c.b16 %v2243, %v2239
  %v2272 = vpack.c.b16 %v2244, %v2240
  %v2273 = vpack.c.b16 %v2245, %v2241
  %v2303 = vsel %vm2075, %v2097, 0
  %v2306 = vsel %vm2075, %v2098, 0
  %v2309 = vsel %vm2075, %v2099, 0
  %v2312 = vsel %vm2075, %v2100, 0
  %2314 = vmatprep.subr.bf16.mxu0 %v2247
  %2315 = vmatpush1.bf16.msra.mxu0 %v2246
  %2316 = vmatprep.subr.bf16.mxu0 %v2251
  %2317 = vmatpush1.bf16.msra.mxu0 %v2250
  %2318 = vmatprep.subr.bf16.mxu0 %v2255
  %2319 = vmatpush1.bf16.msra.mxu0 %v2254
  %2320 = vmatprep.subr.bf16.mxu0 %v2259
  %2321 = vmatpush1.bf16.msra.mxu0 %v2258
  %2322 = vmatprep.subr.bf16.mxu0 %v2263
  %2323 = vmatpush1.bf16.msra.mxu0 %v2262
  %2324 = vmatprep.subr.bf16.mxu0 %v2267
  %2325 = vmatpush1.bf16.msra.mxu0 %v2266
  %2326 = vmatprep.subr.bf16.mxu0 %v2271
  %2327 = vmatpush1.bf16.msra.mxu0 %v2270
  %2328 = vmatprep.subr.bf16.mxu0 0
  %2329 = vmatpush1.bf16.msra.mxu0 0
  %2330 = vmatprep.subr.bf16.mxu0 0
  %2331 = vmatpush1.bf16.msra.mxu0 0
  %2332 = vmatprep.subr.bf16.mxu0 0
  %2333 = vmatpush1.bf16.msra.mxu0 0
  %2334 = vmatprep.subr.bf16.mxu0 0
  %2335 = vmatpush1.bf16.msra.mxu0 0
  %2336 = vmatprep.subr.bf16.mxu0 0
  %2337 = vmatpush1.bf16.msra.mxu0 0
  %2338 = vmatprep.subr.bf16.mxu0 0
  %2339 = vmatpush1.bf16.msra.mxu0 0
  %2340 = vmatprep.subr.bf16.mxu0 0
  %2341 = vmatpush1.bf16.msra.mxu0 0
  %2342 = vmatprep.subr.bf16.mxu0 0
  %2343 = vmatpush1.bf16.msra.mxu0 0
  %2344 = vmatprep.subr.bf16.mxu0 0
  %2345 = vmatpush1.bf16.msra.mxu0 0
  %2346 = vmatprep.mubr.bf16.mxu0 0
  %2347 = vmatmul.mubr.bf16.gmra.mrb[0].mxu0 %v2303
  %v2348 = vpop.f32.mrb[0].mxu0
  %v2349 = vadd.f32 0.0, %v2348
  %v2350 = vpop.f32.mrb[0].mxu0
  %v2351 = vadd.f32 0.0, %v2350
  %v2352 = vpop.f32.mrb[0].mxu0
  %v2353 = vadd.f32 0.0, %v2352
  %v2354 = vpop.f32.mrb[0].mxu0
  %v2355 = vadd.f32 0.0, %v2354
  %2356 = vmatprep.mubr.bf16.mxu0 0
  %2357 = vmatmul.mubr.bf16.gmra.mrb[0].mxu0 %v2306
  %v2358 = vpop.f32.mrb[0].mxu0
  %v2359 = vadd.f32 0.0, %v2358
  %v2360 = vpop.f32.mrb[0].mxu0
  %v2361 = vadd.f32 0.0, %v2360
  %v2362 = vpop.f32.mrb[0].mxu0
  %v2363 = vadd.f32 0.0, %v2362
  %v2364 = vpop.f32.mrb[0].mxu0
  %v2365 = vadd.f32 0.0, %v2364
  %2366 = vmatprep.mubr.bf16.mxu0 0
  %2367 = vmatmul.mubr.bf16.gmra.mrb[0].mxu0 %v2309
  %v2368 = vpop.f32.mrb[0].mxu0
  %v2369 = vadd.f32 0.0, %v2368
  %v2370 = vpop.f32.mrb[0].mxu0
  %v2371 = vadd.f32 0.0, %v2370
  %v2372 = vpop.f32.mrb[0].mxu0
  %v2373 = vadd.f32 0.0, %v2372
  %v2374 = vpop.f32.mrb[0].mxu0
  %v2375 = vadd.f32 0.0, %v2374
  %2376 = vmatprep.mubr.bf16.mxu0 0
  %2377 = vmatmul.mubr.bf16.gmra.mrb[0].mxu0 %v2312
  %v2378 = vpop.f32.mrb[0].mxu0
  %v2379 = vadd.f32 0.0, %v2378
  %v2380 = vpop.f32.mrb[0].mxu0
  %v2381 = vadd.f32 0.0, %v2380
  %v2382 = vpop.f32.mrb[0].mxu0
  %v2383 = vadd.f32 0.0, %v2382
  %v2384 = vpop.f32.mrb[0].mxu0
  %v2385 = vadd.f32 0.0, %v2384
  %2386 = vdwg.mxu0
  %2387 = vmatprep.subr.bf16.mxu0 %v2249
  %2388 = vmatpush1.bf16.msra.mxu0 %v2248
  %2389 = vmatprep.subr.bf16.mxu0 %v2253
  %2390 = vmatpush1.bf16.msra.mxu0 %v2252
  %2391 = vmatprep.subr.bf16.mxu0 %v2257
  %2392 = vmatpush1.bf16.msra.mxu0 %v2256
  %2393 = vmatprep.subr.bf16.mxu0 %v2261
  %2394 = vmatpush1.bf16.msra.mxu0 %v2260
  %2395 = vmatprep.subr.bf16.mxu0 %v2265
  %2396 = vmatpush1.bf16.msra.mxu0 %v2264
  %2397 = vmatprep.subr.bf16.mxu0 %v2269
  %2398 = vmatpush1.bf16.msra.mxu0 %v2268
  %2399 = vmatprep.subr.bf16.mxu0 %v2273
  %2400 = vmatpush1.bf16.msra.mxu0 %v2272
  %2401 = vmatprep.subr.bf16.mxu0 0
  %2402 = vmatpush1.bf16.msra.mxu0 0
  %2403 = vmatprep.subr.bf16.mxu0 0
  %2404 = vmatpush1.bf16.msra.mxu0 0
  %2405 = vmatprep.subr.bf16.mxu0 0
  %2406 = vmatpush1.bf16.msra.mxu0 0
  %2407 = vmatprep.subr.bf16.mxu0 0
  %2408 = vmatpush1.bf16.msra.mxu0 0
  %2409 = vmatprep.subr.bf16.mxu0 0
  %2410 = vmatpush1.bf16.msra.mxu0 0
  %2411 = vmatprep.subr.bf16.mxu0 0
  %2412 = vmatpush1.bf16.msra.mxu0 0
  %2413 = vmatprep.subr.bf16.mxu0 0
  %2414 = vmatpush1.bf16.msra.mxu0 0
  %2415 = vmatprep.subr.bf16.mxu0 0
  %2416 = vmatpush1.bf16.msra.mxu0 0
  %2417 = vmatprep.subr.bf16.mxu0 0
  %2418 = vmatpush1.bf16.msra.mxu0 0
  %2419 = vmatprep.mubr.bf16.mxu0 0
  %2420 = vmatmul.mubr.bf16.gmra.mrb[0].mxu0 %v2303
  %v2421 = vpop.f32.mrb[0].mxu0
  %v2422 = vadd.f32 0.0, %v2421
  %v2423 = vpop.f32.mrb[0].mxu0
  %v2424 = vadd.f32 0.0, %v2423
  %v2425 = vpop.f32.mrb[0].mxu0
  %v2426 = vadd.f32 0.0, %v2425
  %v2427 = vpop.f32.mrb[0].mxu0
  %v2428 = vadd.f32 0.0, %v2427
  %2429 = vmatprep.mubr.bf16.mxu0 0
  %2430 = vmatmul.mubr.bf16.gmra.mrb[0].mxu0 %v2306
  %v2431 = vpop.f32.mrb[0].mxu0
  %v2432 = vadd.f32 0.0, %v2431
  %v2433 = vpop.f32.mrb[0].mxu0
  %v2434 = vadd.f32 0.0, %v2433
  %v2435 = vpop.f32.mrb[0].mxu0
  %v2436 = vadd.f32 0.0, %v2435
  %v2437 = vpop.f32.mrb[0].mxu0
  %v2438 = vadd.f32 0.0, %v2437
  %2439 = vmatprep.mubr.bf16.mxu0 0
  %2440 = vmatmul.mubr.bf16.gmra.mrb[0].mxu0 %v2309
  %v2441 = vpop.f32.mrb[0].mxu0
  %v2442 = vadd.f32 0.0, %v2441
  %v2443 = vpop.f32.mrb[0].mxu0
  %v2444 = vadd.f32 0.0, %v2443
  %v2445 = vpop.f32.mrb[0].mxu0
  %v2446 = vadd.f32 0.0, %v2445
  %v2447 = vpop.f32.mrb[0].mxu0
  %v2448 = vadd.f32 0.0, %v2447
  %2449 = vmatprep.mubr.bf16.mxu0 0
  %2450 = vmatmul.mubr.bf16.gmra.mrb[0].mxu0 %v2312
  %v2451 = vpop.f32.mrb[0].mxu0
  %v2452 = vadd.f32 0.0, %v2451
  %v2453 = vpop.f32.mrb[0].mxu0
  %v2454 = vadd.f32 0.0, %v2453
  %v2455 = vpop.f32.mrb[0].mxu0
  %v2456 = vadd.f32 0.0, %v2455
  %v2457 = vpop.f32.mrb[0].mxu0
  %v2458 = vadd.f32 0.0, %v2457
  %2459 = vdwg.mxu0
  %v2488 = vunpack.c.l.b16 %v2105
  %v2489 = vunpack.c.h.b16 %v2105
  %v2490 = vunpack.c.l.b16 %v2106
  %v2491 = vunpack.c.h.b16 %v2106
  %v2492 = vunpack.c.l.b16 %v2107
  %v2493 = vunpack.c.h.b16 %v2107
  %v2494 = vunpack.c.l.b16 %v2108
  %v2495 = vunpack.c.h.b16 %v2108
  %v2496 = vunpack.c.l.b16 %v2109
  %v2497 = vunpack.c.h.b16 %v2109
  %v2498 = vunpack.c.l.b16 %v2110
  %v2499 = vunpack.c.h.b16 %v2110
  %v2500 = vunpack.c.l.b16 %v2111
  %v2501 = vunpack.c.h.b16 %v2111
  %v2502 = vunpack.c.l.b16 %v2112
  %v2503 = vunpack.c.h.b16 %v2112
  %v2504 = vunpack.c.l.b16 %v2113
  %v2505 = vunpack.c.h.b16 %v2113
  %v2506 = vunpack.c.l.b16 %v2114
  %v2507 = vunpack.c.h.b16 %v2114
  %v2508 = vunpack.c.l.b16 %v2115
  %v2509 = vunpack.c.h.b16 %v2115
  %v2510 = vunpack.c.l.b16 %v2116
  %v2511 = vunpack.c.h.b16 %v2116
  %v2512 = vunpack.c.l.b16 %v2117
  %v2513 = vunpack.c.h.b16 %v2117
  %v2514 = vunpack.c.l.b16 %v2118
  %v2515 = vunpack.c.h.b16 %v2118
  %v2516 = vunpack.c.l.b16 %v2119
  %v2517 = vunpack.c.h.b16 %v2119
  %v2518 = vunpack.c.l.b16 %v2120
  %v2519 = vunpack.c.h.b16 %v2120
  %v2520 = vunpack.c.l.b16 %v2121
  %v2521 = vunpack.c.h.b16 %v2121
  %v2522 = vunpack.c.l.b16 %v2122
  %v2523 = vunpack.c.h.b16 %v2122
  %v2524 = vunpack.c.l.b16 %v2123
  %v2525 = vunpack.c.h.b16 %v2123
  %v2526 = vunpack.c.l.b16 %v2124
  %v2527 = vunpack.c.h.b16 %v2124
  %v2528 = vunpack.c.l.b16 %v2125
  %v2529 = vunpack.c.h.b16 %v2125
  %v2530 = vunpack.c.l.b16 %v2126
  %v2531 = vunpack.c.h.b16 %v2126
  %v2532 = vunpack.c.l.b16 %v2127
  %v2533 = vunpack.c.h.b16 %v2127
  %v2534 = vunpack.c.l.b16 %v2128
  %v2535 = vunpack.c.h.b16 %v2128
  %v2536 = vunpack.c.l.b16 %v2129
  %v2537 = vunpack.c.h.b16 %v2129
  %v2538 = vunpack.c.l.b16 %v2130
  %v2539 = vunpack.c.h.b16 %v2130
  %v2540 = vunpack.c.l.b16 %v2131
  %v2541 = vunpack.c.h.b16 %v2131
  %v2542 = vunpack.c.l.b16 %v2132
  %v2543 = vunpack.c.h.b16 %v2132
  %v2544 = vpack.c.b16 %v2492, %v2488
  %v2545 = vpack.c.b16 %v2493, %v2489
  %v2546 = vpack.c.b16 %v2494, %v2490
  %v2547 = vpack.c.b16 %v2495, %v2491
  %v2548 = vpack.c.b16 %v2500, %v2496
  %v2549 = vpack.c.b16 %v2501, %v2497
  %v2550 = vpack.c.b16 %v2502, %v2498
  %v2551 = vpack.c.b16 %v2503, %v2499
  %v2552 = vpack.c.b16 %v2508, %v2504
  %v2553 = vpack.c.b16 %v2509, %v2505
  %v2554 = vpack.c.b16 %v2510, %v2506
  %v2555 = vpack.c.b16 %v2511, %v2507
  %v2556 = vpack.c.b16 %v2516, %v2512
  %v2557 = vpack.c.b16 %v2517, %v2513
  %v2558 = vpack.c.b16 %v2518, %v2514
  %v2559 = vpack.c.b16 %v2519, %v2515
  %v2560 = vpack.c.b16 %v2524, %v2520
  %v2561 = vpack.c.b16 %v2525, %v2521
  %v2562 = vpack.c.b16 %v2526, %v2522
  %v2563 = vpack.c.b16 %v2527, %v2523
  %v2564 = vpack.c.b16 %v2532, %v2528
  %v2565 = vpack.c.b16 %v2533, %v2529
  %v2566 = vpack.c.b16 %v2534, %v2530
  %v2567 = vpack.c.b16 %v2535, %v2531
  %v2568 = vpack.c.b16 %v2540, %v2536
  %v2569 = vpack.c.b16 %v2541, %v2537
  %v2570 = vpack.c.b16 %v2542, %v2538
  %v2571 = vpack.c.b16 %v2543, %v2539
  %v2601 = vsel %vm2075, %v2093, 0
  %v2604 = vsel %vm2075, %v2094, 0
  %v2607 = vsel %vm2075, %v2095, 0
  %v2610 = vsel %vm2075, %v2096, 0
  %2612 = vmatprep.subr.bf16.mxu0 %v2545
  %2613 = vmatpush1.bf16.msra.mxu0 %v2544
  %2614 = vmatprep.subr.bf16.mxu0 %v2549
  %2615 = vmatpush1.bf16.msra.mxu0 %v2548
  %2616 = vmatprep.subr.bf16.mxu0 %v2553
  %2617 = vmatpush1.bf16.msra.mxu0 %v2552
  %2618 = vmatprep.subr.bf16.mxu0 %v2557
  %2619 = vmatpush1.bf16.msra.mxu0 %v2556
  %2620 = vmatprep.subr.bf16.mxu0 %v2561
  %2621 = vmatpush1.bf16.msra.mxu0 %v2560
  %2622 = vmatprep.subr.bf16.mxu0 %v2565
  %2623 = vmatpush1.bf16.msra.mxu0 %v2564
  %2624 = vmatprep.subr.bf16.mxu0 %v2569
  %2625 = vmatpush1.bf16.msra.mxu0 %v2568
  %2626 = vmatprep.subr.bf16.mxu0 0
  %2627 = vmatpush1.bf16.msra.mxu0 0
  %2628 = vmatprep.subr.bf16.mxu0 0
  %2629 = vmatpush1.bf16.msra.mxu0 0
  %2630 = vmatprep.subr.bf16.mxu0 0
  %2631 = vmatpush1.bf16.msra.mxu0 0
  %2632 = vmatprep.subr.bf16.mxu0 0
  %2633 = vmatpush1.bf16.msra.mxu0 0
  %2634 = vmatprep.subr.bf16.mxu0 0
  %2635 = vmatpush1.bf16.msra.mxu0 0
  %2636 = vmatprep.subr.bf16.mxu0 0
  %2637 = vmatpush1.bf16.msra.mxu0 0
  %2638 = vmatprep.subr.bf16.mxu0 0
  %2639 = vmatpush1.bf16.msra.mxu0 0
  %2640 = vmatprep.subr.bf16.mxu0 0
  %2641 = vmatpush1.bf16.msra.mxu0 0
  %2642 = vmatprep.subr.bf16.mxu0 0
  %2643 = vmatpush1.bf16.msra.mxu0 0
  %2644 = vmatprep.mubr.bf16.mxu0 0
  %2645 = vmatmul.mubr.bf16.gmra.mrb[0].mxu0 %v2601
  %v2646 = vpop.f32.mrb[0].mxu0
  %v2647 = vadd.f32 %v2349, %v2646
  %v2648 = vpop.f32.mrb[0].mxu0
  %v2649 = vadd.f32 %v2351, %v2648
  %v2650 = vpop.f32.mrb[0].mxu0
  %v2651 = vadd.f32 %v2353, %v2650
  %v2652 = vpop.f32.mrb[0].mxu0
  %v2653 = vadd.f32 %v2355, %v2652
  %2654 = vmatprep.mubr.bf16.mxu0 0
  %2655 = vmatmul.mubr.bf16.gmra.mrb[0].mxu0 %v2604
  %v2656 = vpop.f32.mrb[0].mxu0
  %v2657 = vadd.f32 %v2359, %v2656
  %v2658 = vpop.f32.mrb[0].mxu0
  %v2659 = vadd.f32 %v2361, %v2658
  %v2660 = vpop.f32.mrb[0].mxu0
  %v2661 = vadd.f32 %v2363, %v2660
  %v2662 = vpop.f32.mrb[0].mxu0
  %v2663 = vadd.f32 %v2365, %v2662
  %2664 = vmatprep.mubr.bf16.mxu0 0
  %2665 = vmatmul.mubr.bf16.gmra.mrb[0].mxu0 %v2607
  %v2666 = vpop.f32.mrb[0].mxu0
  %v2667 = vadd.f32 %v2369, %v2666
  %v2668 = vpop.f32.mrb[0].mxu0
  %v2669 = vadd.f32 %v2371, %v2668
  %v2670 = vpop.f32.mrb[0].mxu0
  %v2671 = vadd.f32 %v2373, %v2670
  %v2672 = vpop.f32.mrb[0].mxu0
  %v2673 = vadd.f32 %v2375, %v2672
  %2674 = vmatprep.mubr.bf16.mxu0 0
  %2675 = vmatmul.mubr.bf16.gmra.mrb[0].mxu0 %v2610
  %v2676 = vpop.f32.mrb[0].mxu0
  %v2677 = vadd.f32 %v2379, %v2676
  %v2678 = vpop.f32.mrb[0].mxu0
  %v2679 = vadd.f32 %v2381, %v2678
  %v2680 = vpop.f32.mrb[0].mxu0
  %v2681 = vadd.f32 %v2383, %v2680
  %v2682 = vpop.f32.mrb[0].mxu0
  %v2683 = vadd.f32 %v2385, %v2682
  %2684 = vdwg.mxu0
  %2685 = vmatprep.subr.bf16.mxu0 %v2547
  %2686 = vmatpush1.bf16.msra.mxu0 %v2546
  %2687 = vmatprep.subr.bf16.mxu0 %v2551
  %2688 = vmatpush1.bf16.msra.mxu0 %v2550
  %2689 = vmatprep.subr.bf16.mxu0 %v2555
  %2690 = vmatpush1.bf16.msra.mxu0 %v2554
  %2691 = vmatprep.subr.bf16.mxu0 %v2559
  %2692 = vmatpush1.bf16.msra.mxu0 %v2558
  %2693 = vmatprep.subr.bf16.mxu0 %v2563
  %2694 = vmatpush1.bf16.msra.mxu0 %v2562
  %2695 = vmatprep.subr.bf16.mxu0 %v2567
  %2696 = vmatpush1.bf16.msra.mxu0 %v2566
  %2697 = vmatprep.subr.bf16.mxu0 %v2571
  %2698 = vmatpush1.bf16.msra.mxu0 %v2570
  %2699 = vmatprep.subr.bf16.mxu0 0
  %2700 = vmatpush1.bf16.msra.mxu0 0
  %2701 = vmatprep.subr.bf16.mxu0 0
  %2702 = vmatpush1.bf16.msra.mxu0 0
  %2703 = vmatprep.subr.bf16.mxu0 0
  %2704 = vmatpush1.bf16.msra.mxu0 0
  %2705 = vmatprep.subr.bf16.mxu0 0
  %2706 = vmatpush1.bf16.msra.mxu0 0
  %2707 = vmatprep.subr.bf16.mxu0 0
  %2708 = vmatpush1.bf16.msra.mxu0 0
  %2709 = vmatprep.subr.bf16.mxu0 0
  %2710 = vmatpush1.bf16.msra.mxu0 0
  %2711 = vmatprep.subr.bf16.mxu0 0
  %2712 = vmatpush1.bf16.msra.mxu0 0
  %2713 = vmatprep.subr.bf16.mxu0 0
  %2714 = vmatpush1.bf16.msra.mxu0 0
  %2715 = vmatprep.subr.bf16.mxu0 0
  %2716 = vmatpush1.bf16.msra.mxu0 0
  %2717 = vmatprep.mubr.bf16.mxu0 0
  %2718 = vmatmul.mubr.bf16.gmra.mrb[0].mxu0 %v2601
  %v2719 = vpop.f32.mrb[0].mxu0
  %v2720 = vadd.f32 %v2422, %v2719
  %v2721 = vpop.f32.mrb[0].mxu0
  %v2722 = vadd.f32 %v2424, %v2721
  %v2723 = vpop.f32.mrb[0].mxu0
  %v2724 = vadd.f32 %v2426, %v2723
  %v2725 = vpop.f32.mrb[0].mxu0
  %v2726 = vadd.f32 %v2428, %v2725
  %2727 = vmatprep.mubr.bf16.mxu0 0
  %2728 = vmatmul.mubr.bf16.gmra.mrb[0].mxu0 %v2604
  %v2729 = vpop.f32.mrb[0].mxu0
  %v2730 = vadd.f32 %v2432, %v2729
  %v2731 = vpop.f32.mrb[0].mxu0
  %v2732 = vadd.f32 %v2434, %v2731
  %v2733 = vpop.f32.mrb[0].mxu0
  %v2734 = vadd.f32 %v2436, %v2733
  %v2735 = vpop.f32.mrb[0].mxu0
  %v2736 = vadd.f32 %v2438, %v2735
  %2737 = vmatprep.mubr.bf16.mxu0 0
  %2738 = vmatmul.mubr.bf16.gmra.mrb[0].mxu0 %v2607
  %v2739 = vpop.f32.mrb[0].mxu0
  %v2740 = vadd.f32 %v2442, %v2739
  %v2741 = vpop.f32.mrb[0].mxu0
  %v2742 = vadd.f32 %v2444, %v2741
  %v2743 = vpop.f32.mrb[0].mxu0
  %v2744 = vadd.f32 %v2446, %v2743
  %v2745 = vpop.f32.mrb[0].mxu0
  %v2746 = vadd.f32 %v2448, %v2745
  %2747 = vmatprep.mubr.bf16.mxu0 0
  %2748 = vmatmul.mubr.bf16.gmra.mrb[0].mxu0 %v2610
  %v2749 = vpop.f32.mrb[0].mxu0
  %v2750 = vadd.f32 %v2452, %v2749
  %v2751 = vpop.f32.mrb[0].mxu0
  %v2752 = vadd.f32 %v2454, %v2751
  %v2753 = vpop.f32.mrb[0].mxu0
  %v2754 = vadd.f32 %v2456, %v2753
  %v2755 = vpop.f32.mrb[0].mxu0
  %v2756 = vadd.f32 %v2458, %v2755
  %2757 = vdwg.mxu0
  %s2758 = scalar_lea.vmem %s5, 448
  %v2759 = vld [vmem:[%s2758] sm:$0xff]
  %v2760 = vld [vmem:[%s2758 + $0x8] sm:$0xff]
  %v2761 = vld [vmem:[%s2758 + $0x10] sm:$0xff]
  %v2762 = vld [vmem:[%s2758 + $0x18] sm:$0xff]
  %v2763 = vld [vmem:[%s2758 + $0x20] sm:$0xff]
  %v2764 = vld [vmem:[%s2758 + $0x28] sm:$0xff]
  %v2765 = vld [vmem:[%s2758 + $0x30] sm:$0xff]
  %v2766 = vld [vmem:[%s2758 + $0x38] sm:$0xff]
  %v2767 = vld [vmem:[%s2758 + $0x40] sm:$0xff]
  %v2768 = vld [vmem:[%s2758 + $0x48] sm:$0xff]
  %v2769 = vld [vmem:[%s2758 + $0x50] sm:$0xff]
  %v2770 = vld [vmem:[%s2758 + $0x58] sm:$0xff]
  %v2771 = vld [vmem:[%s2758 + $0x60] sm:$0xff]
  %v2772 = vld [vmem:[%s2758 + $0x68] sm:$0xff]
  %v2773 = vld [vmem:[%s2758 + $0x70] sm:$0xff]
  %v2774 = vld [vmem:[%s2758 + $0x78] sm:$0xff]
  %v2775 = vld [vmem:[%s2758 + $0x80] sm:$0xff]
  %v2776 = vld [vmem:[%s2758 + $0x88] sm:$0xff]
  %v2777 = vld [vmem:[%s2758 + $0x90] sm:$0xff]
  %v2778 = vld [vmem:[%s2758 + $0x98] sm:$0xff]
  %v2779 = vld [vmem:[%s2758 + $0xa0] sm:$0xff]
  %v2780 = vld [vmem:[%s2758 + $0xa8] sm:$0xff]
  %v2781 = vld [vmem:[%s2758 + $0xb0] sm:$0xff]
  %v2782 = vld [vmem:[%s2758 + $0xb8] sm:$0xff]
  %v2783 = vld [vmem:[%s2758 + $0xc0] sm:$0xff]
  %v2784 = vld [vmem:[%s2758 + $0xc8] sm:$0xff]
  %v2785 = vld [vmem:[%s2758 + $0xd0] sm:$0xff]
  %v2786 = vld [vmem:[%s2758 + $0xd8] sm:$0xff]
  %v2815 = vunpack.c.l.b16 %v2759
  %v2816 = vunpack.c.h.b16 %v2759
  %v2817 = vunpack.c.l.b16 %v2760
  %v2818 = vunpack.c.h.b16 %v2760
  %v2819 = vunpack.c.l.b16 %v2761
  %v2820 = vunpack.c.h.b16 %v2761
  %v2821 = vunpack.c.l.b16 %v2762
  %v2822 = vunpack.c.h.b16 %v2762
  %v2823 = vunpack.c.l.b16 %v2763
  %v2824 = vunpack.c.h.b16 %v2763
  %v2825 = vunpack.c.l.b16 %v2764
  %v2826 = vunpack.c.h.b16 %v2764
  %v2827 = vunpack.c.l.b16 %v2765
  %v2828 = vunpack.c.h.b16 %v2765
  %v2829 = vunpack.c.l.b16 %v2766
  %v2830 = vunpack.c.h.b16 %v2766
  %v2831 = vunpack.c.l.b16 %v2767
  %v2832 = vunpack.c.h.b16 %v2767
  %v2833 = vunpack.c.l.b16 %v2768
  %v2834 = vunpack.c.h.b16 %v2768
  %v2835 = vunpack.c.l.b16 %v2769
  %v2836 = vunpack.c.h.b16 %v2769
  %v2837 = vunpack.c.l.b16 %v2770
  %v2838 = vunpack.c.h.b16 %v2770
  %v2839 = vunpack.c.l.b16 %v2771
  %v2840 = vunpack.c.h.b16 %v2771
  %v2841 = vunpack.c.l.b16 %v2772
  %v2842 = vunpack.c.h.b16 %v2772
  %v2843 = vunpack.c.l.b16 %v2773
  %v2844 = vunpack.c.h.b16 %v2773
  %v2845 = vunpack.c.l.b16 %v2774
  %v2846 = vunpack.c.h.b16 %v2774
  %v2847 = vunpack.c.l.b16 %v2775
  %v2848 = vunpack.c.h.b16 %v2775
  %v2849 = vunpack.c.l.b16 %v2776
  %v2850 = vunpack.c.h.b16 %v2776
  %v2851 = vunpack.c.l.b16 %v2777
  %v2852 = vunpack.c.h.b16 %v2777
  %v2853 = vunpack.c.l.b16 %v2778
  %v2854 = vunpack.c.h.b16 %v2778
  %v2855 = vunpack.c.l.b16 %v2779
  %v2856 = vunpack.c.h.b16 %v2779
  %v2857 = vunpack.c.l.b16 %v2780
  %v2858 = vunpack.c.h.b16 %v2780
  %v2859 = vunpack.c.l.b16 %v2781
  %v2860 = vunpack.c.h.b16 %v2781
  %v2861 = vunpack.c.l.b16 %v2782
  %v2862 = vunpack.c.h.b16 %v2782
  %v2863 = vunpack.c.l.b16 %v2783
  %v2864 = vunpack.c.h.b16 %v2783
  %v2865 = vunpack.c.l.b16 %v2784
  %v2866 = vunpack.c.h.b16 %v2784
  %v2867 = vunpack.c.l.b16 %v2785
  %v2868 = vunpack.c.h.b16 %v2785
  %v2869 = vunpack.c.l.b16 %v2786
  %v2870 = vunpack.c.h.b16 %v2786
  %v2871 = vpack.c.b16 %v2819, %v2815
  %v2872 = vpack.c.b16 %v2820, %v2816
  %v2873 = vpack.c.b16 %v2821, %v2817
  %v2874 = vpack.c.b16 %v2822, %v2818
  %v2875 = vpack.c.b16 %v2827, %v2823
  %v2876 = vpack.c.b16 %v2828, %v2824
  %v2877 = vpack.c.b16 %v2829, %v2825
  %v2878 = vpack.c.b16 %v2830, %v2826
  %v2879 = vpack.c.b16 %v2835, %v2831
  %v2880 = vpack.c.b16 %v2836, %v2832
  %v2881 = vpack.c.b16 %v2837, %v2833
  %v2882 = vpack.c.b16 %v2838, %v2834
  %v2883 = vpack.c.b16 %v2843, %v2839
  %v2884 = vpack.c.b16 %v2844, %v2840
  %v2885 = vpack.c.b16 %v2845, %v2841
  %v2886 = vpack.c.b16 %v2846, %v2842
  %v2887 = vpack.c.b16 %v2851, %v2847
  %v2888 = vpack.c.b16 %v2852, %v2848
  %v2889 = vpack.c.b16 %v2853, %v2849
  %v2890 = vpack.c.b16 %v2854, %v2850
  %v2891 = vpack.c.b16 %v2859, %v2855
  %v2892 = vpack.c.b16 %v2860, %v2856
  %v2893 = vpack.c.b16 %v2861, %v2857
  %v2894 = vpack.c.b16 %v2862, %v2858
  %v2895 = vpack.c.b16 %v2867, %v2863
  %v2896 = vpack.c.b16 %v2868, %v2864
  %v2897 = vpack.c.b16 %v2869, %v2865
  %v2898 = vpack.c.b16 %v2870, %v2866
  %v2928 = vsel %vm2075, %v2101, 0
  %v2931 = vsel %vm2075, %v2102, 0
  %v2934 = vsel %vm2075, %v2103, 0
  %v2937 = vsel %vm2075, %v2104, 0
  %2939 = vmatprep.subr.bf16.mxu0 %v2872
  %2940 = vmatpush1.bf16.msra.mxu0 %v2871
  %2941 = vmatprep.subr.bf16.mxu0 %v2876
  %2942 = vmatpush1.bf16.msra.mxu0 %v2875
  %2943 = vmatprep.subr.bf16.mxu0 %v2880
  %2944 = vmatpush1.bf16.msra.mxu0 %v2879
  %2945 = vmatprep.subr.bf16.mxu0 %v2884
  %2946 = vmatpush1.bf16.msra.mxu0 %v2883
  %2947 = vmatprep.subr.bf16.mxu0 %v2888
  %2948 = vmatpush1.bf16.msra.mxu0 %v2887
  %2949 = vmatprep.subr.bf16.mxu0 %v2892
  %2950 = vmatpush1.bf16.msra.mxu0 %v2891
  %2951 = vmatprep.subr.bf16.mxu0 %v2896
  %2952 = vmatpush1.bf16.msra.mxu0 %v2895
  %2953 = vmatprep.subr.bf16.mxu0 0
  %2954 = vmatpush1.bf16.msra.mxu0 0
  %2955 = vmatprep.subr.bf16.mxu0 0
  %2956 = vmatpush1.bf16.msra.mxu0 0
  %2957 = vmatprep.subr.bf16.mxu0 0
  %2958 = vmatpush1.bf16.msra.mxu0 0
  %2959 = vmatprep.subr.bf16.mxu0 0
  %2960 = vmatpush1.bf16.msra.mxu0 0
  %2961 = vmatprep.subr.bf16.mxu0 0
  %2962 = vmatpush1.bf16.msra.mxu0 0
  %2963 = vmatprep.subr.bf16.mxu0 0
  %2964 = vmatpush1.bf16.msra.mxu0 0
  %2965 = vmatprep.subr.bf16.mxu0 0
  %2966 = vmatpush1.bf16.msra.mxu0 0
  %2967 = vmatprep.subr.bf16.mxu0 0
  %2968 = vmatpush1.bf16.msra.mxu0 0
  %2969 = vmatprep.subr.bf16.mxu0 0
  %2970 = vmatpush1.bf16.msra.mxu0 0
  %2971 = vmatprep.mubr.bf16.mxu0 0
  %2972 = vmatmul.mubr.bf16.gmra.mrb[0].mxu0 %v2928
  %v2973 = vpop.f32.mrb[0].mxu0
  %v2974 = vadd.f32 0.0, %v2973
  %v2975 = vpop.f32.mrb[0].mxu0
  %v2976 = vadd.f32 0.0, %v2975
  %v2977 = vpop.f32.mrb[0].mxu0
  %v2978 = vadd.f32 0.0, %v2977
  %v2979 = vpop.f32.mrb[0].mxu0
  %v2980 = vadd.f32 0.0, %v2979
  %2981 = vmatprep.mubr.bf16.mxu0 0
  %2982 = vmatmul.mubr.bf16.gmra.mrb[0].mxu0 %v2931
  %v2983 = vpop.f32.mrb[0].mxu0
  %v2984 = vadd.f32 0.0, %v2983
  %v2985 = vpop.f32.mrb[0].mxu0
  %v2986 = vadd.f32 0.0, %v2985
  %v2987 = vpop.f32.mrb[0].mxu0
  %v2988 = vadd.f32 0.0, %v2987
  %v2989 = vpop.f32.mrb[0].mxu0
  %v2990 = vadd.f32 0.0, %v2989
  %2991 = vmatprep.mubr.bf16.mxu0 0
  %2992 = vmatmul.mubr.bf16.gmra.mrb[0].mxu0 %v2934
  %v2993 = vpop.f32.mrb[0].mxu0
  %v2994 = vadd.f32 0.0, %v2993
  %v2995 = vpop.f32.mrb[0].mxu0
  %v2996 = vadd.f32 0.0, %v2995
  %v2997 = vpop.f32.mrb[0].mxu0
  %v2998 = vadd.f32 0.0, %v2997
  %v2999 = vpop.f32.mrb[0].mxu0
  %v3000 = vadd.f32 0.0, %v2999
  %3001 = vmatprep.mubr.bf16.mxu0 0
  %3002 = vmatmul.mubr.bf16.gmra.mrb[0].mxu0 %v2937
  %v3003 = vpop.f32.mrb[0].mxu0
  %v3004 = vadd.f32 0.0, %v3003
  %v3005 = vpop.f32.mrb[0].mxu0
  %v3006 = vadd.f32 0.0, %v3005
  %v3007 = vpop.f32.mrb[0].mxu0
  %v3008 = vadd.f32 0.0, %v3007
  %v3009 = vpop.f32.mrb[0].mxu0
  %v3010 = vadd.f32 0.0, %v3009
  %3011 = vdwg.mxu0
  %3012 = vmatprep.subr.bf16.mxu0 %v2874
  %3013 = vmatpush1.bf16.msra.mxu0 %v2873
  %3014 = vmatprep.subr.bf16.mxu0 %v2878
  %3015 = vmatpush1.bf16.msra.mxu0 %v2877
  %3016 = vmatprep.subr.bf16.mxu0 %v2882
  %3017 = vmatpush1.bf16.msra.mxu0 %v2881
  %3018 = vmatprep.subr.bf16.mxu0 %v2886
  %3019 = vmatpush1.bf16.msra.mxu0 %v2885
  %3020 = vmatprep.subr.bf16.mxu0 %v2890
  %3021 = vmatpush1.bf16.msra.mxu0 %v2889
  %3022 = vmatprep.subr.bf16.mxu0 %v2894
  %3023 = vmatpush1.bf16.msra.mxu0 %v2893
  %3024 = vmatprep.subr.bf16.mxu0 %v2898
  %3025 = vmatpush1.bf16.msra.mxu0 %v2897
  %3026 = vmatprep.subr.bf16.mxu0 0
  %3027 = vmatpush1.bf16.msra.mxu0 0
  %3028 = vmatprep.subr.bf16.mxu0 0
  %3029 = vmatpush1.bf16.msra.mxu0 0
  %3030 = vmatprep.subr.bf16.mxu0 0
  %3031 = vmatpush1.bf16.msra.mxu0 0
  %3032 = vmatprep.subr.bf16.mxu0 0
  %3033 = vmatpush1.bf16.msra.mxu0 0
  %3034 = vmatprep.subr.bf16.mxu0 0
  %3035 = vmatpush1.bf16.msra.mxu0 0
  %3036 = vmatprep.subr.bf16.mxu0 0
  %3037 = vmatpush1.bf16.msra.mxu0 0
  %3038 = vmatprep.subr.bf16.mxu0 0
  %3039 = vmatpush1.bf16.msra.mxu0 0
  %3040 = vmatprep.subr.bf16.mxu0 0
  %3041 = vmatpush1.bf16.msra.mxu0 0
  %3042 = vmatprep.subr.bf16.mxu0 0
  %3043 = vmatpush1.bf16.msra.mxu0 0
  %3044 = vmatprep.mubr.bf16.mxu0 0
  %3045 = vmatmul.mubr.bf16.gmra.mrb[0].mxu0 %v2928
  %v3046 = vpop.f32.mrb[0].mxu0
  %v3047 = vadd.f32 0.0, %v3046
  %v3048 = vpop.f32.mrb[0].mxu0
  %v3049 = vadd.f32 0.0, %v3048
  %v3050 = vpop.f32.mrb[0].mxu0
  %v3051 = vadd.f32 0.0, %v3050
  %v3052 = vpop.f32.mrb[0].mxu0
  %v3053 = vadd.f32 0.0, %v3052
  %3054 = vmatprep.mubr.bf16.mxu0 0
  %3055 = vmatmul.mubr.bf16.gmra.mrb[0].mxu0 %v2931
  %v3056 = vpop.f32.mrb[0].mxu0
  %v3057 = vadd.f32 0.0, %v3056
  %v3058 = vpop.f32.mrb[0].mxu0
  %v3059 = vadd.f32 0.0, %v3058
  %v3060 = vpop.f32.mrb[0].mxu0
  %v3061 = vadd.f32 0.0, %v3060
  %v3062 = vpop.f32.mrb[0].mxu0
  %v3063 = vadd.f32 0.0, %v3062
  %3064 = vmatprep.mubr.bf16.mxu0 0
  %3065 = vmatmul.mubr.bf16.gmra.mrb[0].mxu0 %v2934
  %v3066 = vpop.f32.mrb[0].mxu0
  %v3067 = vadd.f32 0.0, %v3066
  %v3068 = vpop.f32.mrb[0].mxu0
  %v3069 = vadd.f32 0.0, %v3068
  %v3070 = vpop.f32.mrb[0].mxu0
  %v3071 = vadd.f32 0.0, %v3070
  %v3072 = vpop.f32.mrb[0].mxu0
  %v3073 = vadd.f32 0.0, %v3072
  %3074 = vmatprep.mubr.bf16.mxu0 0
  %3075 = vmatmul.mubr.bf16.gmra.mrb[0].mxu0 %v2937
  %v3076 = vpop.f32.mrb[0].mxu0
  %v3077 = vadd.f32 0.0, %v3076
  %v3078 = vpop.f32.mrb[0].mxu0
  %v3079 = vadd.f32 0.0, %v3078
  %v3080 = vpop.f32.mrb[0].mxu0
  %v3081 = vadd.f32 0.0, %v3080
  %v3082 = vpop.f32.mrb[0].mxu0
  %v3083 = vadd.f32 0.0, %v3082
  %3084 = vdwg.mxu0
  %v3085 = vadd.f32 %v2647, %v2974
  %v3086 = vadd.f32 %v2649, %v2976
  %v3087 = vadd.f32 %v2720, %v3047
  %v3088 = vadd.f32 %v2722, %v3049
  %v3089 = vadd.f32 %v2651, %v2978
  %v3090 = vadd.f32 %v2653, %v2980
  %v3091 = vadd.f32 %v2724, %v3051
  %v3092 = vadd.f32 %v2726, %v3053
  %v3093 = vadd.f32 %v2657, %v2984
  %v3094 = vadd.f32 %v2659, %v2986
  %v3095 = vadd.f32 %v2730, %v3057
  %v3096 = vadd.f32 %v2732, %v3059
  %v3097 = vadd.f32 %v2661, %v2988
  %v3098 = vadd.f32 %v2663, %v2990
  %v3099 = vadd.f32 %v2734, %v3061
  %v3100 = vadd.f32 %v2736, %v3063
  %v3101 = vadd.f32 %v2667, %v2994
  %v3102 = vadd.f32 %v2669, %v2996
  %v3103 = vadd.f32 %v2740, %v3067
  %v3104 = vadd.f32 %v2742, %v3069
  %v3105 = vadd.f32 %v2671, %v2998
  %v3106 = vadd.f32 %v2673, %v3000
  %v3107 = vadd.f32 %v2744, %v3071
  %v3108 = vadd.f32 %v2746, %v3073
  %v3109 = vadd.f32 %v2677, %v3004
  %v3110 = vadd.f32 %v2679, %v3006
  %v3111 = vadd.f32 %v2750, %v3077
  %v3112 = vadd.f32 %v2752, %v3079
  %v3113 = vadd.f32 %v2681, %v3008
  %v3114 = vadd.f32 %v2683, %v3010
  %v3115 = vadd.f32 %v2754, %v3081
  %v3116 = vadd.f32 %v2756, %v3083
  %v3117 = vld [vmem:[%s6] sm:$0xf]
  %v3119 = vlaneseq
  %v3120 = vshrl.u32 %v3119, 7
  %v3121 = vsub.s32 0, %v3120
  %v3122 = vrot.slane %v3117, %v3121
  %v3123 = vlaneseq
  %v3124 = vshrl.u32 %v3123, 7
  %v3125 = vsub.s32 1, %v3124
  %v3126 = vrot.slane %v3117, %v3125
  %v3127 = vlaneseq
  %v3128 = vshrl.u32 %v3127, 7
  %v3129 = vsub.s32 2, %v3128
  %v3130 = vrot.slane %v3117, %v3129
  %v3131 = vlaneseq
  %v3132 = vshrl.u32 %v3131, 7
  %v3133 = vsub.s32 3, %v3132
  %v3134 = vrot.slane %v3117, %v3133
  %v3139 = vadd.f32 %v3085, %v3122
  %v3140 = vadd.f32 %v3086, %v3126
  %v3141 = vadd.f32 %v3087, %v3130
  %v3142 = vadd.f32 %v3088, %v3134
  %v3143 = vadd.f32 %v3089, %v3122
  %v3144 = vadd.f32 %v3090, %v3126
  %v3145 = vadd.f32 %v3091, %v3130
  %v3146 = vadd.f32 %v3092, %v3134
  %v3147 = vadd.f32 %v3093, %v3122
  %v3148 = vadd.f32 %v3094, %v3126
  %v3149 = vadd.f32 %v3095, %v3130
  %v3150 = vadd.f32 %v3096, %v3134
  %v3151 = vadd.f32 %v3097, %v3122
  %v3152 = vadd.f32 %v3098, %v3126
  %v3153 = vadd.f32 %v3099, %v3130
  %v3154 = vadd.f32 %v3100, %v3134
  %v3155 = vadd.f32 %v3101, %v3122
  %v3156 = vadd.f32 %v3102, %v3126
  %v3157 = vadd.f32 %v3103, %v3130
  %v3158 = vadd.f32 %v3104, %v3134
  %v3159 = vadd.f32 %v3105, %v3122
  %v3160 = vadd.f32 %v3106, %v3126
  %v3161 = vadd.f32 %v3107, %v3130
  %v3162 = vadd.f32 %v3108, %v3134
  %v3163 = vadd.f32 %v3109, %v3122
  %v3164 = vadd.f32 %v3110, %v3126
  %v3165 = vadd.f32 %v3111, %v3130
  %v3166 = vadd.f32 %v3112, %v3134
  %v3167 = vadd.f32 %v3113, %v3122
  %v3168 = vadd.f32 %v3114, %v3126
  %v3169 = vadd.f32 %v3115, %v3130
  %v3170 = vadd.f32 %v3116, %v3134
  %v3171 = vmax.f32 %v3139, 0.0
  %v3172 = vmax.f32 %v3140, 0.0
  %v3173 = vmax.f32 %v3141, 0.0
  %v3174 = vmax.f32 %v3142, 0.0
  %v3175 = vmax.f32 %v3143, 0.0
  %v3176 = vmax.f32 %v3144, 0.0
  %v3177 = vmax.f32 %v3145, 0.0
  %v3178 = vmax.f32 %v3146, 0.0
  %v3179 = vmax.f32 %v3147, 0.0
  %v3180 = vmax.f32 %v3148, 0.0
  %v3181 = vmax.f32 %v3149, 0.0
  %v3182 = vmax.f32 %v3150, 0.0
  %v3183 = vmax.f32 %v3151, 0.0
  %v3184 = vmax.f32 %v3152, 0.0
  %v3185 = vmax.f32 %v3153, 0.0
  %v3186 = vmax.f32 %v3154, 0.0
  %v3187 = vmax.f32 %v3155, 0.0
  %v3188 = vmax.f32 %v3156, 0.0
  %v3189 = vmax.f32 %v3157, 0.0
  %v3190 = vmax.f32 %v3158, 0.0
  %v3191 = vmax.f32 %v3159, 0.0
  %v3192 = vmax.f32 %v3160, 0.0
  %v3193 = vmax.f32 %v3161, 0.0
  %v3194 = vmax.f32 %v3162, 0.0
  %v3195 = vmax.f32 %v3163, 0.0
  %v3196 = vmax.f32 %v3164, 0.0
  %v3197 = vmax.f32 %v3165, 0.0
  %v3198 = vmax.f32 %v3166, 0.0
  %v3199 = vmax.f32 %v3167, 0.0
  %v3200 = vmax.f32 %v3168, 0.0
  %v3201 = vmax.f32 %v3169, 0.0
  %v3202 = vmax.f32 %v3170, 0.0
  %v3203 = vadd.f32 %v3171, %v3179
  %v3204 = vadd.f32 %v3172, %v3180
  %v3205 = vadd.f32 %v3173, %v3181
  %v3206 = vadd.f32 %v3174, %v3182
  %v3207 = vadd.f32 %v3175, %v3183
  %v3208 = vadd.f32 %v3176, %v3184
  %v3209 = vadd.f32 %v3177, %v3185
  %v3210 = vadd.f32 %v3178, %v3186
  %v3211 = vadd.f32 %v3203, %v3187
  %v3212 = vadd.f32 %v3204, %v3188
  %v3213 = vadd.f32 %v3205, %v3189
  %v3214 = vadd.f32 %v3206, %v3190
  %v3215 = vadd.f32 %v3207, %v3191
  %v3216 = vadd.f32 %v3208, %v3192
  %v3217 = vadd.f32 %v3209, %v3193
  %v3218 = vadd.f32 %v3210, %v3194
  %v3219 = vadd.f32 %v3211, %v3195
  %v3220 = vadd.f32 %v3212, %v3196
  %v3221 = vadd.f32 %v3213, %v3197
  %v3222 = vadd.f32 %v3214, %v3198
  %v3223 = vadd.f32 %v3215, %v3199
  %v3224 = vadd.f32 %v3216, %v3200
  %v3225 = vadd.f32 %v3217, %v3201
  %v3226 = vadd.f32 %v3218, %v3202
  %v3227 = vadd.f32 %v3219, %v3220
  %v3228 = vadd.f32 %v3223, %v3224
  %v3229 = vadd.f32 %v3227, %v3221
  %v3230 = vadd.f32 %v3228, %v3225
  %v3231 = vadd.f32 %v3229, %v3222
  %v3232 = vadd.f32 %v3230, %v3226
  %v3233 = vmul.f32 %v3231, 0.0625
  %v3234 = vmul.f32 %v3232, 0.0625
  %v3235 = vpack.c.bf16 %v3234, %v3233
  %v3237 = vunpack.c.l.b16 %v3235
  %v3238 = vunpack.c.h.b16 %v3235
  %v3239 = vpack.c.b16 %v3237, %v3237
  %v3240 = vpack.c.b16 %v3238, %v3238
  %3243 = vst [vmem:[%s7] sm:$0xf] %v3239
  %3244 = vst [vmem:[%s7 + $0x4] sm:$0xf] %v3240
  // Predicated region
  $region30: #{mnist_cnn_forward.1} parent=0 // pred_check
    _
  $region31: #{mnist_cnn_forward.1} parent=0 // pred_check_branch
    %3246 = sbr.rel (0) target = $region33
  $region32: #{mnist_cnn_forward.1} parent=0 // pred_region
    _
  $region33: #{mnist_cnn_forward.1} parent=0 // pred_fallthru
    _
  // Predicated region
  $region34: #{mnist_cnn_forward.1} parent=0 // pred_check
    _
  $region35: #{mnist_cnn_forward.1} parent=0 // pred_check_branch
    %3248 = sbr.rel (0) target = $region37
  $region36: #{mnist_cnn_forward.1} parent=0 // pred_region
    _
  $region37: #{mnist_cnn_forward.1} parent=0 // pred_fallthru
    _

</llo_original>
